<compile_context>
chip_gen: v7x
topology: tpu7x:2x2x1
jax: 0.10.0
libtpu: 0.0.40
codegen_flags: <defaults>
</compile_context>

<pallas_src>
import jax
import jax.numpy as jnp
from jax.experimental import pallas as pl
from jax.experimental.pallas import tpu as pltpu

# ---------------- static geometry (specialized to 2 x 3 x 32 x 32) ----------
NB = 2                         # batch
CIN, HIN, WIN = 3, 32, 32      # input
KH = KW = 5
C1, C3, C5, F6, F7 = 18, 16, 120, 84, 10
LANES = 128                    # channel / K dims zero-padded to the lane width

H1 = HIN - 4                   # 28 conv1 output rows (real)
W1P = 32                       # conv1 output width: 28 real + 4 garbage cols
HP1 = H1 // 2                  # 14 pooled rows
WP1P = 20                      # pooled width kept: conv2 taps read cols 0..19
H2 = HP1 - 4                   # 10 conv2 output rows
W2P = 16                       # conv2 output width: 10 real + 6 garbage cols
HP2 = H2 // 2                  # 5
WP2P = W2P // 2                # 8
K1 = KH * KW * CIN             # 75 real im2col K for conv1

M1 = NB * H1 * W1P             # 1792  conv1 GEMM rows
M2 = NB * H2 * W2P             # 320   conv2 GEMM rows

_VMEM = pl.BlockSpec(memory_space=pltpu.MemorySpace.VMEM)


# ---------------------------------------------------------------------------
# The single fused kernel
# ---------------------------------------------------------------------------
def _lenet5_kernel(xcol_ref, w1_ref, b1_ref, w2_ref, b2_ref, w5_ref, b5_ref,
                   w6_ref, b6_ref, w7_ref, b7_ref, out_ref,
                   pool1_ref, pool2_ref):
    f32, bf16 = jnp.float32, jnp.bfloat16

    # ---- C1 + ReLU: full-im2col GEMM  M=1792, K=128 (75 real), N=128 (18 real)
    a1 = jnp.dot(xcol_ref[...], w1_ref[...], preferred_element_type=f32)
    a1 = jnp.maximum(a1 + b1_ref[...], 0.0)          # lanes >= 18 are exactly 0

    # ---- S2: 2x2/2 max pool.  H: pair-reshape max; W: strided scratch reads.
    a1 = a1.reshape(NB * H1 // 2, 2, W1P, LANES)
    hp1 = jnp.maximum(a1[:, 0], a1[:, 1])            # (28, 32, 128)
    pool1_ref[:, 0:W1P, :] = hp1
    pool1_ref[:, W1P:2 * WP1P, :] = jnp.zeros(
        (NB * HP1, 2 * WP1P - W1P, LANES), f32)      # width pad for conv2 taps
    p1 = jnp.maximum(pool1_ref[:, pl.ds(0, WP1P, 2), :],
                     pool1_ref[:, pl.ds(1, WP1P, 2), :])   # (28, 20, 128)
    p1 = p1.reshape(NB, HP1, WP1P, LANES)
    # INVARIANT: p1 real data is [:, :, :14, :18]; cols 14-15 hold finite ReLU
    # garbage from the conv1 width pad, cols 16-19 and all lanes >= 18 are 0.
    # Real conv2 outputs (cols 0..9) only read p1 cols 0..13; the garbage cols
    # only feed conv2 cols >= 10 / pool2 cols >= 5, which C5 never reads.

    # ---- C3 + ReLU as ONE GEMM  M=320, K=640 (5*90 real), N=128 (16 real) ----
    # Width taps folded into lanes (18*dj + c) via XLU rolls (lanes>=18 are 0),
    # height taps folded into K via 128-aligned lane concatenation.
    packed = p1[:, :, 0:W2P, :]
    for dj in range(1, KW):
        packed = packed + pltpu.roll(p1[:, :, dj:dj + W2P, :], 18 * dj, axis=3)
    lhs2 = jnp.concatenate(
        [packed[:, di:di + H2, :, :].reshape(M2, LANES).astype(bf16)
         for di in range(KH)], axis=-1)               # (320, 640) bf16
    a2 = jnp.dot(lhs2, w2_ref[...], preferred_element_type=f32)
    a2 = jnp.maximum(a2 + b2_ref[...], 0.0)           # lanes >= 16 are exactly 0

    # ---- S4: 2x2/2 max pool --------------------------------------------------
    a2 = a2.reshape(NB * H2 // 2, 2, W2P, LANES)
    hp2 = jnp.maximum(a2[:, 0], a2[:, 1])             # (10, 16, 128)
    pool2_ref[...] = hp2
    p2 = jnp.maximum(pool2_ref[:, pl.ds(0, WP2P, 2), :],
                     pool2_ref[:, pl.ds(1, WP2P, 2), :])   # (10, 8, 128)
    p2 = p2.reshape(NB, HP2, WP2P, LANES)             # real: [:, :5, :5, :16]

    # ---- C5 + ReLU as ONE GEMM  M=2, K=640 (5*80 real), N=128 (120 real) -----
    pk5 = p2[:, :, 0, :]                              # (2, 5, 128)
    for dj in range(1, KW):
        pk5 = pk5 + pltpu.roll(p2[:, :, dj, :], 16 * dj, axis=2)
    lhs5 = jnp.concatenate([pk5[:, di, :].astype(bf16) for di in range(KH)],
                           axis=-1)                   # (2, 640) bf16
    feat = jnp.dot(lhs5, w5_ref[...], preferred_element_type=f32)
    feat = jnp.maximum(feat + b5_ref[...], 0.0)       # (2, 128); lanes>=120 zero

    # ---- F6 -> ReLU -> F7 -> log_softmax over the 10 real classes ------------
    h = jnp.dot(feat.astype(bf16), w6_ref[...], preferred_element_type=f32)
    h = jnp.maximum(h + b6_ref[...], 0.0)             # lanes >= 84 zero
    z = jnp.dot(h.astype(bf16), w7_ref[...], preferred_element_type=f32)
    z = z + b7_ref[...]                               # (2, 128); real logits 0..9
    lane = jax.lax.broadcasted_iota(jnp.int32, z.shape, 1)
    valid = lane < F7
    zmax = jnp.max(jnp.where(valid, z, -1e30), axis=-1, keepdims=True)
    ez = jnp.where(valid, jnp.exp(z - zmax), 0.0)
    lse = jnp.log(jnp.sum(ez, axis=-1, keepdims=True)) + zmax
    out_ref[...] = (z - lse)[:, :F7].astype(out_ref.dtype)


# ---------------------------------------------------------------------------
# Wrapper: one pallas_call; input prep = transpose + full conv1 im2col (~450 KB)
# ---------------------------------------------------------------------------
def lenet5_forward(packed, img_nchw):
    n, c, h, w = img_nchw.shape
    assert (n, c, h, w) == (NB, CIN, HIN, WIN), "kernel specialized to 2x3x32x32"
    x = jnp.transpose(img_nchw, (0, 2, 3, 1)).astype(jnp.float32)      # NHWC
    # Full im2col for conv1: lane k = (di*KW + dj)*CIN + cin, padded 75 -> 128.
    xpad = jnp.zeros((n, HIN, W1P + KW - 1, CIN),
                     jnp.float32).at[:, :, :WIN, :].set(x)             # (2,32,36,3)
    pieces = [xpad[:, di:di + H1, dj:dj + W1P, :]
              for di in range(KH) for dj in range(KW)]
    pieces.append(jnp.zeros((n, H1, W1P, LANES - K1), jnp.float32))
    xcol = jnp.concatenate(pieces, axis=-1).astype(jnp.bfloat16)
    xcol = xcol.reshape(M1, LANES)                                     # (1792,128)

    return pl.pallas_call(
        _lenet5_kernel,
        out_shape=jax.ShapeDtypeStruct((n, F7), jnp.float32),
        in_specs=[_VMEM] * 11,
        out_specs=_VMEM,
        scratch_shapes=[
            pltpu.VMEM((NB * HP1, 2 * WP1P, LANES), jnp.float32),   # pool1 staging
            pltpu.VMEM((NB * HP2, W2P, LANES), jnp.float32),        # pool2 staging
        ],
        compiler_params=pltpu.CompilerParams(vmem_limit_bytes=32 * 1024 * 1024),
    )(xcol, packed["w1"], packed["b1"], packed["w2"], packed["b2"],
      packed["w5"], packed["b5"], packed["w6"], packed["b6"],
      packed["w7"], packed["b7"])


# ---------------------------------------------------------------------------
# Parameters: PyTorch-style init + one-time MXU-friendly re-layout / padding
# ---------------------------------------------------------------------------
def init_params(key):
    def u(k, shape, fan_in):
        bound = 1.0 / (fan_in ** 0.5)
        return jax.random.uniform(k, shape, jnp.float32, -bound, bound)

    ks = jax.random.split(key, 10)
    return {
        "c1_w": u(ks[0], (C1, CIN, KH, KW), CIN * KH * KW),
        "c1_b": u(ks[1], (C1,), CIN * KH * KW),
        "c3_w": u(ks[2], (C3, C1, KH, KW), C1 * KH * KW),
        "c3_b": u(ks[3], (C3,), C1 * KH * KW),
        "c5_w": u(ks[4], (C5, C3, KH, KW), C3 * KH * KW),
        "c5_b": u(ks[5], (C5,), C3 * KH * KW),
        "f6_w": u(ks[6], (F6, C5), C5),
        "f6_b": u(ks[7], (F6,), C5),
        "f7_w": u(ks[8], (F7, F6), F6),
        "f7_b": u(ks[9], (F7,), F6),
    }


def _pad_to(a, shape):
    out = jnp.zeros(shape, a.dtype)
    return out.at[tuple(slice(0, s) for s in a.shape)].set(a)


def _pack_conv_folded(w, cin):
    """(cout, cin, KH, KW) -> (KH*128, 128) matrix matching the kernel's
    folded-lane layout: row = 128*di + cin*dj + c  (zero elsewhere)."""
    wt = jnp.transpose(w, (2, 3, 1, 0))                    # (KH, KW, cin, cout)
    cout = wt.shape[-1]
    blocks = [_pad_to(wt[di].reshape(KW * cin, cout), (LANES, LANES))
              for di in range(KH)]
    return jnp.concatenate(blocks, axis=0)                 # (KH*128, 128)


def pack_params(p):
    """One-time re-layout into the kernel's zero-padded bf16 GEMM matrices."""
    bf16 = jnp.bfloat16
    w1 = jnp.transpose(p["c1_w"], (2, 3, 1, 0)).reshape(K1, C1)   # (75, 18)

    def bias(b):
        return _pad_to(b.reshape(1, -1).astype(jnp.float32), (1, LANES))

    return {
        "w1": _pad_to(w1, (LANES, LANES)).astype(bf16),            # 32 KB
        "b1": bias(p["c1_b"]),
        "w2": _pack_conv_folded(p["c3_w"], C1).astype(bf16),       # (640,128) 160 KB
        "b2": bias(p["c3_b"]),
        "w5": _pack_conv_folded(p["c5_w"], C3).astype(bf16),       # (640,128) 160 KB
        "b5": bias(p["c5_b"]),
        "w6": _pad_to(p["f6_w"].T, (LANES, LANES)).astype(bf16),
        "b6": bias(p["f6_b"]),
        "w7": _pad_to(p["f7_w"].T, (LANES, LANES)).astype(bf16),
        "b7": bias(p["f7_b"]),
    }


if __name__ == "__main__":
    key = jax.random.PRNGKey(0)
    pkey, xkey = jax.random.split(key)
    params = init_params(pkey)
    packed = pack_params(params)                      # one-time weight layout
    x = jax.random.normal(xkey, (NB, CIN, HIN, WIN), jnp.float32)   # NCHW input

    fwd = jax.jit(lenet5_forward)
    out = jax.block_until_ready(fwd(packed, x))
    assert out.shape == (NB, F7)
    assert bool(jnp.all(jnp.isfinite(out)))
    print("KERNEL_OK")
</pallas_src>

<mosaic_0001>
module attributes {stable_mosaic.version = 11 : i64} {
  func.func @_lenet5_kernel(%arg0: memref<1792x128xbf16, #tpu.memory_space<vmem>>, %arg1: memref<128x128xbf16, #tpu.memory_space<vmem>>, %arg2: memref<1x128xf32, #tpu.memory_space<vmem>>, %arg3: memref<640x128xbf16, #tpu.memory_space<vmem>>, %arg4: memref<1x128xf32, #tpu.memory_space<vmem>>, %arg5: memref<640x128xbf16, #tpu.memory_space<vmem>>, %arg6: memref<1x128xf32, #tpu.memory_space<vmem>>, %arg7: memref<128x128xbf16, #tpu.memory_space<vmem>>, %arg8: memref<1x128xf32, #tpu.memory_space<vmem>>, %arg9: memref<128x128xbf16, #tpu.memory_space<vmem>>, %arg10: memref<1x128xf32, #tpu.memory_space<vmem>>, %arg11: memref<2x10xf32, #tpu.memory_space<vmem>>, %arg12: memref<28x40x128xf32, #tpu.memory_space<vmem>>, %arg13: memref<10x16x128xf32, #tpu.memory_space<vmem>>) attributes {dimension_semantics = [], scalar_prefetch = 0 : i64, scratch_operands = 2 : i64, tpu.core_type = #tpu.core_type<tc>} {
    %c0 = arith.constant 0 : index
    %c0_0 = arith.constant 0 : index
    %0 = vector.load %arg0[%c0, %c0_0] : memref<1792x128xbf16, #tpu.memory_space<vmem>>, vector<1792x128xbf16>
    %c0_1 = arith.constant 0 : index
    %c0_2 = arith.constant 0 : index
    %1 = vector.load %arg1[%c0_1, %c0_2] : memref<128x128xbf16, #tpu.memory_space<vmem>>, vector<128x128xbf16>
    %cst = arith.constant dense<0.000000e+00> : vector<1792x128xf32>
    %2 = tpu.matmul %0, %1, %cst {dimension_numbers = #tpu.dot_dimension_numbers<[1], [0], [0], [1], [0, 0, 1, 1], [], []>} : vector<1792x128xbf16>, vector<128x128xbf16>, vector<1792x128xf32> -> vector<1792x128xf32>
    %c0_3 = arith.constant 0 : index
    %c0_4 = arith.constant 0 : index
    %3 = vector.load %arg2[%c0_3, %c0_4] : memref<1x128xf32, #tpu.memory_space<vmem>>, vector<1x128xf32>
    %4 = vector.broadcast %3 : vector<1x128xf32> to vector<1792x128xf32>
    %5 = arith.addf %2, %4 : vector<1792x128xf32>
    %cst_5 = arith.constant 0.000000e+00 : f32
    %6 = vector.broadcast %cst_5 : f32 to vector<1792x128xf32>
    %7 = arith.maximumf %5, %6 : vector<1792x128xf32>
    %8 = vector.shape_cast %7 : vector<1792x128xf32> to vector<28x2x32x128xf32>
    %9 = vector.extract_strided_slice %8 {offsets = [0, 0, 0, 0], sizes = [28, 1, 32, 128], strides = [1, 1, 1, 1]} : vector<28x2x32x128xf32> to vector<28x1x32x128xf32>
    %10 = vector.shape_cast %9 : vector<28x1x32x128xf32> to vector<28x32x128xf32>
    %11 = vector.extract_strided_slice %8 {offsets = [0, 1, 0, 0], sizes = [28, 1, 32, 128], strides = [1, 1, 1, 1]} : vector<28x2x32x128xf32> to vector<28x1x32x128xf32>
    %12 = vector.shape_cast %11 : vector<28x1x32x128xf32> to vector<28x32x128xf32>
    %13 = arith.maximumf %10, %12 : vector<28x32x128xf32>
    %c0_6 = arith.constant 0 : index
    %c0_7 = arith.constant 0 : index
    %c0_8 = arith.constant 0 : index
    %14 = vector.load %arg12[%c0_6, %c0_7, %c0_8] : memref<28x40x128xf32, #tpu.memory_space<vmem>>, vector<28x32x128xf32>
    tpu.vector_store %arg12[%c0_6, %c0_7, %c0_8], %13 {strides = array<i32>} : memref<28x40x128xf32, #tpu.memory_space<vmem>>, vector<28x32x128xf32>,
    %cst_9 = arith.constant 0.000000e+00 : f32
    %15 = vector.broadcast %cst_9 : f32 to vector<28x8x128xf32>
    %c0_10 = arith.constant 0 : index
    %c32 = arith.constant 32 : index
    %c0_11 = arith.constant 0 : index
    %16 = vector.load %arg12[%c0_10, %c32, %c0_11] : memref<28x40x128xf32, #tpu.memory_space<vmem>>, vector<28x8x128xf32>
    tpu.vector_store %arg12[%c0_10, %c32, %c0_11], %15 {strides = array<i32>} : memref<28x40x128xf32, #tpu.memory_space<vmem>>, vector<28x8x128xf32>,
    %c0_12 = arith.constant 0 : index
    %c0_13 = arith.constant 0 : index
    %c0_14 = arith.constant 0 : index
    %17 = tpu.strided_load %arg12[%c0_12, %c0_13, %c0_14] {strides = array<i32: 1, 2, 1>} : memref<28x40x128xf32, #tpu.memory_space<vmem>>, vector<28x20x128xf32>
    %c0_15 = arith.constant 0 : index
    %c1 = arith.constant 1 : index
    %c0_16 = arith.constant 0 : index
    %18 = tpu.strided_load %arg12[%c0_15, %c1, %c0_16] {strides = array<i32: 1, 2, 1>} : memref<28x40x128xf32, #tpu.memory_space<vmem>>, vector<28x20x128xf32>
    %19 = arith.maximumf %17, %18 : vector<28x20x128xf32>
    %20 = vector.shape_cast %19 : vector<28x20x128xf32> to vector<2x14x20x128xf32>
    %21 = vector.extract_strided_slice %20 {offsets = [0, 0, 0, 0], sizes = [2, 14, 16, 128], strides = [1, 1, 1, 1]} : vector<2x14x20x128xf32> to vector<2x14x16x128xf32>
    %22 = vector.extract_strided_slice %20 {offsets = [0, 0, 1, 0], sizes = [2, 14, 16, 128], strides = [1, 1, 1, 1]} : vector<2x14x20x128xf32> to vector<2x14x16x128xf32>
    %c18_i32 = arith.constant 18 : i32
    %23 = tpu.dynamic_rotate %22 by %c18_i32 dim 3 : vector<2x14x16x128xf32>, i32 -> vector<2x14x16x128xf32>
    %24 = arith.addf %21, %23 : vector<2x14x16x128xf32>
    %25 = vector.extract_strided_slice %20 {offsets = [0, 0, 2, 0], sizes = [2, 14, 16, 128], strides = [1, 1, 1, 1]} : vector<2x14x20x128xf32> to vector<2x14x16x128xf32>
    %c36_i32 = arith.constant 36 : i32
    %26 = tpu.dynamic_rotate %25 by %c36_i32 dim 3 : vector<2x14x16x128xf32>, i32 -> vector<2x14x16x128xf32>
    %27 = arith.addf %24, %26 : vector<2x14x16x128xf32>
    %28 = vector.extract_strided_slice %20 {offsets = [0, 0, 3, 0], sizes = [2, 14, 16, 128], strides = [1, 1, 1, 1]} : vector<2x14x20x128xf32> to vector<2x14x16x128xf32>
    %c54_i32 = arith.constant 54 : i32
    %29 = tpu.dynamic_rotate %28 by %c54_i32 dim 3 : vector<2x14x16x128xf32>, i32 -> vector<2x14x16x128xf32>
    %30 = arith.addf %27, %29 : vector<2x14x16x128xf32>
    %31 = vector.extract_strided_slice %20 {offsets = [0, 0, 4, 0], sizes = [2, 14, 16, 128], strides = [1, 1, 1, 1]} : vector<2x14x20x128xf32> to vector<2x14x16x128xf32>
    %c72_i32 = arith.constant 72 : i32
    %32 = tpu.dynamic_rotate %31 by %c72_i32 dim 3 : vector<2x14x16x128xf32>, i32 -> vector<2x14x16x128xf32>
    %33 = arith.addf %30, %32 : vector<2x14x16x128xf32>
    %34 = vector.extract_strided_slice %33 {offsets = [0, 0, 0, 0], sizes = [2, 10, 16, 128], strides = [1, 1, 1, 1]} : vector<2x14x16x128xf32> to vector<2x10x16x128xf32>
    %35 = vector.shape_cast %34 : vector<2x10x16x128xf32> to vector<320x128xf32>
    %36 = arith.truncf %35 : vector<320x128xf32> to vector<320x128xbf16>
    %37 = vector.extract_strided_slice %33 {offsets = [0, 1, 0, 0], sizes = [2, 10, 16, 128], strides = [1, 1, 1, 1]} : vector<2x14x16x128xf32> to vector<2x10x16x128xf32>
    %38 = vector.shape_cast %37 : vector<2x10x16x128xf32> to vector<320x128xf32>
    %39 = arith.truncf %38 : vector<320x128xf32> to vector<320x128xbf16>
    %40 = vector.extract_strided_slice %33 {offsets = [0, 2, 0, 0], sizes = [2, 10, 16, 128], strides = [1, 1, 1, 1]} : vector<2x14x16x128xf32> to vector<2x10x16x128xf32>
    %41 = vector.shape_cast %40 : vector<2x10x16x128xf32> to vector<320x128xf32>
    %42 = arith.truncf %41 : vector<320x128xf32> to vector<320x128xbf16>
    %43 = vector.extract_strided_slice %33 {offsets = [0, 3, 0, 0], sizes = [2, 10, 16, 128], strides = [1, 1, 1, 1]} : vector<2x14x16x128xf32> to vector<2x10x16x128xf32>
    %44 = vector.shape_cast %43 : vector<2x10x16x128xf32> to vector<320x128xf32>
    %45 = arith.truncf %44 : vector<320x128xf32> to vector<320x128xbf16>
    %46 = vector.extract_strided_slice %33 {offsets = [0, 4, 0, 0], sizes = [2, 10, 16, 128], strides = [1, 1, 1, 1]} : vector<2x14x16x128xf32> to vector<2x10x16x128xf32>
    %47 = vector.shape_cast %46 : vector<2x10x16x128xf32> to vector<320x128xf32>
    %48 = arith.truncf %47 : vector<320x128xf32> to vector<320x128xbf16>
    %49 = tpu.concatenate %36, %39, %42, %45, %48 in 1 : vector<320x128xbf16>, vector<320x128xbf16>, vector<320x128xbf16>, vector<320x128xbf16>, vector<320x128xbf16> -> vector<320x640xbf16>
    %c0_17 = arith.constant 0 : index
    %c0_18 = arith.constant 0 : index
    %50 = vector.load %arg3[%c0_17, %c0_18] : memref<640x128xbf16, #tpu.memory_space<vmem>>, vector<640x128xbf16>
    %cst_19 = arith.constant dense<0.000000e+00> : vector<320x128xf32>
    %51 = tpu.matmul %49, %50, %cst_19 {dimension_numbers = #tpu.dot_dimension_numbers<[1], [0], [0], [1], [0, 0, 1, 1], [], []>} : vector<320x640xbf16>, vector<640x128xbf16>, vector<320x128xf32> -> vector<320x128xf32>
    %c0_20 = arith.constant 0 : index
    %c0_21 = arith.constant 0 : index
    %52 = vector.load %arg4[%c0_20, %c0_21] : memref<1x128xf32, #tpu.memory_space<vmem>>, vector<1x128xf32>
    %53 = vector.broadcast %52 : vector<1x128xf32> to vector<320x128xf32>
    %54 = arith.addf %51, %53 : vector<320x128xf32>
    %cst_22 = arith.constant 0.000000e+00 : f32
    %55 = vector.broadcast %cst_22 : f32 to vector<320x128xf32>
    %56 = arith.maximumf %54, %55 : vector<320x128xf32>
    %57 = vector.shape_cast %56 : vector<320x128xf32> to vector<10x2x16x128xf32>
    %58 = vector.extract_strided_slice %57 {offsets = [0, 0, 0, 0], sizes = [10, 1, 16, 128], strides = [1, 1, 1, 1]} : vector<10x2x16x128xf32> to vector<10x1x16x128xf32>
    %59 = vector.shape_cast %58 : vector<10x1x16x128xf32> to vector<10x16x128xf32>
    %60 = vector.extract_strided_slice %57 {offsets = [0, 1, 0, 0], sizes = [10, 1, 16, 128], strides = [1, 1, 1, 1]} : vector<10x2x16x128xf32> to vector<10x1x16x128xf32>
    %61 = vector.shape_cast %60 : vector<10x1x16x128xf32> to vector<10x16x128xf32>
    %62 = arith.maximumf %59, %61 : vector<10x16x128xf32>
    %c0_23 = arith.constant 0 : index
    %c0_24 = arith.constant 0 : index
    %c0_25 = arith.constant 0 : index
    %63 = vector.load %arg13[%c0_23, %c0_24, %c0_25] : memref<10x16x128xf32, #tpu.memory_space<vmem>>, vector<10x16x128xf32>
    tpu.vector_store %arg13[%c0_23, %c0_24, %c0_25], %62 {strides = array<i32>} : memref<10x16x128xf32, #tpu.memory_space<vmem>>, vector<10x16x128xf32>,
    %c0_26 = arith.constant 0 : index
    %c0_27 = arith.constant 0 : index
    %c0_28 = arith.constant 0 : index
    %64 = tpu.strided_load %arg13[%c0_26, %c0_27, %c0_28] {strides = array<i32: 1, 2, 1>} : memref<10x16x128xf32, #tpu.memory_space<vmem>>, vector<10x8x128xf32>
    %c0_29 = arith.constant 0 : index
    %c1_30 = arith.constant 1 : index
    %c0_31 = arith.constant 0 : index
    %65 = tpu.strided_load %arg13[%c0_29, %c1_30, %c0_31] {strides = array<i32: 1, 2, 1>} : memref<10x16x128xf32, #tpu.memory_space<vmem>>, vector<10x8x128xf32>
    %66 = arith.maximumf %64, %65 : vector<10x8x128xf32>
    %67 = vector.shape_cast %66 : vector<10x8x128xf32> to vector<2x5x8x128xf32>
    %68 = vector.extract_strided_slice %67 {offsets = [0, 0, 0, 0], sizes = [2, 5, 1, 128], strides = [1, 1, 1, 1]} : vector<2x5x8x128xf32> to vector<2x5x1x128xf32>
    %69 = vector.shape_cast %68 : vector<2x5x1x128xf32> to vector<2x5x128xf32>
    %70 = vector.extract_strided_slice %67 {offsets = [0, 0, 1, 0], sizes = [2, 5, 1, 128], strides = [1, 1, 1, 1]} : vector<2x5x8x128xf32> to vector<2x5x1x128xf32>
    %71 = vector.shape_cast %70 : vector<2x5x1x128xf32> to vector<2x5x128xf32>
    %c16_i32 = arith.constant 16 : i32
    %72 = tpu.dynamic_rotate %71 by %c16_i32 dim 2 : vector<2x5x128xf32>, i32 -> vector<2x5x128xf32>
    %73 = arith.addf %69, %72 : vector<2x5x128xf32>
    %74 = vector.extract_strided_slice %67 {offsets = [0, 0, 2, 0], sizes = [2, 5, 1, 128], strides = [1, 1, 1, 1]} : vector<2x5x8x128xf32> to vector<2x5x1x128xf32>
    %75 = vector.shape_cast %74 : vector<2x5x1x128xf32> to vector<2x5x128xf32>
    %c32_i32 = arith.constant 32 : i32
    %76 = tpu.dynamic_rotate %75 by %c32_i32 dim 2 : vector<2x5x128xf32>, i32 -> vector<2x5x128xf32>
    %77 = arith.addf %73, %76 : vector<2x5x128xf32>
    %78 = vector.extract_strided_slice %67 {offsets = [0, 0, 3, 0], sizes = [2, 5, 1, 128], strides = [1, 1, 1, 1]} : vector<2x5x8x128xf32> to vector<2x5x1x128xf32>
    %79 = vector.shape_cast %78 : vector<2x5x1x128xf32> to vector<2x5x128xf32>
    %c48_i32 = arith.constant 48 : i32
    %80 = tpu.dynamic_rotate %79 by %c48_i32 dim 2 : vector<2x5x128xf32>, i32 -> vector<2x5x128xf32>
    %81 = arith.addf %77, %80 : vector<2x5x128xf32>
    %82 = vector.extract_strided_slice %67 {offsets = [0, 0, 4, 0], sizes = [2, 5, 1, 128], strides = [1, 1, 1, 1]} : vector<2x5x8x128xf32> to vector<2x5x1x128xf32>
    %83 = vector.shape_cast %82 : vector<2x5x1x128xf32> to vector<2x5x128xf32>
    %c64_i32 = arith.constant 64 : i32
    %84 = tpu.dynamic_rotate %83 by %c64_i32 dim 2 : vector<2x5x128xf32>, i32 -> vector<2x5x128xf32>
    %85 = arith.addf %81, %84 : vector<2x5x128xf32>
    %86 = vector.extract_strided_slice %85 {offsets = [0, 0, 0], sizes = [2, 1, 128], strides = [1, 1, 1]} : vector<2x5x128xf32> to vector<2x1x128xf32>
    %87 = vector.shape_cast %86 : vector<2x1x128xf32> to vector<2x128xf32>
    %88 = arith.truncf %87 : vector<2x128xf32> to vector<2x128xbf16>
    %89 = vector.extract_strided_slice %85 {offsets = [0, 1, 0], sizes = [2, 1, 128], strides = [1, 1, 1]} : vector<2x5x128xf32> to vector<2x1x128xf32>
    %90 = vector.shape_cast %89 : vector<2x1x128xf32> to vector<2x128xf32>
    %91 = arith.truncf %90 : vector<2x128xf32> to vector<2x128xbf16>
    %92 = vector.extract_strided_slice %85 {offsets = [0, 2, 0], sizes = [2, 1, 128], strides = [1, 1, 1]} : vector<2x5x128xf32> to vector<2x1x128xf32>
    %93 = vector.shape_cast %92 : vector<2x1x128xf32> to vector<2x128xf32>
    %94 = arith.truncf %93 : vector<2x128xf32> to vector<2x128xbf16>
    %95 = vector.extract_strided_slice %85 {offsets = [0, 3, 0], sizes = [2, 1, 128], strides = [1, 1, 1]} : vector<2x5x128xf32> to vector<2x1x128xf32>
    %96 = vector.shape_cast %95 : vector<2x1x128xf32> to vector<2x128xf32>
    %97 = arith.truncf %96 : vector<2x128xf32> to vector<2x128xbf16>
    %98 = vector.extract_strided_slice %85 {offsets = [0, 4, 0], sizes = [2, 1, 128], strides = [1, 1, 1]} : vector<2x5x128xf32> to vector<2x1x128xf32>
    %99 = vector.shape_cast %98 : vector<2x1x128xf32> to vector<2x128xf32>
    %100 = arith.truncf %99 : vector<2x128xf32> to vector<2x128xbf16>
    %101 = tpu.concatenate %88, %91, %94, %97, %100 in 1 : vector<2x128xbf16>, vector<2x128xbf16>, vector<2x128xbf16>, vector<2x128xbf16>, vector<2x128xbf16> -> vector<2x640xbf16>
    %c0_32 = arith.constant 0 : index
    %c0_33 = arith.constant 0 : index
    %102 = vector.load %arg5[%c0_32, %c0_33] : memref<640x128xbf16, #tpu.memory_space<vmem>>, vector<640x128xbf16>
    %cst_34 = arith.constant dense<0.000000e+00> : vector<2x128xf32>
    %103 = tpu.matmul %101, %102, %cst_34 {dimension_numbers = #tpu.dot_dimension_numbers<[1], [0], [0], [1], [0, 0, 1, 1], [], []>} : vector<2x640xbf16>, vector<640x128xbf16>, vector<2x128xf32> -> vector<2x128xf32>
    %c0_35 = arith.constant 0 : index
    %c0_36 = arith.constant 0 : index
    %104 = vector.load %arg6[%c0_35, %c0_36] : memref<1x128xf32, #tpu.memory_space<vmem>>, vector<1x128xf32>
    %105 = vector.broadcast %104 : vector<1x128xf32> to vector<2x128xf32>
    %106 = arith.addf %103, %105 : vector<2x128xf32>
    %cst_37 = arith.constant 0.000000e+00 : f32
    %107 = vector.broadcast %cst_37 : f32 to vector<2x128xf32>
    %108 = arith.maximumf %106, %107 : vector<2x128xf32>
    %109 = arith.truncf %108 : vector<2x128xf32> to vector<2x128xbf16>
    %c0_38 = arith.constant 0 : index
    %c0_39 = arith.constant 0 : index
    %110 = vector.load %arg7[%c0_38, %c0_39] : memref<128x128xbf16, #tpu.memory_space<vmem>>, vector<128x128xbf16>
    %cst_40 = arith.constant dense<0.000000e+00> : vector<2x128xf32>
    %111 = tpu.matmul %109, %110, %cst_40 {dimension_numbers = #tpu.dot_dimension_numbers<[1], [0], [0], [1], [0, 0, 1, 1], [], []>} : vector<2x128xbf16>, vector<128x128xbf16>, vector<2x128xf32> -> vector<2x128xf32>
    %c0_41 = arith.constant 0 : index
    %c0_42 = arith.constant 0 : index
    %112 = vector.load %arg8[%c0_41, %c0_42] : memref<1x128xf32, #tpu.memory_space<vmem>>, vector<1x128xf32>
    %113 = vector.broadcast %112 : vector<1x128xf32> to vector<2x128xf32>
    %114 = arith.addf %111, %113 : vector<2x128xf32>
    %cst_43 = arith.constant 0.000000e+00 : f32
    %115 = vector.broadcast %cst_43 : f32 to vector<2x128xf32>
    %116 = arith.maximumf %114, %115 : vector<2x128xf32>
    %117 = arith.truncf %116 : vector<2x128xf32> to vector<2x128xbf16>
    %c0_44 = arith.constant 0 : index
    %c0_45 = arith.constant 0 : index
    %118 = vector.load %arg9[%c0_44, %c0_45] : memref<128x128xbf16, #tpu.memory_space<vmem>>, vector<128x128xbf16>
    %cst_46 = arith.constant dense<0.000000e+00> : vector<2x128xf32>
    %119 = tpu.matmul %117, %118, %cst_46 {dimension_numbers = #tpu.dot_dimension_numbers<[1], [0], [0], [1], [0, 0, 1, 1], [], []>} : vector<2x128xbf16>, vector<128x128xbf16>, vector<2x128xf32> -> vector<2x128xf32>
    %c0_47 = arith.constant 0 : index
    %c0_48 = arith.constant 0 : index
    %120 = vector.load %arg10[%c0_47, %c0_48] : memref<1x128xf32, #tpu.memory_space<vmem>>, vector<1x128xf32>
    %121 = vector.broadcast %120 : vector<1x128xf32> to vector<2x128xf32>
    %122 = arith.addf %119, %121 : vector<2x128xf32>
    %123 = tpu.iota {dimensions = array<i32: 1>} : vector<2x128xi32>
    %c10_i32 = arith.constant 10 : i32
    %124 = vector.broadcast %c10_i32 : i32 to vector<2x128xi32>
    %125 = arith.cmpi slt, %123, %124 : vector<2x128xi32>
    %cst_49 = arith.constant -1.000000e+30 : f32
    %126 = vector.broadcast %cst_49 : f32 to vector<2x128xf32>
    %127 = arith.select %125, %122, %126 : vector<2x128xi1>, vector<2x128xf32>
    %cst_50 = arith.constant dense<0xFF800000> : vector<2xf32>
    %128 = vector.multi_reduction <maximumf>, %127, %cst_50 [1] : vector<2x128xf32> to vector<2xf32>
    %129 = vector.shape_cast %128 : vector<2xf32> to vector<2x1xf32>
    %130 = vector.broadcast %129 : vector<2x1xf32> to vector<2x128xf32>
    %131 = arith.subf %122, %130 : vector<2x128xf32>
    %132 = math.exp %131 : vector<2x128xf32>
    %cst_51 = arith.constant 0.000000e+00 : f32
    %133 = vector.broadcast %cst_51 : f32 to vector<2x128xf32>
    %134 = arith.select %125, %132, %133 : vector<2x128xi1>, vector<2x128xf32>
    %cst_52 = arith.constant dense<0.000000e+00> : vector<2xf32>
    %135 = vector.multi_reduction <add>, %134, %cst_52 [1] : vector<2x128xf32> to vector<2xf32>
    %136 = vector.shape_cast %135 : vector<2xf32> to vector<2x1xf32>
    %137 = math.log %136 : vector<2x1xf32>
    %138 = arith.addf %137, %129 : vector<2x1xf32>
    %139 = vector.broadcast %138 : vector<2x1xf32> to vector<2x128xf32>
    %140 = arith.subf %122, %139 : vector<2x128xf32>
    %141 = vector.extract_strided_slice %140 {offsets = [0, 0], sizes = [2, 10], strides = [1, 1]} : vector<2x128xf32> to vector<2x10xf32>
    %c0_53 = arith.constant 0 : index
    %c0_54 = arith.constant 0 : index
    %142 = vector.load %arg11[%c0_53, %c0_54] : memref<2x10xf32, #tpu.memory_space<vmem>>, vector<2x10xf32>
    tpu.vector_store %arg11[%c0_53, %c0_54], %141 {strides = array<i32>} : memref<2x10xf32, #tpu.memory_space<vmem>>, vector<2x10xf32>,
    return
  }
}

</mosaic_0001>

<llo_original>
// kernel: lenet5_forward.1
$region0: #{lenet5_forward.1}
  #allocation0 [shape = 'u32[]', space=smem, size = 0x4, offset = 0x4, fixed_abs, tag = 'smem constant byte address 0x4 - core index']
  #allocation1 [shape = 'u32[144,128]{1,0:T(1,128)}', space=vmem, size = 0x12000, scoped, tag = 'internal scratch']
  #allocation2 [shape = 'f32[28,40,128]{2,1,0:T(8,128)}', space=vmem, size = 0x8c000, scoped, tag = 'scratch operand']
  #allocation3 [shape = 'f32[10,16,128]{2,1,0:T(8,128)}', space=vmem, size = 0x14000, scoped, tag = 'scratch operand']
  %s0 = inlined_call_operand.vmem [shape: bf16[1792,128], index: 0, kind: input, shape index: {}]
  %s1 = inlined_call_operand.vmem [shape: bf16[128,128], index: 1, kind: input, shape index: {}]
  %s2 = inlined_call_operand.vmem [shape: f32[1,128], index: 2, kind: input, shape index: {}]
  %s3 = inlined_call_operand.vmem [shape: bf16[640,128], index: 3, kind: input, shape index: {}]
  %s4 = inlined_call_operand.vmem [shape: f32[1,128], index: 4, kind: input, shape index: {}]
  %s5 = inlined_call_operand.vmem [shape: bf16[640,128], index: 5, kind: input, shape index: {}]
  %s6 = inlined_call_operand.vmem [shape: f32[1,128], index: 6, kind: input, shape index: {}]
  %s7 = inlined_call_operand.vmem [shape: bf16[128,128], index: 7, kind: input, shape index: {}]
  %s8 = inlined_call_operand.vmem [shape: f32[1,128], index: 8, kind: input, shape index: {}]
  %s9 = inlined_call_operand.vmem [shape: bf16[128,128], index: 9, kind: input, shape index: {}]
  %s10 = inlined_call_operand.vmem [shape: f32[1,128], index: 10, kind: input, shape index: {}]
  %s11 = inlined_call_operand.hbm [shape: f32[2,10], index: 11, kind: output, shape index: {}]
  %s12 = sld [smem:[#allocation0]]
  $region54: #{lenet5_forward.1} parent=0
    _
  %s14 = ssub.s32 1, %s12
  %s15 = scalar_select 0, %s14, %s12
  $region1: #{lenet5_forward.1} parent=0
    #allocation4 [shape = 'u8[1024]{0}', space=vmem, size = 0x400, scoped, tag = 'output window, operand 0, single buffered']
    #allocation5 [shape = 's32[1]{0}', space=sflag, size = 0x4, scoped, tag = 'scoped memory for lenet5_forward.1']
    %16 = vsyncpa [#allocation5], 0
    // Predicated region
    $region2: #{lenet5_forward.1} parent=1 // pred_check
      _
    $region3: #{lenet5_forward.1} parent=1 // pred_check_branch
      %18 = sbr.rel (0) target = $region5
    $region4: #{lenet5_forward.1} parent=1 // pred_region
      _
    $region5: #{lenet5_forward.1} parent=1 // pred_fallthru
      _
    // Predicated region
    $region6: #{lenet5_forward.1} parent=1 // pred_check
      _
    $region7: #{lenet5_forward.1} parent=1 // pred_check_branch
      %20 = sbr.rel (0) target = $region9
    $region8: #{lenet5_forward.1} parent=1 // pred_region
      _
    $region9: #{lenet5_forward.1} parent=1 // pred_fallthru
      _
    // Predicated region
    $region10: #{lenet5_forward.1} parent=1 // pred_check
      _
    $region11: #{lenet5_forward.1} parent=1 // pred_check_branch
      %22 = sbr.rel (0) target = $region13
    $region12: #{lenet5_forward.1} parent=1 // pred_region
      _
    $region13: #{lenet5_forward.1} parent=1 // pred_fallthru
      _
    // Predicated region
    $region14: #{lenet5_forward.1} parent=1 // pred_check
      _
    $region15: #{lenet5_forward.1} parent=1 // pred_check_branch
      %24 = sbr.rel (0) target = $region17
    $region16: #{lenet5_forward.1} parent=1 // pred_region
      _
    $region17: #{lenet5_forward.1} parent=1 // pred_fallthru
      _
    // Predicated region
    $region18: #{lenet5_forward.1} parent=1 // pred_check
      _
    $region19: #{lenet5_forward.1} parent=1 // pred_check_branch
      %26 = sbr.rel (0) target = $region21
    $region20: #{lenet5_forward.1} parent=1 // pred_region
      _
    $region21: #{lenet5_forward.1} parent=1 // pred_fallthru
      _
    // Predicated region
    $region22: #{lenet5_forward.1} parent=1 // pred_check
      _
    $region23: #{lenet5_forward.1} parent=1 // pred_check_branch
      %28 = sbr.rel (0) target = $region25
    $region24: #{lenet5_forward.1} parent=1 // pred_region
      _
    $region25: #{lenet5_forward.1} parent=1 // pred_fallthru
      _
    // Predicated region
    $region26: #{lenet5_forward.1} parent=1 // pred_check
      _
    $region27: #{lenet5_forward.1} parent=1 // pred_check_branch
      %30 = sbr.rel (0) target = $region29
    $region28: #{lenet5_forward.1} parent=1 // pred_region
      _
    $region29: #{lenet5_forward.1} parent=1 // pred_fallthru
      _
    // Predicated region
    $region30: #{lenet5_forward.1} parent=1 // pred_check
      _
    $region31: #{lenet5_forward.1} parent=1 // pred_check_branch
      %32 = sbr.rel (0) target = $region33
    $region32: #{lenet5_forward.1} parent=1 // pred_region
      _
    $region33: #{lenet5_forward.1} parent=1 // pred_fallthru
      _
    // Predicated region
    $region34: #{lenet5_forward.1} parent=1 // pred_check
      _
    $region35: #{lenet5_forward.1} parent=1 // pred_check_branch
      %34 = sbr.rel (0) target = $region37
    $region36: #{lenet5_forward.1} parent=1 // pred_region
      _
    $region37: #{lenet5_forward.1} parent=1 // pred_fallthru
      _
    // Predicated region
    $region38: #{lenet5_forward.1} parent=1 // pred_check
      _
    $region39: #{lenet5_forward.1} parent=1 // pred_check_branch
      %36 = sbr.rel (0) target = $region41
    $region40: #{lenet5_forward.1} parent=1 // pred_region
      _
    $region41: #{lenet5_forward.1} parent=1 // pred_fallthru
      _
    // Predicated region
    $region42: #{lenet5_forward.1} parent=1 // pred_check
      _
    $region43: #{lenet5_forward.1} parent=1 // pred_check_branch
      %38 = sbr.rel (0) target = $region45
    $region44: #{lenet5_forward.1} parent=1 // pred_region
      _
    $region45: #{lenet5_forward.1} parent=1 // pred_fallthru
      _
    %v40 = vld [vmem:[%s0] sm:$0xf]
    %v41 = vld [vmem:[%s0 + $0x4] sm:$0xf]
    %v42 = vld [vmem:[%s0 + $0x8] sm:$0xf]
    %v43 = vld [vmem:[%s0 + $0xc] sm:$0xf]
    %v44 = vld [vmem:[%s0 + $0x10] sm:$0xf]
    %v45 = vld [vmem:[%s0 + $0x14] sm:$0xf]
    %v46 = vld [vmem:[%s0 + $0x18] sm:$0xf]
    %v47 = vld [vmem:[%s0 + $0x1c] sm:$0xf]
    %v48 = vld [vmem:[%s0 + $0x20] sm:$0xf]
    %v49 = vld [vmem:[%s0 + $0x24] sm:$0xf]
    %v50 = vld [vmem:[%s0 + $0x28] sm:$0xf]
    %v51 = vld [vmem:[%s0 + $0x2c] sm:$0xf]
    %v52 = vld [vmem:[%s0 + $0x30] sm:$0xf]
    %v53 = vld [vmem:[%s0 + $0x34] sm:$0xf]
    %v54 = vld [vmem:[%s0 + $0x38] sm:$0xf]
    %v55 = vld [vmem:[%s0 + $0x3c] sm:$0xf]
    %v56 = vld [vmem:[%s0 + $0x40] sm:$0xf]
    %v57 = vld [vmem:[%s0 + $0x44] sm:$0xf]
    %v58 = vld [vmem:[%s0 + $0x48] sm:$0xf]
    %v59 = vld [vmem:[%s0 + $0x4c] sm:$0xf]
    %v60 = vld [vmem:[%s0 + $0x50] sm:$0xf]
    %v61 = vld [vmem:[%s0 + $0x54] sm:$0xf]
    %v62 = vld [vmem:[%s0 + $0x58] sm:$0xf]
    %v63 = vld [vmem:[%s0 + $0x5c] sm:$0xf]
    %v64 = vld [vmem:[%s0 + $0x60] sm:$0xf]
    %v65 = vld [vmem:[%s0 + $0x64] sm:$0xf]
    %v66 = vld [vmem:[%s0 + $0x68] sm:$0xf]
    %v67 = vld [vmem:[%s0 + $0x6c] sm:$0xf]
    %v68 = vld [vmem:[%s0 + $0x70] sm:$0xf]
    %v69 = vld [vmem:[%s0 + $0x74] sm:$0xf]
    %v70 = vld [vmem:[%s0 + $0x78] sm:$0xf]
    %v71 = vld [vmem:[%s0 + $0x7c] sm:$0xf]
    %v72 = vld [vmem:[%s0 + $0x80] sm:$0xf]
    %v73 = vld [vmem:[%s0 + $0x84] sm:$0xf]
    %v74 = vld [vmem:[%s0 + $0x88] sm:$0xf]
    %v75 = vld [vmem:[%s0 + $0x8c] sm:$0xf]
    %v76 = vld [vmem:[%s0 + $0x90] sm:$0xf]
    %v77 = vld [vmem:[%s0 + $0x94] sm:$0xf]
    %v78 = vld [vmem:[%s0 + $0x98] sm:$0xf]
    %v79 = vld [vmem:[%s0 + $0x9c] sm:$0xf]
    %v80 = vld [vmem:[%s0 + $0xa0] sm:$0xf]
    %v81 = vld [vmem:[%s0 + $0xa4] sm:$0xf]
    %v82 = vld [vmem:[%s0 + $0xa8] sm:$0xf]
    %v83 = vld [vmem:[%s0 + $0xac] sm:$0xf]
    %v84 = vld [vmem:[%s0 + $0xb0] sm:$0xf]
    %v85 = vld [vmem:[%s0 + $0xb4] sm:$0xf]
    %v86 = vld [vmem:[%s0 + $0xb8] sm:$0xf]
    %v87 = vld [vmem:[%s0 + $0xbc] sm:$0xf]
    %v88 = vld [vmem:[%s0 + $0xc0] sm:$0xf]
    %v89 = vld [vmem:[%s0 + $0xc4] sm:$0xf]
    %v90 = vld [vmem:[%s0 + $0xc8] sm:$0xf]
    %v91 = vld [vmem:[%s0 + $0xcc] sm:$0xf]
    %v92 = vld [vmem:[%s0 + $0xd0] sm:$0xf]
    %v93 = vld [vmem:[%s0 + $0xd4] sm:$0xf]
    %v94 = vld [vmem:[%s0 + $0xd8] sm:$0xf]
    %v95 = vld [vmem:[%s0 + $0xdc] sm:$0xf]
    %v96 = vld [vmem:[%s0 + $0xe0] sm:$0xf]
    %v97 = vld [vmem:[%s0 + $0xe4] sm:$0xf]
    %v98 = vld [vmem:[%s0 + $0xe8] sm:$0xf]
    %v99 = vld [vmem:[%s0 + $0xec] sm:$0xf]
    %v100 = vld [vmem:[%s0 + $0xf0] sm:$0xf]
    %v101 = vld [vmem:[%s0 + $0xf4] sm:$0xf]
    %v102 = vld [vmem:[%s0 + $0xf8] sm:$0xf]
    %v103 = vld [vmem:[%s0 + $0xfc] sm:$0xf]
    %v104 = vld [vmem:[%s0 + $0x100] sm:$0xf]
    %v105 = vld [vmem:[%s0 + $0x104] sm:$0xf]
    %v106 = vld [vmem:[%s0 + $0x108] sm:$0xf]
    %v107 = vld [vmem:[%s0 + $0x10c] sm:$0xf]
    %v108 = vld [vmem:[%s0 + $0x110] sm:$0xf]
    %v109 = vld [vmem:[%s0 + $0x114] sm:$0xf]
    %v110 = vld [vmem:[%s0 + $0x118] sm:$0xf]
    %v111 = vld [vmem:[%s0 + $0x11c] sm:$0xf]
    %v112 = vld [vmem:[%s0 + $0x120] sm:$0xf]
    %v113 = vld [vmem:[%s0 + $0x124] sm:$0xf]
    %v114 = vld [vmem:[%s0 + $0x128] sm:$0xf]
    %v115 = vld [vmem:[%s0 + $0x12c] sm:$0xf]
    %v116 = vld [vmem:[%s0 + $0x130] sm:$0xf]
    %v117 = vld [vmem:[%s0 + $0x134] sm:$0xf]
    %v118 = vld [vmem:[%s0 + $0x138] sm:$0xf]
    %v119 = vld [vmem:[%s0 + $0x13c] sm:$0xf]
    %v120 = vld [vmem:[%s0 + $0x140] sm:$0xf]
    %v121 = vld [vmem:[%s0 + $0x144] sm:$0xf]
    %v122 = vld [vmem:[%s0 + $0x148] sm:$0xf]
    %v123 = vld [vmem:[%s0 + $0x14c] sm:$0xf]
    %v124 = vld [vmem:[%s0 + $0x150] sm:$0xf]
    %v125 = vld [vmem:[%s0 + $0x154] sm:$0xf]
    %v126 = vld [vmem:[%s0 + $0x158] sm:$0xf]
    %v127 = vld [vmem:[%s0 + $0x15c] sm:$0xf]
    %v128 = vld [vmem:[%s0 + $0x160] sm:$0xf]
    %v129 = vld [vmem:[%s0 + $0x164] sm:$0xf]
    %v130 = vld [vmem:[%s0 + $0x168] sm:$0xf]
    %v131 = vld [vmem:[%s0 + $0x16c] sm:$0xf]
    %v132 = vld [vmem:[%s0 + $0x170] sm:$0xf]
    %v133 = vld [vmem:[%s0 + $0x174] sm:$0xf]
    %v134 = vld [vmem:[%s0 + $0x178] sm:$0xf]
    %v135 = vld [vmem:[%s0 + $0x17c] sm:$0xf]
    %v136 = vld [vmem:[%s0 + $0x180] sm:$0xf]
    %v137 = vld [vmem:[%s0 + $0x184] sm:$0xf]
    %v138 = vld [vmem:[%s0 + $0x188] sm:$0xf]
    %v139 = vld [vmem:[%s0 + $0x18c] sm:$0xf]
    %v140 = vld [vmem:[%s0 + $0x190] sm:$0xf]
    %v141 = vld [vmem:[%s0 + $0x194] sm:$0xf]
    %v142 = vld [vmem:[%s0 + $0x198] sm:$0xf]
    %v143 = vld [vmem:[%s0 + $0x19c] sm:$0xf]
    %v144 = vld [vmem:[%s0 + $0x1a0] sm:$0xf]
    %v145 = vld [vmem:[%s0 + $0x1a4] sm:$0xf]
    %v146 = vld [vmem:[%s0 + $0x1a8] sm:$0xf]
    %v147 = vld [vmem:[%s0 + $0x1ac] sm:$0xf]
    %v148 = vld [vmem:[%s0 + $0x1b0] sm:$0xf]
    %v149 = vld [vmem:[%s0 + $0x1b4] sm:$0xf]
    %v150 = vld [vmem:[%s0 + $0x1b8] sm:$0xf]
    %v151 = vld [vmem:[%s0 + $0x1bc] sm:$0xf]
    %v152 = vld [vmem:[%s0 + $0x1c0] sm:$0xf]
    %v153 = vld [vmem:[%s0 + $0x1c4] sm:$0xf]
    %v154 = vld [vmem:[%s0 + $0x1c8] sm:$0xf]
    %v155 = vld [vmem:[%s0 + $0x1cc] sm:$0xf]
    %v156 = vld [vmem:[%s0 + $0x1d0] sm:$0xf]
    %v157 = vld [vmem:[%s0 + $0x1d4] sm:$0xf]
    %v158 = vld [vmem:[%s0 + $0x1d8] sm:$0xf]
    %v159 = vld [vmem:[%s0 + $0x1dc] sm:$0xf]
    %v160 = vld [vmem:[%s0 + $0x1e0] sm:$0xf]
    %v161 = vld [vmem:[%s0 + $0x1e4] sm:$0xf]
    %v162 = vld [vmem:[%s0 + $0x1e8] sm:$0xf]
    %v163 = vld [vmem:[%s0 + $0x1ec] sm:$0xf]
    %v164 = vld [vmem:[%s0 + $0x1f0] sm:$0xf]
    %v165 = vld [vmem:[%s0 + $0x1f4] sm:$0xf]
    %v166 = vld [vmem:[%s0 + $0x1f8] sm:$0xf]
    %v167 = vld [vmem:[%s0 + $0x1fc] sm:$0xf]
    %v168 = vld [vmem:[%s0 + $0x200] sm:$0xf]
    %v169 = vld [vmem:[%s0 + $0x204] sm:$0xf]
    %v170 = vld [vmem:[%s0 + $0x208] sm:$0xf]
    %v171 = vld [vmem:[%s0 + $0x20c] sm:$0xf]
    %v172 = vld [vmem:[%s0 + $0x210] sm:$0xf]
    %v173 = vld [vmem:[%s0 + $0x214] sm:$0xf]
    %v174 = vld [vmem:[%s0 + $0x218] sm:$0xf]
    %v175 = vld [vmem:[%s0 + $0x21c] sm:$0xf]
    %v176 = vld [vmem:[%s0 + $0x220] sm:$0xf]
    %v177 = vld [vmem:[%s0 + $0x224] sm:$0xf]
    %v178 = vld [vmem:[%s0 + $0x228] sm:$0xf]
    %v179 = vld [vmem:[%s0 + $0x22c] sm:$0xf]
    %v180 = vld [vmem:[%s0 + $0x230] sm:$0xf]
    %v181 = vld [vmem:[%s0 + $0x234] sm:$0xf]
    %v182 = vld [vmem:[%s0 + $0x238] sm:$0xf]
    %v183 = vld [vmem:[%s0 + $0x23c] sm:$0xf]
    %v184 = vld [vmem:[%s0 + $0x240] sm:$0xf]
    %v185 = vld [vmem:[%s0 + $0x244] sm:$0xf]
    %v186 = vld [vmem:[%s0 + $0x248] sm:$0xf]
    %v187 = vld [vmem:[%s0 + $0x24c] sm:$0xf]
    %v188 = vld [vmem:[%s0 + $0x250] sm:$0xf]
    %v189 = vld [vmem:[%s0 + $0x254] sm:$0xf]
    %v190 = vld [vmem:[%s0 + $0x258] sm:$0xf]
    %v191 = vld [vmem:[%s0 + $0x25c] sm:$0xf]
    %v192 = vld [vmem:[%s0 + $0x260] sm:$0xf]
    %v193 = vld [vmem:[%s0 + $0x264] sm:$0xf]
    %v194 = vld [vmem:[%s0 + $0x268] sm:$0xf]
    %v195 = vld [vmem:[%s0 + $0x26c] sm:$0xf]
    %v196 = vld [vmem:[%s0 + $0x270] sm:$0xf]
    %v197 = vld [vmem:[%s0 + $0x274] sm:$0xf]
    %v198 = vld [vmem:[%s0 + $0x278] sm:$0xf]
    %v199 = vld [vmem:[%s0 + $0x27c] sm:$0xf]
    %v200 = vld [vmem:[%s0 + $0x280] sm:$0xf]
    %v201 = vld [vmem:[%s0 + $0x284] sm:$0xf]
    %v202 = vld [vmem:[%s0 + $0x288] sm:$0xf]
    %v203 = vld [vmem:[%s0 + $0x28c] sm:$0xf]
    %v204 = vld [vmem:[%s0 + $0x290] sm:$0xf]
    %v205 = vld [vmem:[%s0 + $0x294] sm:$0xf]
    %v206 = vld [vmem:[%s0 + $0x298] sm:$0xf]
    %v207 = vld [vmem:[%s0 + $0x29c] sm:$0xf]
    %v208 = vld [vmem:[%s0 + $0x2a0] sm:$0xf]
    %v209 = vld [vmem:[%s0 + $0x2a4] sm:$0xf]
    %v210 = vld [vmem:[%s0 + $0x2a8] sm:$0xf]
    %v211 = vld [vmem:[%s0 + $0x2ac] sm:$0xf]
    %v212 = vld [vmem:[%s0 + $0x2b0] sm:$0xf]
    %v213 = vld [vmem:[%s0 + $0x2b4] sm:$0xf]
    %v214 = vld [vmem:[%s0 + $0x2b8] sm:$0xf]
    %v215 = vld [vmem:[%s0 + $0x2bc] sm:$0xf]
    %v216 = vld [vmem:[%s0 + $0x2c0] sm:$0xf]
    %v217 = vld [vmem:[%s0 + $0x2c4] sm:$0xf]
    %v218 = vld [vmem:[%s0 + $0x2c8] sm:$0xf]
    %v219 = vld [vmem:[%s0 + $0x2cc] sm:$0xf]
    %v220 = vld [vmem:[%s0 + $0x2d0] sm:$0xf]
    %v221 = vld [vmem:[%s0 + $0x2d4] sm:$0xf]
    %v222 = vld [vmem:[%s0 + $0x2d8] sm:$0xf]
    %v223 = vld [vmem:[%s0 + $0x2dc] sm:$0xf]
    %v224 = vld [vmem:[%s0 + $0x2e0] sm:$0xf]
    %v225 = vld [vmem:[%s0 + $0x2e4] sm:$0xf]
    %v226 = vld [vmem:[%s0 + $0x2e8] sm:$0xf]
    %v227 = vld [vmem:[%s0 + $0x2ec] sm:$0xf]
    %v228 = vld [vmem:[%s0 + $0x2f0] sm:$0xf]
    %v229 = vld [vmem:[%s0 + $0x2f4] sm:$0xf]
    %v230 = vld [vmem:[%s0 + $0x2f8] sm:$0xf]
    %v231 = vld [vmem:[%s0 + $0x2fc] sm:$0xf]
    %v232 = vld [vmem:[%s0 + $0x300] sm:$0xf]
    %v233 = vld [vmem:[%s0 + $0x304] sm:$0xf]
    %v234 = vld [vmem:[%s0 + $0x308] sm:$0xf]
    %v235 = vld [vmem:[%s0 + $0x30c] sm:$0xf]
    %v236 = vld [vmem:[%s0 + $0x310] sm:$0xf]
    %v237 = vld [vmem:[%s0 + $0x314] sm:$0xf]
    %v238 = vld [vmem:[%s0 + $0x318] sm:$0xf]
    %v239 = vld [vmem:[%s0 + $0x31c] sm:$0xf]
    %v240 = vld [vmem:[%s0 + $0x320] sm:$0xf]
    %v241 = vld [vmem:[%s0 + $0x324] sm:$0xf]
    %v242 = vld [vmem:[%s0 + $0x328] sm:$0xf]
    %v243 = vld [vmem:[%s0 + $0x32c] sm:$0xf]
    %v244 = vld [vmem:[%s0 + $0x330] sm:$0xf]
    %v245 = vld [vmem:[%s0 + $0x334] sm:$0xf]
    %v246 = vld [vmem:[%s0 + $0x338] sm:$0xf]
    %v247 = vld [vmem:[%s0 + $0x33c] sm:$0xf]
    %v248 = vld [vmem:[%s0 + $0x340] sm:$0xf]
    %v249 = vld [vmem:[%s0 + $0x344] sm:$0xf]
    %v250 = vld [vmem:[%s0 + $0x348] sm:$0xf]
    %v251 = vld [vmem:[%s0 + $0x34c] sm:$0xf]
    %v252 = vld [vmem:[%s0 + $0x350] sm:$0xf]
    %v253 = vld [vmem:[%s0 + $0x354] sm:$0xf]
    %v254 = vld [vmem:[%s0 + $0x358] sm:$0xf]
    %v255 = vld [vmem:[%s0 + $0x35c] sm:$0xf]
    %v256 = vld [vmem:[%s0 + $0x360] sm:$0xf]
    %v257 = vld [vmem:[%s0 + $0x364] sm:$0xf]
    %v258 = vld [vmem:[%s0 + $0x368] sm:$0xf]
    %v259 = vld [vmem:[%s0 + $0x36c] sm:$0xf]
    %v260 = vld [vmem:[%s0 + $0x370] sm:$0xf]
    %v261 = vld [vmem:[%s0 + $0x374] sm:$0xf]
    %v262 = vld [vmem:[%s0 + $0x378] sm:$0xf]
    %v263 = vld [vmem:[%s0 + $0x37c] sm:$0xf]
    %v264 = vld [vmem:[%s1] sm:$0xf]
    %v265 = vld [vmem:[%s1 + $0x4] sm:$0xf]
    %v266 = vld [vmem:[%s1 + $0x8] sm:$0xf]
    %v267 = vld [vmem:[%s1 + $0xc] sm:$0xf]
    %v268 = vld [vmem:[%s1 + $0x10] sm:$0xf]
    %v269 = vld [vmem:[%s1 + $0x14] sm:$0xf]
    %v270 = vld [vmem:[%s1 + $0x18] sm:$0xf]
    %v271 = vld [vmem:[%s1 + $0x1c] sm:$0xf]
    %v272 = vld [vmem:[%s1 + $0x20] sm:$0xf]
    %v273 = vld [vmem:[%s1 + $0x24] sm:$0xf]
    %v274 = vld [vmem:[%s1 + $0x28] sm:$0xf]
    %v275 = vld [vmem:[%s1 + $0x2c] sm:$0xf]
    %v276 = vld [vmem:[%s1 + $0x30] sm:$0xf]
    %v277 = vld [vmem:[%s1 + $0x34] sm:$0xf]
    %v278 = vld [vmem:[%s1 + $0x38] sm:$0xf]
    %v279 = vld [vmem:[%s1 + $0x3c] sm:$0xf]
    %v280 = vld [vmem:[%s2] sm:$0x1]
    %v282 = vlaneseq
    %v283 = vshrl.u32 %v282, 7
    %v284 = vsub.s32 0, %v283
    %v285 = vrot.slane %v280, %v284
    %v511 = vunpack.c.l.b16 %v40
    %v512 = vunpack.c.l.b16 %v41
    %v513 = vunpack.c.l.b16 %v42
    %v514 = vunpack.c.l.b16 %v43
    %v515 = vunpack.c.l.b16 %v44
    %v516 = vunpack.c.l.b16 %v45
    %v517 = vunpack.c.l.b16 %v46
    %v518 = vunpack.c.l.b16 %v47
    %v519 = vunpack.c.l.b16 %v48
    %v520 = vunpack.c.l.b16 %v49
    %v521 = vunpack.c.l.b16 %v50
    %v522 = vunpack.c.l.b16 %v51
    %v523 = vunpack.c.l.b16 %v52
    %v524 = vunpack.c.l.b16 %v53
    %v525 = vunpack.c.l.b16 %v54
    %v526 = vunpack.c.l.b16 %v55
    %v527 = vunpack.c.l.b16 %v56
    %v528 = vunpack.c.l.b16 %v57
    %v529 = vunpack.c.l.b16 %v58
    %v530 = vunpack.c.l.b16 %v59
    %v531 = vunpack.c.l.b16 %v60
    %v532 = vunpack.c.l.b16 %v61
    %v533 = vunpack.c.l.b16 %v62
    %v534 = vunpack.c.l.b16 %v63
    %v535 = vunpack.c.l.b16 %v64
    %v536 = vunpack.c.l.b16 %v65
    %v537 = vunpack.c.l.b16 %v66
    %v538 = vunpack.c.l.b16 %v67
    %v539 = vunpack.c.l.b16 %v68
    %v540 = vunpack.c.l.b16 %v69
    %v541 = vunpack.c.l.b16 %v70
    %v542 = vunpack.c.l.b16 %v71
    %v543 = vunpack.c.l.b16 %v72
    %v544 = vunpack.c.l.b16 %v73
    %v545 = vunpack.c.l.b16 %v74
    %v546 = vunpack.c.l.b16 %v75
    %v547 = vunpack.c.l.b16 %v76
    %v548 = vunpack.c.l.b16 %v77
    %v549 = vunpack.c.l.b16 %v78
    %v550 = vunpack.c.l.b16 %v79
    %v551 = vunpack.c.l.b16 %v80
    %v552 = vunpack.c.l.b16 %v81
    %v553 = vunpack.c.l.b16 %v82
    %v554 = vunpack.c.l.b16 %v83
    %v555 = vunpack.c.l.b16 %v84
    %v556 = vunpack.c.l.b16 %v85
    %v557 = vunpack.c.l.b16 %v86
    %v558 = vunpack.c.l.b16 %v87
    %v559 = vunpack.c.l.b16 %v88
    %v560 = vunpack.c.l.b16 %v89
    %v561 = vunpack.c.l.b16 %v90
    %v562 = vunpack.c.l.b16 %v91
    %v563 = vunpack.c.l.b16 %v92
    %v564 = vunpack.c.l.b16 %v93
    %v565 = vunpack.c.l.b16 %v94
    %v566 = vunpack.c.l.b16 %v95
    %v567 = vunpack.c.l.b16 %v96
    %v568 = vunpack.c.l.b16 %v97
    %v569 = vunpack.c.l.b16 %v98
    %v570 = vunpack.c.l.b16 %v99
    %v571 = vunpack.c.l.b16 %v100
    %v572 = vunpack.c.l.b16 %v101
    %v573 = vunpack.c.l.b16 %v102
    %v574 = vunpack.c.l.b16 %v103
    %v575 = vunpack.c.l.b16 %v104
    %v576 = vunpack.c.l.b16 %v105
    %v577 = vunpack.c.l.b16 %v106
    %v578 = vunpack.c.l.b16 %v107
    %v579 = vunpack.c.l.b16 %v108
    %v580 = vunpack.c.l.b16 %v109
    %v581 = vunpack.c.l.b16 %v110
    %v582 = vunpack.c.l.b16 %v111
    %v583 = vunpack.c.l.b16 %v112
    %v584 = vunpack.c.l.b16 %v113
    %v585 = vunpack.c.l.b16 %v114
    %v586 = vunpack.c.l.b16 %v115
    %v587 = vunpack.c.l.b16 %v116
    %v588 = vunpack.c.l.b16 %v117
    %v589 = vunpack.c.l.b16 %v118
    %v590 = vunpack.c.l.b16 %v119
    %v591 = vunpack.c.l.b16 %v120
    %v592 = vunpack.c.l.b16 %v121
    %v593 = vunpack.c.l.b16 %v122
    %v594 = vunpack.c.l.b16 %v123
    %v595 = vunpack.c.l.b16 %v124
    %v596 = vunpack.c.l.b16 %v125
    %v597 = vunpack.c.l.b16 %v126
    %v598 = vunpack.c.l.b16 %v127
    %v599 = vunpack.c.l.b16 %v128
    %v600 = vunpack.c.l.b16 %v129
    %v601 = vunpack.c.l.b16 %v130
    %v602 = vunpack.c.l.b16 %v131
    %v603 = vunpack.c.l.b16 %v132
    %v604 = vunpack.c.l.b16 %v133
    %v605 = vunpack.c.l.b16 %v134
    %v606 = vunpack.c.l.b16 %v135
    %v607 = vunpack.c.l.b16 %v136
    %v608 = vunpack.c.l.b16 %v137
    %v609 = vunpack.c.l.b16 %v138
    %v610 = vunpack.c.l.b16 %v139
    %v611 = vunpack.c.l.b16 %v140
    %v612 = vunpack.c.l.b16 %v141
    %v613 = vunpack.c.l.b16 %v142
    %v614 = vunpack.c.l.b16 %v143
    %v615 = vunpack.c.l.b16 %v144
    %v616 = vunpack.c.l.b16 %v145
    %v617 = vunpack.c.l.b16 %v146
    %v618 = vunpack.c.l.b16 %v147
    %v619 = vunpack.c.l.b16 %v148
    %v620 = vunpack.c.l.b16 %v149
    %v621 = vunpack.c.l.b16 %v150
    %v622 = vunpack.c.l.b16 %v151
    %v623 = vunpack.c.l.b16 %v152
    %v624 = vunpack.c.l.b16 %v153
    %v625 = vunpack.c.l.b16 %v154
    %v626 = vunpack.c.l.b16 %v155
    %v627 = vunpack.c.l.b16 %v156
    %v628 = vunpack.c.l.b16 %v157
    %v629 = vunpack.c.l.b16 %v158
    %v630 = vunpack.c.l.b16 %v159
    %v631 = vunpack.c.l.b16 %v160
    %v632 = vunpack.c.l.b16 %v161
    %v633 = vunpack.c.l.b16 %v162
    %v634 = vunpack.c.l.b16 %v163
    %v635 = vunpack.c.l.b16 %v164
    %v636 = vunpack.c.l.b16 %v165
    %v637 = vunpack.c.l.b16 %v166
    %v638 = vunpack.c.l.b16 %v167
    %v639 = vunpack.c.l.b16 %v168
    %v640 = vunpack.c.l.b16 %v169
    %v641 = vunpack.c.l.b16 %v170
    %v642 = vunpack.c.l.b16 %v171
    %v643 = vunpack.c.l.b16 %v172
    %v644 = vunpack.c.l.b16 %v173
    %v645 = vunpack.c.l.b16 %v174
    %v646 = vunpack.c.l.b16 %v175
    %v647 = vunpack.c.l.b16 %v176
    %v648 = vunpack.c.l.b16 %v177
    %v649 = vunpack.c.l.b16 %v178
    %v650 = vunpack.c.l.b16 %v179
    %v651 = vunpack.c.l.b16 %v180
    %v652 = vunpack.c.l.b16 %v181
    %v653 = vunpack.c.l.b16 %v182
    %v654 = vunpack.c.l.b16 %v183
    %v655 = vunpack.c.l.b16 %v184
    %v656 = vunpack.c.l.b16 %v185
    %v657 = vunpack.c.l.b16 %v186
    %v658 = vunpack.c.l.b16 %v187
    %v659 = vunpack.c.l.b16 %v188
    %v660 = vunpack.c.l.b16 %v189
    %v661 = vunpack.c.l.b16 %v190
    %v662 = vunpack.c.l.b16 %v191
    %v663 = vunpack.c.l.b16 %v192
    %v664 = vunpack.c.l.b16 %v193
    %v665 = vunpack.c.l.b16 %v194
    %v666 = vunpack.c.l.b16 %v195
    %v667 = vunpack.c.l.b16 %v196
    %v668 = vunpack.c.l.b16 %v197
    %v669 = vunpack.c.l.b16 %v198
    %v670 = vunpack.c.l.b16 %v199
    %v671 = vunpack.c.l.b16 %v200
    %v672 = vunpack.c.l.b16 %v201
    %v673 = vunpack.c.l.b16 %v202
    %v674 = vunpack.c.l.b16 %v203
    %v675 = vunpack.c.l.b16 %v204
    %v676 = vunpack.c.l.b16 %v205
    %v677 = vunpack.c.l.b16 %v206
    %v678 = vunpack.c.l.b16 %v207
    %v679 = vunpack.c.l.b16 %v208
    %v680 = vunpack.c.l.b16 %v209
    %v681 = vunpack.c.l.b16 %v210
    %v682 = vunpack.c.l.b16 %v211
    %v683 = vunpack.c.l.b16 %v212
    %v684 = vunpack.c.l.b16 %v213
    %v685 = vunpack.c.l.b16 %v214
    %v686 = vunpack.c.l.b16 %v215
    %v687 = vunpack.c.l.b16 %v216
    %v688 = vunpack.c.l.b16 %v217
    %v689 = vunpack.c.l.b16 %v218
    %v690 = vunpack.c.l.b16 %v219
    %v691 = vunpack.c.l.b16 %v220
    %v692 = vunpack.c.l.b16 %v221
    %v693 = vunpack.c.l.b16 %v222
    %v694 = vunpack.c.l.b16 %v223
    %v695 = vunpack.c.l.b16 %v224
    %v696 = vunpack.c.l.b16 %v225
    %v697 = vunpack.c.l.b16 %v226
    %v698 = vunpack.c.l.b16 %v227
    %v699 = vunpack.c.l.b16 %v228
    %v700 = vunpack.c.l.b16 %v229
    %v701 = vunpack.c.l.b16 %v230
    %v702 = vunpack.c.l.b16 %v231
    %v703 = vunpack.c.l.b16 %v232
    %v704 = vunpack.c.l.b16 %v233
    %v705 = vunpack.c.l.b16 %v234
    %v706 = vunpack.c.l.b16 %v235
    %v707 = vunpack.c.l.b16 %v236
    %v708 = vunpack.c.l.b16 %v237
    %v709 = vunpack.c.l.b16 %v238
    %v710 = vunpack.c.l.b16 %v239
    %v711 = vunpack.c.l.b16 %v240
    %v712 = vunpack.c.l.b16 %v241
    %v713 = vunpack.c.l.b16 %v242
    %v714 = vunpack.c.l.b16 %v243
    %v715 = vunpack.c.l.b16 %v244
    %v716 = vunpack.c.l.b16 %v245
    %v717 = vunpack.c.l.b16 %v246
    %v718 = vunpack.c.l.b16 %v247
    %v719 = vunpack.c.l.b16 %v248
    %v720 = vunpack.c.l.b16 %v249
    %v721 = vunpack.c.l.b16 %v250
    %v722 = vunpack.c.l.b16 %v251
    %v723 = vunpack.c.l.b16 %v252
    %v724 = vunpack.c.l.b16 %v253
    %v725 = vunpack.c.l.b16 %v254
    %v726 = vunpack.c.l.b16 %v255
    %v727 = vunpack.c.l.b16 %v256
    %v728 = vunpack.c.l.b16 %v257
    %v729 = vunpack.c.l.b16 %v258
    %v730 = vunpack.c.l.b16 %v259
    %v731 = vunpack.c.l.b16 %v260
    %v732 = vunpack.c.l.b16 %v261
    %v733 = vunpack.c.l.b16 %v262
    %v734 = vunpack.c.l.b16 %v263
    %v735 = vpack.c.b16 %v512, %v511
    %v736 = vpack.c.b16 %v514, %v513
    %v737 = vpack.c.b16 %v516, %v515
    %v738 = vpack.c.b16 %v518, %v517
    %v739 = vpack.c.b16 %v520, %v519
    %v740 = vpack.c.b16 %v522, %v521
    %v741 = vpack.c.b16 %v524, %v523
    %v742 = vpack.c.b16 %v526, %v525
    %v743 = vpack.c.b16 %v528, %v527
    %v744 = vpack.c.b16 %v530, %v529
    %v745 = vpack.c.b16 %v532, %v531
    %v746 = vpack.c.b16 %v534, %v533
    %v747 = vpack.c.b16 %v536, %v535
    %v748 = vpack.c.b16 %v538, %v537
    %v749 = vpack.c.b16 %v540, %v539
    %v750 = vpack.c.b16 %v542, %v541
    %v751 = vpack.c.b16 %v544, %v543
    %v752 = vpack.c.b16 %v546, %v545
    %v753 = vpack.c.b16 %v548, %v547
    %v754 = vpack.c.b16 %v550, %v549
    %v755 = vpack.c.b16 %v552, %v551
    %v756 = vpack.c.b16 %v554, %v553
    %v757 = vpack.c.b16 %v556, %v555
    %v758 = vpack.c.b16 %v558, %v557
    %v759 = vpack.c.b16 %v560, %v559
    %v760 = vpack.c.b16 %v562, %v561
    %v761 = vpack.c.b16 %v564, %v563
    %v762 = vpack.c.b16 %v566, %v565
    %v763 = vpack.c.b16 %v568, %v567
    %v764 = vpack.c.b16 %v570, %v569
    %v765 = vpack.c.b16 %v572, %v571
    %v766 = vpack.c.b16 %v574, %v573
    %v767 = vpack.c.b16 %v576, %v575
    %v768 = vpack.c.b16 %v578, %v577
    %v769 = vpack.c.b16 %v580, %v579
    %v770 = vpack.c.b16 %v582, %v581
    %v771 = vpack.c.b16 %v584, %v583
    %v772 = vpack.c.b16 %v586, %v585
    %v773 = vpack.c.b16 %v588, %v587
    %v774 = vpack.c.b16 %v590, %v589
    %v775 = vpack.c.b16 %v592, %v591
    %v776 = vpack.c.b16 %v594, %v593
    %v777 = vpack.c.b16 %v596, %v595
    %v778 = vpack.c.b16 %v598, %v597
    %v779 = vpack.c.b16 %v600, %v599
    %v780 = vpack.c.b16 %v602, %v601
    %v781 = vpack.c.b16 %v604, %v603
    %v782 = vpack.c.b16 %v606, %v605
    %v783 = vpack.c.b16 %v608, %v607
    %v784 = vpack.c.b16 %v610, %v609
    %v785 = vpack.c.b16 %v612, %v611
    %v786 = vpack.c.b16 %v614, %v613
    %v787 = vpack.c.b16 %v616, %v615
    %v788 = vpack.c.b16 %v618, %v617
    %v789 = vpack.c.b16 %v620, %v619
    %v790 = vpack.c.b16 %v622, %v621
    %v791 = vpack.c.b16 %v624, %v623
    %v792 = vpack.c.b16 %v626, %v625
    %v793 = vpack.c.b16 %v628, %v627
    %v794 = vpack.c.b16 %v630, %v629
    %v795 = vpack.c.b16 %v632, %v631
    %v796 = vpack.c.b16 %v634, %v633
    %v797 = vpack.c.b16 %v636, %v635
    %v798 = vpack.c.b16 %v638, %v637
    %v799 = vpack.c.b16 %v640, %v639
    %v800 = vpack.c.b16 %v642, %v641
    %v801 = vpack.c.b16 %v644, %v643
    %v802 = vpack.c.b16 %v646, %v645
    %v803 = vpack.c.b16 %v648, %v647
    %v804 = vpack.c.b16 %v650, %v649
    %v805 = vpack.c.b16 %v652, %v651
    %v806 = vpack.c.b16 %v654, %v653
    %v807 = vpack.c.b16 %v656, %v655
    %v808 = vpack.c.b16 %v658, %v657
    %v809 = vpack.c.b16 %v660, %v659
    %v810 = vpack.c.b16 %v662, %v661
    %v811 = vpack.c.b16 %v664, %v663
    %v812 = vpack.c.b16 %v666, %v665
    %v813 = vpack.c.b16 %v668, %v667
    %v814 = vpack.c.b16 %v670, %v669
    %v815 = vpack.c.b16 %v672, %v671
    %v816 = vpack.c.b16 %v674, %v673
    %v817 = vpack.c.b16 %v676, %v675
    %v818 = vpack.c.b16 %v678, %v677
    %v819 = vpack.c.b16 %v680, %v679
    %v820 = vpack.c.b16 %v682, %v681
    %v821 = vpack.c.b16 %v684, %v683
    %v822 = vpack.c.b16 %v686, %v685
    %v823 = vpack.c.b16 %v688, %v687
    %v824 = vpack.c.b16 %v690, %v689
    %v825 = vpack.c.b16 %v692, %v691
    %v826 = vpack.c.b16 %v694, %v693
    %v827 = vpack.c.b16 %v696, %v695
    %v828 = vpack.c.b16 %v698, %v697
    %v829 = vpack.c.b16 %v700, %v699
    %v830 = vpack.c.b16 %v702, %v701
    %v831 = vpack.c.b16 %v704, %v703
    %v832 = vpack.c.b16 %v706, %v705
    %v833 = vpack.c.b16 %v708, %v707
    %v834 = vpack.c.b16 %v710, %v709
    %v835 = vpack.c.b16 %v712, %v711
    %v836 = vpack.c.b16 %v714, %v713
    %v837 = vpack.c.b16 %v716, %v715
    %v838 = vpack.c.b16 %v718, %v717
    %v839 = vpack.c.b16 %v720, %v719
    %v840 = vpack.c.b16 %v722, %v721
    %v841 = vpack.c.b16 %v724, %v723
    %v842 = vpack.c.b16 %v726, %v725
    %v843 = vpack.c.b16 %v728, %v727
    %v844 = vpack.c.b16 %v730, %v729
    %v845 = vpack.c.b16 %v732, %v731
    %v846 = vpack.c.b16 %v734, %v733
    %v975 = vunpack.c.l.b16 %v264
    %v976 = vunpack.c.l.b16 %v265
    %v977 = vunpack.c.l.b16 %v266
    %v978 = vunpack.c.l.b16 %v267
    %v979 = vunpack.c.l.b16 %v268
    %v980 = vunpack.c.l.b16 %v269
    %v981 = vunpack.c.l.b16 %v270
    %v982 = vunpack.c.l.b16 %v271
    %v983 = vunpack.c.l.b16 %v272
    %v984 = vunpack.c.l.b16 %v273
    %v985 = vunpack.c.l.b16 %v274
    %v986 = vunpack.c.l.b16 %v275
    %v987 = vunpack.c.l.b16 %v276
    %v988 = vunpack.c.l.b16 %v277
    %v989 = vunpack.c.l.b16 %v278
    %v990 = vunpack.c.l.b16 %v279
    %v991 = vpack.c.b16 %v976, %v975
    %v992 = vpack.c.b16 %v978, %v977
    %v993 = vpack.c.b16 %v980, %v979
    %v994 = vpack.c.b16 %v982, %v981
    %v995 = vpack.c.b16 %v984, %v983
    %v996 = vpack.c.b16 %v986, %v985
    %v997 = vpack.c.b16 %v988, %v987
    %v998 = vpack.c.b16 %v990, %v989
    %1007 = vmatprep.subr.bf16.mxu0 0
    %1008 = vmatpush1.bf16.msra.mxu0 %v991
    %1009 = vmatprep.subr.bf16.mxu0 0
    %1010 = vmatpush1.bf16.msra.mxu0 %v992
    %1011 = vmatprep.subr.bf16.mxu0 0
    %1012 = vmatpush1.bf16.msra.mxu0 %v993
    %1013 = vmatprep.subr.bf16.mxu0 0
    %1014 = vmatpush1.bf16.msra.mxu0 %v994
    %1015 = vmatprep.subr.bf16.mxu0 0
    %1016 = vmatpush1.bf16.msra.mxu0 %v995
    %1017 = vmatprep.subr.bf16.mxu0 0
    %1018 = vmatpush1.bf16.msra.mxu0 %v996
    %1019 = vmatprep.subr.bf16.mxu0 0
    %1020 = vmatpush1.bf16.msra.mxu0 %v997
    %1021 = vmatprep.subr.bf16.mxu0 0
    %1022 = vmatpush1.bf16.msra.mxu0 %v998
    %1023 = vmatprep.subr.bf16.mxu0 0
    %1024 = vmatpush1.bf16.msra.mxu0 0
    %1025 = vmatprep.subr.bf16.mxu0 0
    %1026 = vmatpush1.bf16.msra.mxu0 0
    %1027 = vmatprep.subr.bf16.mxu0 0
    %1028 = vmatpush1.bf16.msra.mxu0 0
    %1029 = vmatprep.subr.bf16.mxu0 0
    %1030 = vmatpush1.bf16.msra.mxu0 0
    %1031 = vmatprep.subr.bf16.mxu0 0
    %1032 = vmatpush1.bf16.msra.mxu0 0
    %1033 = vmatprep.subr.bf16.mxu0 0
    %1034 = vmatpush1.bf16.msra.mxu0 0
    %1035 = vmatprep.subr.bf16.mxu0 0
    %1036 = vmatpush1.bf16.msra.mxu0 0
    %1037 = vmatprep.subr.bf16.mxu0 0
    %1038 = vmatpush1.bf16.msra.mxu0 0
    %1039 = vmatprep.mubr.bf16.mxu0 0
    %1040 = vmatmul.mubr.bf16.gmra.mrb[0].mxu0 %v735
    %v1041 = vpop.f32.mrb[0].mxu0
    %v1042 = vadd.f32 %v285, %v1041
    %v1043 = vpop.f32.mrb[0].mxu0
    %v1044 = vpop.f32.mrb[0].mxu0
    %v1045 = vadd.f32 %v285, %v1044
    %v1046 = vpop.f32.mrb[0].mxu0
    %1047 = vmatprep.mubr.bf16.mxu0 0
    %1048 = vmatmul.mubr.bf16.gmra.mrb[0].mxu0 %v736
    %v1049 = vpop.f32.mrb[0].mxu0
    %v1050 = vadd.f32 %v285, %v1049
    %v1051 = vpop.f32.mrb[0].mxu0
    %v1052 = vpop.f32.mrb[0].mxu0
    %v1053 = vadd.f32 %v285, %v1052
    %v1054 = vpop.f32.mrb[0].mxu0
    %1055 = vmatprep.mubr.bf16.mxu0 0
    %1056 = vmatmul.mubr.bf16.gmra.mrb[0].mxu0 %v737
    %v1057 = vpop.f32.mrb[0].mxu0
    %v1058 = vadd.f32 %v285, %v1057
    %v1059 = vpop.f32.mrb[0].mxu0
    %v1060 = vpop.f32.mrb[0].mxu0
    %v1061 = vadd.f32 %v285, %v1060
    %v1062 = vpop.f32.mrb[0].mxu0
    %1063 = vmatprep.mubr.bf16.mxu0 0
    %1064 = vmatmul.mubr.bf16.gmra.mrb[0].mxu0 %v738
    %v1065 = vpop.f32.mrb[0].mxu0
    %v1066 = vadd.f32 %v285, %v1065
    %v1067 = vpop.f32.mrb[0].mxu0
    %v1068 = vpop.f32.mrb[0].mxu0
    %v1069 = vadd.f32 %v285, %v1068
    %v1070 = vpop.f32.mrb[0].mxu0
    %1071 = vmatprep.mubr.bf16.mxu0 0
    %1072 = vmatmul.mubr.bf16.gmra.mrb[0].mxu0 %v739
    %v1073 = vpop.f32.mrb[0].mxu0
    %v1074 = vadd.f32 %v285, %v1073
    %v1075 = vpop.f32.mrb[0].mxu0
    %v1076 = vpop.f32.mrb[0].mxu0
    %v1077 = vadd.f32 %v285, %v1076
    %v1078 = vpop.f32.mrb[0].mxu0
    %1079 = vmatprep.mubr.bf16.mxu0 0
    %1080 = vmatmul.mubr.bf16.gmra.mrb[0].mxu0 %v740
    %v1081 = vpop.f32.mrb[0].mxu0
    %v1082 = vadd.f32 %v285, %v1081
    %v1083 = vpop.f32.mrb[0].mxu0
    %v1084 = vpop.f32.mrb[0].mxu0
    %v1085 = vadd.f32 %v285, %v1084
    %v1086 = vpop.f32.mrb[0].mxu0
    %1087 = vmatprep.mubr.bf16.mxu0 0
    %1088 = vmatmul.mubr.bf16.gmra.mrb[0].mxu0 %v741
    %v1089 = vpop.f32.mrb[0].mxu0
    %v1090 = vadd.f32 %v285, %v1089
    %v1091 = vpop.f32.mrb[0].mxu0
    %v1092 = vpop.f32.mrb[0].mxu0
    %v1093 = vadd.f32 %v285, %v1092
    %v1094 = vpop.f32.mrb[0].mxu0
    %1095 = vmatprep.mubr.bf16.mxu0 0
    %1096 = vmatmul.mubr.bf16.gmra.mrb[0].mxu0 %v742
    %v1097 = vpop.f32.mrb[0].mxu0
    %v1098 = vadd.f32 %v285, %v1097
    %v1099 = vpop.f32.mrb[0].mxu0
    %v1100 = vpop.f32.mrb[0].mxu0
    %v1101 = vadd.f32 %v285, %v1100
    %v1102 = vpop.f32.mrb[0].mxu0
    %1103 = vmatprep.mubr.bf16.mxu0 0
    %1104 = vmatmul.mubr.bf16.gmra.mrb[0].mxu0 %v743
    %v1105 = vpop.f32.mrb[0].mxu0
    %v1106 = vadd.f32 %v285, %v1105
    %v1107 = vpop.f32.mrb[0].mxu0
    %v1108 = vpop.f32.mrb[0].mxu0
    %v1109 = vadd.f32 %v285, %v1108
    %v1110 = vpop.f32.mrb[0].mxu0
    %1111 = vmatprep.mubr.bf16.mxu0 0
    %1112 = vmatmul.mubr.bf16.gmra.mrb[0].mxu0 %v744
    %v1113 = vpop.f32.mrb[0].mxu0
    %v1114 = vadd.f32 %v285, %v1113
    %v1115 = vpop.f32.mrb[0].mxu0
    %v1116 = vpop.f32.mrb[0].mxu0
    %v1117 = vadd.f32 %v285, %v1116
    %v1118 = vpop.f32.mrb[0].mxu0
    %1119 = vmatprep.mubr.bf16.mxu0 0
    %1120 = vmatmul.mubr.bf16.gmra.mrb[0].mxu0 %v745
    %v1121 = vpop.f32.mrb[0].mxu0
    %v1122 = vadd.f32 %v285, %v1121
    %v1123 = vpop.f32.mrb[0].mxu0
    %v1124 = vpop.f32.mrb[0].mxu0
    %v1125 = vadd.f32 %v285, %v1124
    %v1126 = vpop.f32.mrb[0].mxu0
    %1127 = vmatprep.mubr.bf16.mxu0 0
    %1128 = vmatmul.mubr.bf16.gmra.mrb[0].mxu0 %v746
    %v1129 = vpop.f32.mrb[0].mxu0
    %v1130 = vadd.f32 %v285, %v1129
    %v1131 = vpop.f32.mrb[0].mxu0
    %v1132 = vpop.f32.mrb[0].mxu0
    %v1133 = vadd.f32 %v285, %v1132
    %v1134 = vpop.f32.mrb[0].mxu0
    %1135 = vmatprep.mubr.bf16.mxu0 0
    %1136 = vmatmul.mubr.bf16.gmra.mrb[0].mxu0 %v747
    %v1137 = vpop.f32.mrb[0].mxu0
    %v1138 = vadd.f32 %v285, %v1137
    %v1139 = vpop.f32.mrb[0].mxu0
    %v1140 = vpop.f32.mrb[0].mxu0
    %v1141 = vadd.f32 %v285, %v1140
    %v1142 = vpop.f32.mrb[0].mxu0
    %1143 = vmatprep.mubr.bf16.mxu0 0
    %1144 = vmatmul.mubr.bf16.gmra.mrb[0].mxu0 %v748
    %v1145 = vpop.f32.mrb[0].mxu0
    %v1146 = vadd.f32 %v285, %v1145
    %v1147 = vpop.f32.mrb[0].mxu0
    %v1148 = vpop.f32.mrb[0].mxu0
    %v1149 = vadd.f32 %v285, %v1148
    %v1150 = vpop.f32.mrb[0].mxu0
    %1151 = vmatprep.mubr.bf16.mxu0 0
    %1152 = vmatmul.mubr.bf16.gmra.mrb[0].mxu0 %v749
    %v1153 = vpop.f32.mrb[0].mxu0
    %v1154 = vadd.f32 %v285, %v1153
    %v1155 = vpop.f32.mrb[0].mxu0
    %v1156 = vpop.f32.mrb[0].mxu0
    %v1157 = vadd.f32 %v285, %v1156
    %v1158 = vpop.f32.mrb[0].mxu0
    %1159 = vmatprep.mubr.bf16.mxu0 0
    %1160 = vmatmul.mubr.bf16.gmra.mrb[0].mxu0 %v750
    %v1161 = vpop.f32.mrb[0].mxu0
    %v1162 = vadd.f32 %v285, %v1161
    %v1163 = vpop.f32.mrb[0].mxu0
    %v1164 = vpop.f32.mrb[0].mxu0
    %v1165 = vadd.f32 %v285, %v1164
    %v1166 = vpop.f32.mrb[0].mxu0
    %1167 = vmatprep.mubr.bf16.mxu0 0
    %1168 = vmatmul.mubr.bf16.gmra.mrb[0].mxu0 %v751
    %v1169 = vpop.f32.mrb[0].mxu0
    %v1170 = vadd.f32 %v285, %v1169
    %v1171 = vpop.f32.mrb[0].mxu0
    %v1172 = vpop.f32.mrb[0].mxu0
    %v1173 = vadd.f32 %v285, %v1172
    %v1174 = vpop.f32.mrb[0].mxu0
    %1175 = vmatprep.mubr.bf16.mxu0 0
    %1176 = vmatmul.mubr.bf16.gmra.mrb[0].mxu0 %v752
    %v1177 = vpop.f32.mrb[0].mxu0
    %v1178 = vadd.f32 %v285, %v1177
    %v1179 = vpop.f32.mrb[0].mxu0
    %v1180 = vpop.f32.mrb[0].mxu0
    %v1181 = vadd.f32 %v285, %v1180
    %v1182 = vpop.f32.mrb[0].mxu0
    %1183 = vmatprep.mubr.bf16.mxu0 0
    %1184 = vmatmul.mubr.bf16.gmra.mrb[0].mxu0 %v753
    %v1185 = vpop.f32.mrb[0].mxu0
    %v1186 = vadd.f32 %v285, %v1185
    %v1187 = vpop.f32.mrb[0].mxu0
    %v1188 = vpop.f32.mrb[0].mxu0
    %v1189 = vadd.f32 %v285, %v1188
    %v1190 = vpop.f32.mrb[0].mxu0
    %1191 = vmatprep.mubr.bf16.mxu0 0
    %1192 = vmatmul.mubr.bf16.gmra.mrb[0].mxu0 %v754
    %v1193 = vpop.f32.mrb[0].mxu0
    %v1194 = vadd.f32 %v285, %v1193
    %v1195 = vpop.f32.mrb[0].mxu0
    %v1196 = vpop.f32.mrb[0].mxu0
    %v1197 = vadd.f32 %v285, %v1196
    %v1198 = vpop.f32.mrb[0].mxu0
    %1199 = vmatprep.mubr.bf16.mxu0 0
    %1200 = vmatmul.mubr.bf16.gmra.mrb[0].mxu0 %v755
    %v1201 = vpop.f32.mrb[0].mxu0
    %v1202 = vadd.f32 %v285, %v1201
    %v1203 = vpop.f32.mrb[0].mxu0
    %v1204 = vpop.f32.mrb[0].mxu0
    %v1205 = vadd.f32 %v285, %v1204
    %v1206 = vpop.f32.mrb[0].mxu0
    %1207 = vmatprep.mubr.bf16.mxu0 0
    %1208 = vmatmul.mubr.bf16.gmra.mrb[0].mxu0 %v756
    %v1209 = vpop.f32.mrb[0].mxu0
    %v1210 = vadd.f32 %v285, %v1209
    %v1211 = vpop.f32.mrb[0].mxu0
    %v1212 = vpop.f32.mrb[0].mxu0
    %v1213 = vadd.f32 %v285, %v1212
    %v1214 = vpop.f32.mrb[0].mxu0
    %1215 = vmatprep.mubr.bf16.mxu0 0
    %1216 = vmatmul.mubr.bf16.gmra.mrb[0].mxu0 %v757
    %v1217 = vpop.f32.mrb[0].mxu0
    %v1218 = vadd.f32 %v285, %v1217
    %v1219 = vpop.f32.mrb[0].mxu0
    %v1220 = vpop.f32.mrb[0].mxu0
    %v1221 = vadd.f32 %v285, %v1220
    %v1222 = vpop.f32.mrb[0].mxu0
    %1223 = vmatprep.mubr.bf16.mxu0 0
    %1224 = vmatmul.mubr.bf16.gmra.mrb[0].mxu0 %v758
    %v1225 = vpop.f32.mrb[0].mxu0
    %v1226 = vadd.f32 %v285, %v1225
    %v1227 = vpop.f32.mrb[0].mxu0
    %v1228 = vpop.f32.mrb[0].mxu0
    %v1229 = vadd.f32 %v285, %v1228
    %v1230 = vpop.f32.mrb[0].mxu0
    %1231 = vmatprep.mubr.bf16.mxu0 0
    %1232 = vmatmul.mubr.bf16.gmra.mrb[0].mxu0 %v759
    %v1233 = vpop.f32.mrb[0].mxu0
    %v1234 = vadd.f32 %v285, %v1233
    %v1235 = vpop.f32.mrb[0].mxu0
    %v1236 = vpop.f32.mrb[0].mxu0
    %v1237 = vadd.f32 %v285, %v1236
    %v1238 = vpop.f32.mrb[0].mxu0
    %1239 = vmatprep.mubr.bf16.mxu0 0
    %1240 = vmatmul.mubr.bf16.gmra.mrb[0].mxu0 %v760
    %v1241 = vpop.f32.mrb[0].mxu0
    %v1242 = vadd.f32 %v285, %v1241
    %v1243 = vpop.f32.mrb[0].mxu0
    %v1244 = vpop.f32.mrb[0].mxu0
    %v1245 = vadd.f32 %v285, %v1244
    %v1246 = vpop.f32.mrb[0].mxu0
    %1247 = vmatprep.mubr.bf16.mxu0 0
    %1248 = vmatmul.mubr.bf16.gmra.mrb[0].mxu0 %v761
    %v1249 = vpop.f32.mrb[0].mxu0
    %v1250 = vadd.f32 %v285, %v1249
    %v1251 = vpop.f32.mrb[0].mxu0
    %v1252 = vpop.f32.mrb[0].mxu0
    %v1253 = vadd.f32 %v285, %v1252
    %v1254 = vpop.f32.mrb[0].mxu0
    %1255 = vmatprep.mubr.bf16.mxu0 0
    %1256 = vmatmul.mubr.bf16.gmra.mrb[0].mxu0 %v762
    %v1257 = vpop.f32.mrb[0].mxu0
    %v1258 = vadd.f32 %v285, %v1257
    %v1259 = vpop.f32.mrb[0].mxu0
    %v1260 = vpop.f32.mrb[0].mxu0
    %v1261 = vadd.f32 %v285, %v1260
    %v1262 = vpop.f32.mrb[0].mxu0
    %1263 = vmatprep.mubr.bf16.mxu0 0
    %1264 = vmatmul.mubr.bf16.gmra.mrb[0].mxu0 %v763
    %v1265 = vpop.f32.mrb[0].mxu0
    %v1266 = vadd.f32 %v285, %v1265
    %v1267 = vpop.f32.mrb[0].mxu0
    %v1268 = vpop.f32.mrb[0].mxu0
    %v1269 = vadd.f32 %v285, %v1268
    %v1270 = vpop.f32.mrb[0].mxu0
    %1271 = vmatprep.mubr.bf16.mxu0 0
    %1272 = vmatmul.mubr.bf16.gmra.mrb[0].mxu0 %v764
    %v1273 = vpop.f32.mrb[0].mxu0
    %v1274 = vadd.f32 %v285, %v1273
    %v1275 = vpop.f32.mrb[0].mxu0
    %v1276 = vpop.f32.mrb[0].mxu0
    %v1277 = vadd.f32 %v285, %v1276
    %v1278 = vpop.f32.mrb[0].mxu0
    %1279 = vmatprep.mubr.bf16.mxu0 0
    %1280 = vmatmul.mubr.bf16.gmra.mrb[0].mxu0 %v765
    %v1281 = vpop.f32.mrb[0].mxu0
    %v1282 = vadd.f32 %v285, %v1281
    %v1283 = vpop.f32.mrb[0].mxu0
    %v1284 = vpop.f32.mrb[0].mxu0
    %v1285 = vadd.f32 %v285, %v1284
    %v1286 = vpop.f32.mrb[0].mxu0
    %1287 = vmatprep.mubr.bf16.mxu0 0
    %1288 = vmatmul.mubr.bf16.gmra.mrb[0].mxu0 %v766
    %v1289 = vpop.f32.mrb[0].mxu0
    %v1290 = vadd.f32 %v285, %v1289
    %v1291 = vpop.f32.mrb[0].mxu0
    %v1292 = vpop.f32.mrb[0].mxu0
    %v1293 = vadd.f32 %v285, %v1292
    %v1294 = vpop.f32.mrb[0].mxu0
    %1295 = vmatprep.mubr.bf16.mxu0 0
    %1296 = vmatmul.mubr.bf16.gmra.mrb[0].mxu0 %v767
    %v1297 = vpop.f32.mrb[0].mxu0
    %v1298 = vadd.f32 %v285, %v1297
    %v1299 = vpop.f32.mrb[0].mxu0
    %v1300 = vpop.f32.mrb[0].mxu0
    %v1301 = vadd.f32 %v285, %v1300
    %v1302 = vpop.f32.mrb[0].mxu0
    %1303 = vmatprep.mubr.bf16.mxu0 0
    %1304 = vmatmul.mubr.bf16.gmra.mrb[0].mxu0 %v768
    %v1305 = vpop.f32.mrb[0].mxu0
    %v1306 = vadd.f32 %v285, %v1305
    %v1307 = vpop.f32.mrb[0].mxu0
    %v1308 = vpop.f32.mrb[0].mxu0
    %v1309 = vadd.f32 %v285, %v1308
    %v1310 = vpop.f32.mrb[0].mxu0
    %1311 = vmatprep.mubr.bf16.mxu0 0
    %1312 = vmatmul.mubr.bf16.gmra.mrb[0].mxu0 %v769
    %v1313 = vpop.f32.mrb[0].mxu0
    %v1314 = vadd.f32 %v285, %v1313
    %v1315 = vpop.f32.mrb[0].mxu0
    %v1316 = vpop.f32.mrb[0].mxu0
    %v1317 = vadd.f32 %v285, %v1316
    %v1318 = vpop.f32.mrb[0].mxu0
    %1319 = vmatprep.mubr.bf16.mxu0 0
    %1320 = vmatmul.mubr.bf16.gmra.mrb[0].mxu0 %v770
    %v1321 = vpop.f32.mrb[0].mxu0
    %v1322 = vadd.f32 %v285, %v1321
    %v1323 = vpop.f32.mrb[0].mxu0
    %v1324 = vpop.f32.mrb[0].mxu0
    %v1325 = vadd.f32 %v285, %v1324
    %v1326 = vpop.f32.mrb[0].mxu0
    %1327 = vmatprep.mubr.bf16.mxu0 0
    %1328 = vmatmul.mubr.bf16.gmra.mrb[0].mxu0 %v771
    %v1329 = vpop.f32.mrb[0].mxu0
    %v1330 = vadd.f32 %v285, %v1329
    %v1331 = vpop.f32.mrb[0].mxu0
    %v1332 = vpop.f32.mrb[0].mxu0
    %v1333 = vadd.f32 %v285, %v1332
    %v1334 = vpop.f32.mrb[0].mxu0
    %1335 = vmatprep.mubr.bf16.mxu0 0
    %1336 = vmatmul.mubr.bf16.gmra.mrb[0].mxu0 %v772
    %v1337 = vpop.f32.mrb[0].mxu0
    %v1338 = vadd.f32 %v285, %v1337
    %v1339 = vpop.f32.mrb[0].mxu0
    %v1340 = vpop.f32.mrb[0].mxu0
    %v1341 = vadd.f32 %v285, %v1340
    %v1342 = vpop.f32.mrb[0].mxu0
    %1343 = vmatprep.mubr.bf16.mxu0 0
    %1344 = vmatmul.mubr.bf16.gmra.mrb[0].mxu0 %v773
    %v1345 = vpop.f32.mrb[0].mxu0
    %v1346 = vadd.f32 %v285, %v1345
    %v1347 = vpop.f32.mrb[0].mxu0
    %v1348 = vpop.f32.mrb[0].mxu0
    %v1349 = vadd.f32 %v285, %v1348
    %v1350 = vpop.f32.mrb[0].mxu0
    %1351 = vmatprep.mubr.bf16.mxu0 0
    %1352 = vmatmul.mubr.bf16.gmra.mrb[0].mxu0 %v774
    %v1353 = vpop.f32.mrb[0].mxu0
    %v1354 = vadd.f32 %v285, %v1353
    %v1355 = vpop.f32.mrb[0].mxu0
    %v1356 = vpop.f32.mrb[0].mxu0
    %v1357 = vadd.f32 %v285, %v1356
    %v1358 = vpop.f32.mrb[0].mxu0
    %1359 = vmatprep.mubr.bf16.mxu0 0
    %1360 = vmatmul.mubr.bf16.gmra.mrb[0].mxu0 %v775
    %v1361 = vpop.f32.mrb[0].mxu0
    %v1362 = vadd.f32 %v285, %v1361
    %v1363 = vpop.f32.mrb[0].mxu0
    %v1364 = vpop.f32.mrb[0].mxu0
    %v1365 = vadd.f32 %v285, %v1364
    %v1366 = vpop.f32.mrb[0].mxu0
    %1367 = vmatprep.mubr.bf16.mxu0 0
    %1368 = vmatmul.mubr.bf16.gmra.mrb[0].mxu0 %v776
    %v1369 = vpop.f32.mrb[0].mxu0
    %v1370 = vadd.f32 %v285, %v1369
    %v1371 = vpop.f32.mrb[0].mxu0
    %v1372 = vpop.f32.mrb[0].mxu0
    %v1373 = vadd.f32 %v285, %v1372
    %v1374 = vpop.f32.mrb[0].mxu0
    %1375 = vmatprep.mubr.bf16.mxu0 0
    %1376 = vmatmul.mubr.bf16.gmra.mrb[0].mxu0 %v777
    %v1377 = vpop.f32.mrb[0].mxu0
    %v1378 = vadd.f32 %v285, %v1377
    %v1379 = vpop.f32.mrb[0].mxu0
    %v1380 = vpop.f32.mrb[0].mxu0
    %v1381 = vadd.f32 %v285, %v1380
    %v1382 = vpop.f32.mrb[0].mxu0
    %1383 = vmatprep.mubr.bf16.mxu0 0
    %1384 = vmatmul.mubr.bf16.gmra.mrb[0].mxu0 %v778
    %v1385 = vpop.f32.mrb[0].mxu0
    %v1386 = vadd.f32 %v285, %v1385
    %v1387 = vpop.f32.mrb[0].mxu0
    %v1388 = vpop.f32.mrb[0].mxu0
    %v1389 = vadd.f32 %v285, %v1388
    %v1390 = vpop.f32.mrb[0].mxu0
    %1391 = vmatprep.mubr.bf16.mxu0 0
    %1392 = vmatmul.mubr.bf16.gmra.mrb[0].mxu0 %v779
    %v1393 = vpop.f32.mrb[0].mxu0
    %v1394 = vadd.f32 %v285, %v1393
    %v1395 = vpop.f32.mrb[0].mxu0
    %v1396 = vpop.f32.mrb[0].mxu0
    %v1397 = vadd.f32 %v285, %v1396
    %v1398 = vpop.f32.mrb[0].mxu0
    %1399 = vmatprep.mubr.bf16.mxu0 0
    %1400 = vmatmul.mubr.bf16.gmra.mrb[0].mxu0 %v780
    %v1401 = vpop.f32.mrb[0].mxu0
    %v1402 = vadd.f32 %v285, %v1401
    %v1403 = vpop.f32.mrb[0].mxu0
    %v1404 = vpop.f32.mrb[0].mxu0
    %v1405 = vadd.f32 %v285, %v1404
    %v1406 = vpop.f32.mrb[0].mxu0
    %1407 = vmatprep.mubr.bf16.mxu0 0
    %1408 = vmatmul.mubr.bf16.gmra.mrb[0].mxu0 %v781
    %v1409 = vpop.f32.mrb[0].mxu0
    %v1410 = vadd.f32 %v285, %v1409
    %v1411 = vpop.f32.mrb[0].mxu0
    %v1412 = vpop.f32.mrb[0].mxu0
    %v1413 = vadd.f32 %v285, %v1412
    %v1414 = vpop.f32.mrb[0].mxu0
    %1415 = vmatprep.mubr.bf16.mxu0 0
    %1416 = vmatmul.mubr.bf16.gmra.mrb[0].mxu0 %v782
    %v1417 = vpop.f32.mrb[0].mxu0
    %v1418 = vadd.f32 %v285, %v1417
    %v1419 = vpop.f32.mrb[0].mxu0
    %v1420 = vpop.f32.mrb[0].mxu0
    %v1421 = vadd.f32 %v285, %v1420
    %v1422 = vpop.f32.mrb[0].mxu0
    %1423 = vmatprep.mubr.bf16.mxu0 0
    %1424 = vmatmul.mubr.bf16.gmra.mrb[0].mxu0 %v783
    %v1425 = vpop.f32.mrb[0].mxu0
    %v1426 = vadd.f32 %v285, %v1425
    %v1427 = vpop.f32.mrb[0].mxu0
    %v1428 = vpop.f32.mrb[0].mxu0
    %v1429 = vadd.f32 %v285, %v1428
    %v1430 = vpop.f32.mrb[0].mxu0
    %1431 = vmatprep.mubr.bf16.mxu0 0
    %1432 = vmatmul.mubr.bf16.gmra.mrb[0].mxu0 %v784
    %v1433 = vpop.f32.mrb[0].mxu0
    %v1434 = vadd.f32 %v285, %v1433
    %v1435 = vpop.f32.mrb[0].mxu0
    %v1436 = vpop.f32.mrb[0].mxu0
    %v1437 = vadd.f32 %v285, %v1436
    %v1438 = vpop.f32.mrb[0].mxu0
    %1439 = vmatprep.mubr.bf16.mxu0 0
    %1440 = vmatmul.mubr.bf16.gmra.mrb[0].mxu0 %v785
    %v1441 = vpop.f32.mrb[0].mxu0
    %v1442 = vadd.f32 %v285, %v1441
    %v1443 = vpop.f32.mrb[0].mxu0
    %v1444 = vpop.f32.mrb[0].mxu0
    %v1445 = vadd.f32 %v285, %v1444
    %v1446 = vpop.f32.mrb[0].mxu0
    %1447 = vmatprep.mubr.bf16.mxu0 0
    %1448 = vmatmul.mubr.bf16.gmra.mrb[0].mxu0 %v786
    %v1449 = vpop.f32.mrb[0].mxu0
    %v1450 = vadd.f32 %v285, %v1449
    %v1451 = vpop.f32.mrb[0].mxu0
    %v1452 = vpop.f32.mrb[0].mxu0
    %v1453 = vadd.f32 %v285, %v1452
    %v1454 = vpop.f32.mrb[0].mxu0
    %1455 = vmatprep.mubr.bf16.mxu0 0
    %1456 = vmatmul.mubr.bf16.gmra.mrb[0].mxu0 %v787
    %v1457 = vpop.f32.mrb[0].mxu0
    %v1458 = vadd.f32 %v285, %v1457
    %v1459 = vpop.f32.mrb[0].mxu0
    %v1460 = vpop.f32.mrb[0].mxu0
    %v1461 = vadd.f32 %v285, %v1460
    %v1462 = vpop.f32.mrb[0].mxu0
    %1463 = vmatprep.mubr.bf16.mxu0 0
    %1464 = vmatmul.mubr.bf16.gmra.mrb[0].mxu0 %v788
    %v1465 = vpop.f32.mrb[0].mxu0
    %v1466 = vadd.f32 %v285, %v1465
    %v1467 = vpop.f32.mrb[0].mxu0
    %v1468 = vpop.f32.mrb[0].mxu0
    %v1469 = vadd.f32 %v285, %v1468
    %v1470 = vpop.f32.mrb[0].mxu0
    %1471 = vmatprep.mubr.bf16.mxu0 0
    %1472 = vmatmul.mubr.bf16.gmra.mrb[0].mxu0 %v789
    %v1473 = vpop.f32.mrb[0].mxu0
    %v1474 = vadd.f32 %v285, %v1473
    %v1475 = vpop.f32.mrb[0].mxu0
    %v1476 = vpop.f32.mrb[0].mxu0
    %v1477 = vadd.f32 %v285, %v1476
    %v1478 = vpop.f32.mrb[0].mxu0
    %1479 = vmatprep.mubr.bf16.mxu0 0
    %1480 = vmatmul.mubr.bf16.gmra.mrb[0].mxu0 %v790
    %v1481 = vpop.f32.mrb[0].mxu0
    %v1482 = vadd.f32 %v285, %v1481
    %v1483 = vpop.f32.mrb[0].mxu0
    %v1484 = vpop.f32.mrb[0].mxu0
    %v1485 = vadd.f32 %v285, %v1484
    %v1486 = vpop.f32.mrb[0].mxu0
    %1487 = vmatprep.mubr.bf16.mxu0 0
    %1488 = vmatmul.mubr.bf16.gmra.mrb[0].mxu0 %v791
    %v1489 = vpop.f32.mrb[0].mxu0
    %v1490 = vadd.f32 %v285, %v1489
    %v1491 = vpop.f32.mrb[0].mxu0
    %v1492 = vpop.f32.mrb[0].mxu0
    %v1493 = vadd.f32 %v285, %v1492
    %v1494 = vpop.f32.mrb[0].mxu0
    %1495 = vmatprep.mubr.bf16.mxu0 0
    %1496 = vmatmul.mubr.bf16.gmra.mrb[0].mxu0 %v792
    %v1497 = vpop.f32.mrb[0].mxu0
    %v1498 = vadd.f32 %v285, %v1497
    %v1499 = vpop.f32.mrb[0].mxu0
    %v1500 = vpop.f32.mrb[0].mxu0
    %v1501 = vadd.f32 %v285, %v1500
    %v1502 = vpop.f32.mrb[0].mxu0
    %1503 = vmatprep.mubr.bf16.mxu0 0
    %1504 = vmatmul.mubr.bf16.gmra.mrb[0].mxu0 %v793
    %v1505 = vpop.f32.mrb[0].mxu0
    %v1506 = vadd.f32 %v285, %v1505
    %v1507 = vpop.f32.mrb[0].mxu0
    %v1508 = vpop.f32.mrb[0].mxu0
    %v1509 = vadd.f32 %v285, %v1508
    %v1510 = vpop.f32.mrb[0].mxu0
    %1511 = vmatprep.mubr.bf16.mxu0 0
    %1512 = vmatmul.mubr.bf16.gmra.mrb[0].mxu0 %v794
    %v1513 = vpop.f32.mrb[0].mxu0
    %v1514 = vadd.f32 %v285, %v1513
    %v1515 = vpop.f32.mrb[0].mxu0
    %v1516 = vpop.f32.mrb[0].mxu0
    %v1517 = vadd.f32 %v285, %v1516
    %v1518 = vpop.f32.mrb[0].mxu0
    %1519 = vmatprep.mubr.bf16.mxu0 0
    %1520 = vmatmul.mubr.bf16.gmra.mrb[0].mxu0 %v795
    %v1521 = vpop.f32.mrb[0].mxu0
    %v1522 = vadd.f32 %v285, %v1521
    %v1523 = vpop.f32.mrb[0].mxu0
    %v1524 = vpop.f32.mrb[0].mxu0
    %v1525 = vadd.f32 %v285, %v1524
    %v1526 = vpop.f32.mrb[0].mxu0
    %1527 = vmatprep.mubr.bf16.mxu0 0
    %1528 = vmatmul.mubr.bf16.gmra.mrb[0].mxu0 %v796
    %v1529 = vpop.f32.mrb[0].mxu0
    %v1530 = vadd.f32 %v285, %v1529
    %v1531 = vpop.f32.mrb[0].mxu0
    %v1532 = vpop.f32.mrb[0].mxu0
    %v1533 = vadd.f32 %v285, %v1532
    %v1534 = vpop.f32.mrb[0].mxu0
    %1535 = vmatprep.mubr.bf16.mxu0 0
    %1536 = vmatmul.mubr.bf16.gmra.mrb[0].mxu0 %v797
    %v1537 = vpop.f32.mrb[0].mxu0
    %v1538 = vadd.f32 %v285, %v1537
    %v1539 = vpop.f32.mrb[0].mxu0
    %v1540 = vpop.f32.mrb[0].mxu0
    %v1541 = vadd.f32 %v285, %v1540
    %v1542 = vpop.f32.mrb[0].mxu0
    %1543 = vmatprep.mubr.bf16.mxu0 0
    %1544 = vmatmul.mubr.bf16.gmra.mrb[0].mxu0 %v798
    %v1545 = vpop.f32.mrb[0].mxu0
    %v1546 = vadd.f32 %v285, %v1545
    %v1547 = vpop.f32.mrb[0].mxu0
    %v1548 = vpop.f32.mrb[0].mxu0
    %v1549 = vadd.f32 %v285, %v1548
    %v1550 = vpop.f32.mrb[0].mxu0
    %1551 = vmatprep.mubr.bf16.mxu0 0
    %1552 = vmatmul.mubr.bf16.gmra.mrb[0].mxu0 %v799
    %v1553 = vpop.f32.mrb[0].mxu0
    %v1554 = vadd.f32 %v285, %v1553
    %v1555 = vpop.f32.mrb[0].mxu0
    %v1556 = vpop.f32.mrb[0].mxu0
    %v1557 = vadd.f32 %v285, %v1556
    %v1558 = vpop.f32.mrb[0].mxu0
    %1559 = vmatprep.mubr.bf16.mxu0 0
    %1560 = vmatmul.mubr.bf16.gmra.mrb[0].mxu0 %v800
    %v1561 = vpop.f32.mrb[0].mxu0
    %v1562 = vadd.f32 %v285, %v1561
    %v1563 = vpop.f32.mrb[0].mxu0
    %v1564 = vpop.f32.mrb[0].mxu0
    %v1565 = vadd.f32 %v285, %v1564
    %v1566 = vpop.f32.mrb[0].mxu0
    %1567 = vmatprep.mubr.bf16.mxu0 0
    %1568 = vmatmul.mubr.bf16.gmra.mrb[0].mxu0 %v801
    %v1569 = vpop.f32.mrb[0].mxu0
    %v1570 = vadd.f32 %v285, %v1569
    %v1571 = vpop.f32.mrb[0].mxu0
    %v1572 = vpop.f32.mrb[0].mxu0
    %v1573 = vadd.f32 %v285, %v1572
    %v1574 = vpop.f32.mrb[0].mxu0
    %1575 = vmatprep.mubr.bf16.mxu0 0
    %1576 = vmatmul.mubr.bf16.gmra.mrb[0].mxu0 %v802
    %v1577 = vpop.f32.mrb[0].mxu0
    %v1578 = vadd.f32 %v285, %v1577
    %v1579 = vpop.f32.mrb[0].mxu0
    %v1580 = vpop.f32.mrb[0].mxu0
    %v1581 = vadd.f32 %v285, %v1580
    %v1582 = vpop.f32.mrb[0].mxu0
    %1583 = vmatprep.mubr.bf16.mxu0 0
    %1584 = vmatmul.mubr.bf16.gmra.mrb[0].mxu0 %v803
    %v1585 = vpop.f32.mrb[0].mxu0
    %v1586 = vadd.f32 %v285, %v1585
    %v1587 = vpop.f32.mrb[0].mxu0
    %v1588 = vpop.f32.mrb[0].mxu0
    %v1589 = vadd.f32 %v285, %v1588
    %v1590 = vpop.f32.mrb[0].mxu0
    %1591 = vmatprep.mubr.bf16.mxu0 0
    %1592 = vmatmul.mubr.bf16.gmra.mrb[0].mxu0 %v804
    %v1593 = vpop.f32.mrb[0].mxu0
    %v1594 = vadd.f32 %v285, %v1593
    %v1595 = vpop.f32.mrb[0].mxu0
    %v1596 = vpop.f32.mrb[0].mxu0
    %v1597 = vadd.f32 %v285, %v1596
    %v1598 = vpop.f32.mrb[0].mxu0
    %1599 = vmatprep.mubr.bf16.mxu0 0
    %1600 = vmatmul.mubr.bf16.gmra.mrb[0].mxu0 %v805
    %v1601 = vpop.f32.mrb[0].mxu0
    %v1602 = vadd.f32 %v285, %v1601
    %v1603 = vpop.f32.mrb[0].mxu0
    %v1604 = vpop.f32.mrb[0].mxu0
    %v1605 = vadd.f32 %v285, %v1604
    %v1606 = vpop.f32.mrb[0].mxu0
    %1607 = vmatprep.mubr.bf16.mxu0 0
    %1608 = vmatmul.mubr.bf16.gmra.mrb[0].mxu0 %v806
    %v1609 = vpop.f32.mrb[0].mxu0
    %v1610 = vadd.f32 %v285, %v1609
    %v1611 = vpop.f32.mrb[0].mxu0
    %v1612 = vpop.f32.mrb[0].mxu0
    %v1613 = vadd.f32 %v285, %v1612
    %v1614 = vpop.f32.mrb[0].mxu0
    %1615 = vmatprep.mubr.bf16.mxu0 0
    %1616 = vmatmul.mubr.bf16.gmra.mrb[0].mxu0 %v807
    %v1617 = vpop.f32.mrb[0].mxu0
    %v1618 = vadd.f32 %v285, %v1617
    %v1619 = vpop.f32.mrb[0].mxu0
    %v1620 = vpop.f32.mrb[0].mxu0
    %v1621 = vadd.f32 %v285, %v1620
    %v1622 = vpop.f32.mrb[0].mxu0
    %1623 = vmatprep.mubr.bf16.mxu0 0
    %1624 = vmatmul.mubr.bf16.gmra.mrb[0].mxu0 %v808
    %v1625 = vpop.f32.mrb[0].mxu0
    %v1626 = vadd.f32 %v285, %v1625
    %v1627 = vpop.f32.mrb[0].mxu0
    %v1628 = vpop.f32.mrb[0].mxu0
    %v1629 = vadd.f32 %v285, %v1628
    %v1630 = vpop.f32.mrb[0].mxu0
    %1631 = vmatprep.mubr.bf16.mxu0 0
    %1632 = vmatmul.mubr.bf16.gmra.mrb[0].mxu0 %v809
    %v1633 = vpop.f32.mrb[0].mxu0
    %v1634 = vadd.f32 %v285, %v1633
    %v1635 = vpop.f32.mrb[0].mxu0
    %v1636 = vpop.f32.mrb[0].mxu0
    %v1637 = vadd.f32 %v285, %v1636
    %v1638 = vpop.f32.mrb[0].mxu0
    %1639 = vmatprep.mubr.bf16.mxu0 0
    %1640 = vmatmul.mubr.bf16.gmra.mrb[0].mxu0 %v810
    %v1641 = vpop.f32.mrb[0].mxu0
    %v1642 = vadd.f32 %v285, %v1641
    %v1643 = vpop.f32.mrb[0].mxu0
    %v1644 = vpop.f32.mrb[0].mxu0
    %v1645 = vadd.f32 %v285, %v1644
    %v1646 = vpop.f32.mrb[0].mxu0
    %1647 = vmatprep.mubr.bf16.mxu0 0
    %1648 = vmatmul.mubr.bf16.gmra.mrb[0].mxu0 %v811
    %v1649 = vpop.f32.mrb[0].mxu0
    %v1650 = vadd.f32 %v285, %v1649
    %v1651 = vpop.f32.mrb[0].mxu0
    %v1652 = vpop.f32.mrb[0].mxu0
    %v1653 = vadd.f32 %v285, %v1652
    %v1654 = vpop.f32.mrb[0].mxu0
    %1655 = vmatprep.mubr.bf16.mxu0 0
    %1656 = vmatmul.mubr.bf16.gmra.mrb[0].mxu0 %v812
    %v1657 = vpop.f32.mrb[0].mxu0
    %v1658 = vadd.f32 %v285, %v1657
    %v1659 = vpop.f32.mrb[0].mxu0
    %v1660 = vpop.f32.mrb[0].mxu0
    %v1661 = vadd.f32 %v285, %v1660
    %v1662 = vpop.f32.mrb[0].mxu0
    %1663 = vmatprep.mubr.bf16.mxu0 0
    %1664 = vmatmul.mubr.bf16.gmra.mrb[0].mxu0 %v813
    %v1665 = vpop.f32.mrb[0].mxu0
    %v1666 = vadd.f32 %v285, %v1665
    %v1667 = vpop.f32.mrb[0].mxu0
    %v1668 = vpop.f32.mrb[0].mxu0
    %v1669 = vadd.f32 %v285, %v1668
    %v1670 = vpop.f32.mrb[0].mxu0
    %1671 = vmatprep.mubr.bf16.mxu0 0
    %1672 = vmatmul.mubr.bf16.gmra.mrb[0].mxu0 %v814
    %v1673 = vpop.f32.mrb[0].mxu0
    %v1674 = vadd.f32 %v285, %v1673
    %v1675 = vpop.f32.mrb[0].mxu0
    %v1676 = vpop.f32.mrb[0].mxu0
    %v1677 = vadd.f32 %v285, %v1676
    %v1678 = vpop.f32.mrb[0].mxu0
    %1679 = vmatprep.mubr.bf16.mxu0 0
    %1680 = vmatmul.mubr.bf16.gmra.mrb[0].mxu0 %v815
    %v1681 = vpop.f32.mrb[0].mxu0
    %v1682 = vadd.f32 %v285, %v1681
    %v1683 = vpop.f32.mrb[0].mxu0
    %v1684 = vpop.f32.mrb[0].mxu0
    %v1685 = vadd.f32 %v285, %v1684
    %v1686 = vpop.f32.mrb[0].mxu0
    %1687 = vmatprep.mubr.bf16.mxu0 0
    %1688 = vmatmul.mubr.bf16.gmra.mrb[0].mxu0 %v816
    %v1689 = vpop.f32.mrb[0].mxu0
    %v1690 = vadd.f32 %v285, %v1689
    %v1691 = vpop.f32.mrb[0].mxu0
    %v1692 = vpop.f32.mrb[0].mxu0
    %v1693 = vadd.f32 %v285, %v1692
    %v1694 = vpop.f32.mrb[0].mxu0
    %1695 = vmatprep.mubr.bf16.mxu0 0
    %1696 = vmatmul.mubr.bf16.gmra.mrb[0].mxu0 %v817
    %v1697 = vpop.f32.mrb[0].mxu0
    %v1698 = vadd.f32 %v285, %v1697
    %v1699 = vpop.f32.mrb[0].mxu0
    %v1700 = vpop.f32.mrb[0].mxu0
    %v1701 = vadd.f32 %v285, %v1700
    %v1702 = vpop.f32.mrb[0].mxu0
    %1703 = vmatprep.mubr.bf16.mxu0 0
    %1704 = vmatmul.mubr.bf16.gmra.mrb[0].mxu0 %v818
    %v1705 = vpop.f32.mrb[0].mxu0
    %v1706 = vadd.f32 %v285, %v1705
    %v1707 = vpop.f32.mrb[0].mxu0
    %v1708 = vpop.f32.mrb[0].mxu0
    %v1709 = vadd.f32 %v285, %v1708
    %v1710 = vpop.f32.mrb[0].mxu0
    %1711 = vmatprep.mubr.bf16.mxu0 0
    %1712 = vmatmul.mubr.bf16.gmra.mrb[0].mxu0 %v819
    %v1713 = vpop.f32.mrb[0].mxu0
    %v1714 = vadd.f32 %v285, %v1713
    %v1715 = vpop.f32.mrb[0].mxu0
    %v1716 = vpop.f32.mrb[0].mxu0
    %v1717 = vadd.f32 %v285, %v1716
    %v1718 = vpop.f32.mrb[0].mxu0
    %1719 = vmatprep.mubr.bf16.mxu0 0
    %1720 = vmatmul.mubr.bf16.gmra.mrb[0].mxu0 %v820
    %v1721 = vpop.f32.mrb[0].mxu0
    %v1722 = vadd.f32 %v285, %v1721
    %v1723 = vpop.f32.mrb[0].mxu0
    %v1724 = vpop.f32.mrb[0].mxu0
    %v1725 = vadd.f32 %v285, %v1724
    %v1726 = vpop.f32.mrb[0].mxu0
    %1727 = vmatprep.mubr.bf16.mxu0 0
    %1728 = vmatmul.mubr.bf16.gmra.mrb[0].mxu0 %v821
    %v1729 = vpop.f32.mrb[0].mxu0
    %v1730 = vadd.f32 %v285, %v1729
    %v1731 = vpop.f32.mrb[0].mxu0
    %v1732 = vpop.f32.mrb[0].mxu0
    %v1733 = vadd.f32 %v285, %v1732
    %v1734 = vpop.f32.mrb[0].mxu0
    %1735 = vmatprep.mubr.bf16.mxu0 0
    %1736 = vmatmul.mubr.bf16.gmra.mrb[0].mxu0 %v822
    %v1737 = vpop.f32.mrb[0].mxu0
    %v1738 = vadd.f32 %v285, %v1737
    %v1739 = vpop.f32.mrb[0].mxu0
    %v1740 = vpop.f32.mrb[0].mxu0
    %v1741 = vadd.f32 %v285, %v1740
    %v1742 = vpop.f32.mrb[0].mxu0
    %1743 = vmatprep.mubr.bf16.mxu0 0
    %1744 = vmatmul.mubr.bf16.gmra.mrb[0].mxu0 %v823
    %v1745 = vpop.f32.mrb[0].mxu0
    %v1746 = vadd.f32 %v285, %v1745
    %v1747 = vpop.f32.mrb[0].mxu0
    %v1748 = vpop.f32.mrb[0].mxu0
    %v1749 = vadd.f32 %v285, %v1748
    %v1750 = vpop.f32.mrb[0].mxu0
    %1751 = vmatprep.mubr.bf16.mxu0 0
    %1752 = vmatmul.mubr.bf16.gmra.mrb[0].mxu0 %v824
    %v1753 = vpop.f32.mrb[0].mxu0
    %v1754 = vadd.f32 %v285, %v1753
    %v1755 = vpop.f32.mrb[0].mxu0
    %v1756 = vpop.f32.mrb[0].mxu0
    %v1757 = vadd.f32 %v285, %v1756
    %v1758 = vpop.f32.mrb[0].mxu0
    %1759 = vmatprep.mubr.bf16.mxu0 0
    %1760 = vmatmul.mubr.bf16.gmra.mrb[0].mxu0 %v825
    %v1761 = vpop.f32.mrb[0].mxu0
    %v1762 = vadd.f32 %v285, %v1761
    %v1763 = vpop.f32.mrb[0].mxu0
    %v1764 = vpop.f32.mrb[0].mxu0
    %v1765 = vadd.f32 %v285, %v1764
    %v1766 = vpop.f32.mrb[0].mxu0
    %1767 = vmatprep.mubr.bf16.mxu0 0
    %1768 = vmatmul.mubr.bf16.gmra.mrb[0].mxu0 %v826
    %v1769 = vpop.f32.mrb[0].mxu0
    %v1770 = vadd.f32 %v285, %v1769
    %v1771 = vpop.f32.mrb[0].mxu0
    %v1772 = vpop.f32.mrb[0].mxu0
    %v1773 = vadd.f32 %v285, %v1772
    %v1774 = vpop.f32.mrb[0].mxu0
    %1775 = vmatprep.mubr.bf16.mxu0 0
    %1776 = vmatmul.mubr.bf16.gmra.mrb[0].mxu0 %v827
    %v1777 = vpop.f32.mrb[0].mxu0
    %v1778 = vadd.f32 %v285, %v1777
    %v1779 = vpop.f32.mrb[0].mxu0
    %v1780 = vpop.f32.mrb[0].mxu0
    %v1781 = vadd.f32 %v285, %v1780
    %v1782 = vpop.f32.mrb[0].mxu0
    %1783 = vmatprep.mubr.bf16.mxu0 0
    %1784 = vmatmul.mubr.bf16.gmra.mrb[0].mxu0 %v828
    %v1785 = vpop.f32.mrb[0].mxu0
    %v1786 = vadd.f32 %v285, %v1785
    %v1787 = vpop.f32.mrb[0].mxu0
    %v1788 = vpop.f32.mrb[0].mxu0
    %v1789 = vadd.f32 %v285, %v1788
    %v1790 = vpop.f32.mrb[0].mxu0
    %1791 = vmatprep.mubr.bf16.mxu0 0
    %1792 = vmatmul.mubr.bf16.gmra.mrb[0].mxu0 %v829
    %v1793 = vpop.f32.mrb[0].mxu0
    %v1794 = vadd.f32 %v285, %v1793
    %v1795 = vpop.f32.mrb[0].mxu0
    %v1796 = vpop.f32.mrb[0].mxu0
    %v1797 = vadd.f32 %v285, %v1796
    %v1798 = vpop.f32.mrb[0].mxu0
    %1799 = vmatprep.mubr.bf16.mxu0 0
    %1800 = vmatmul.mubr.bf16.gmra.mrb[0].mxu0 %v830
    %v1801 = vpop.f32.mrb[0].mxu0
    %v1802 = vadd.f32 %v285, %v1801
    %v1803 = vpop.f32.mrb[0].mxu0
    %v1804 = vpop.f32.mrb[0].mxu0
    %v1805 = vadd.f32 %v285, %v1804
    %v1806 = vpop.f32.mrb[0].mxu0
    %1807 = vmatprep.mubr.bf16.mxu0 0
    %1808 = vmatmul.mubr.bf16.gmra.mrb[0].mxu0 %v831
    %v1809 = vpop.f32.mrb[0].mxu0
    %v1810 = vadd.f32 %v285, %v1809
    %v1811 = vpop.f32.mrb[0].mxu0
    %v1812 = vpop.f32.mrb[0].mxu0
    %v1813 = vadd.f32 %v285, %v1812
    %v1814 = vpop.f32.mrb[0].mxu0
    %1815 = vmatprep.mubr.bf16.mxu0 0
    %1816 = vmatmul.mubr.bf16.gmra.mrb[0].mxu0 %v832
    %v1817 = vpop.f32.mrb[0].mxu0
    %v1818 = vadd.f32 %v285, %v1817
    %v1819 = vpop.f32.mrb[0].mxu0
    %v1820 = vpop.f32.mrb[0].mxu0
    %v1821 = vadd.f32 %v285, %v1820
    %v1822 = vpop.f32.mrb[0].mxu0
    %1823 = vmatprep.mubr.bf16.mxu0 0
    %1824 = vmatmul.mubr.bf16.gmra.mrb[0].mxu0 %v833
    %v1825 = vpop.f32.mrb[0].mxu0
    %v1826 = vadd.f32 %v285, %v1825
    %v1827 = vpop.f32.mrb[0].mxu0
    %v1828 = vpop.f32.mrb[0].mxu0
    %v1829 = vadd.f32 %v285, %v1828
    %v1830 = vpop.f32.mrb[0].mxu0
    %1831 = vmatprep.mubr.bf16.mxu0 0
    %1832 = vmatmul.mubr.bf16.gmra.mrb[0].mxu0 %v834
    %v1833 = vpop.f32.mrb[0].mxu0
    %v1834 = vadd.f32 %v285, %v1833
    %v1835 = vpop.f32.mrb[0].mxu0
    %v1836 = vpop.f32.mrb[0].mxu0
    %v1837 = vadd.f32 %v285, %v1836
    %v1838 = vpop.f32.mrb[0].mxu0
    %1839 = vmatprep.mubr.bf16.mxu0 0
    %1840 = vmatmul.mubr.bf16.gmra.mrb[0].mxu0 %v835
    %v1841 = vpop.f32.mrb[0].mxu0
    %v1842 = vadd.f32 %v285, %v1841
    %v1843 = vpop.f32.mrb[0].mxu0
    %v1844 = vpop.f32.mrb[0].mxu0
    %v1845 = vadd.f32 %v285, %v1844
    %v1846 = vpop.f32.mrb[0].mxu0
    %1847 = vmatprep.mubr.bf16.mxu0 0
    %1848 = vmatmul.mubr.bf16.gmra.mrb[0].mxu0 %v836
    %v1849 = vpop.f32.mrb[0].mxu0
    %v1850 = vadd.f32 %v285, %v1849
    %v1851 = vpop.f32.mrb[0].mxu0
    %v1852 = vpop.f32.mrb[0].mxu0
    %v1853 = vadd.f32 %v285, %v1852
    %v1854 = vpop.f32.mrb[0].mxu0
    %1855 = vmatprep.mubr.bf16.mxu0 0
    %1856 = vmatmul.mubr.bf16.gmra.mrb[0].mxu0 %v837
    %v1857 = vpop.f32.mrb[0].mxu0
    %v1858 = vadd.f32 %v285, %v1857
    %v1859 = vpop.f32.mrb[0].mxu0
    %v1860 = vpop.f32.mrb[0].mxu0
    %v1861 = vadd.f32 %v285, %v1860
    %v1862 = vpop.f32.mrb[0].mxu0
    %1863 = vmatprep.mubr.bf16.mxu0 0
    %1864 = vmatmul.mubr.bf16.gmra.mrb[0].mxu0 %v838
    %v1865 = vpop.f32.mrb[0].mxu0
    %v1866 = vadd.f32 %v285, %v1865
    %v1867 = vpop.f32.mrb[0].mxu0
    %v1868 = vpop.f32.mrb[0].mxu0
    %v1869 = vadd.f32 %v285, %v1868
    %v1870 = vpop.f32.mrb[0].mxu0
    %1871 = vmatprep.mubr.bf16.mxu0 0
    %1872 = vmatmul.mubr.bf16.gmra.mrb[0].mxu0 %v839
    %v1873 = vpop.f32.mrb[0].mxu0
    %v1874 = vadd.f32 %v285, %v1873
    %v1875 = vpop.f32.mrb[0].mxu0
    %v1876 = vpop.f32.mrb[0].mxu0
    %v1877 = vadd.f32 %v285, %v1876
    %v1878 = vpop.f32.mrb[0].mxu0
    %1879 = vmatprep.mubr.bf16.mxu0 0
    %1880 = vmatmul.mubr.bf16.gmra.mrb[0].mxu0 %v840
    %v1881 = vpop.f32.mrb[0].mxu0
    %v1882 = vadd.f32 %v285, %v1881
    %v1883 = vpop.f32.mrb[0].mxu0
    %v1884 = vpop.f32.mrb[0].mxu0
    %v1885 = vadd.f32 %v285, %v1884
    %v1886 = vpop.f32.mrb[0].mxu0
    %1887 = vmatprep.mubr.bf16.mxu0 0
    %1888 = vmatmul.mubr.bf16.gmra.mrb[0].mxu0 %v841
    %v1889 = vpop.f32.mrb[0].mxu0
    %v1890 = vadd.f32 %v285, %v1889
    %v1891 = vpop.f32.mrb[0].mxu0
    %v1892 = vpop.f32.mrb[0].mxu0
    %v1893 = vadd.f32 %v285, %v1892
    %v1894 = vpop.f32.mrb[0].mxu0
    %1895 = vmatprep.mubr.bf16.mxu0 0
    %1896 = vmatmul.mubr.bf16.gmra.mrb[0].mxu0 %v842
    %v1897 = vpop.f32.mrb[0].mxu0
    %v1898 = vadd.f32 %v285, %v1897
    %v1899 = vpop.f32.mrb[0].mxu0
    %v1900 = vpop.f32.mrb[0].mxu0
    %v1901 = vadd.f32 %v285, %v1900
    %v1902 = vpop.f32.mrb[0].mxu0
    %1903 = vmatprep.mubr.bf16.mxu0 0
    %1904 = vmatmul.mubr.bf16.gmra.mrb[0].mxu0 %v843
    %v1905 = vpop.f32.mrb[0].mxu0
    %v1906 = vadd.f32 %v285, %v1905
    %v1907 = vpop.f32.mrb[0].mxu0
    %v1908 = vpop.f32.mrb[0].mxu0
    %v1909 = vadd.f32 %v285, %v1908
    %v1910 = vpop.f32.mrb[0].mxu0
    %1911 = vmatprep.mubr.bf16.mxu0 0
    %1912 = vmatmul.mubr.bf16.gmra.mrb[0].mxu0 %v844
    %v1913 = vpop.f32.mrb[0].mxu0
    %v1914 = vadd.f32 %v285, %v1913
    %v1915 = vpop.f32.mrb[0].mxu0
    %v1916 = vpop.f32.mrb[0].mxu0
    %v1917 = vadd.f32 %v285, %v1916
    %v1918 = vpop.f32.mrb[0].mxu0
    %1919 = vmatprep.mubr.bf16.mxu0 0
    %1920 = vmatmul.mubr.bf16.gmra.mrb[0].mxu0 %v845
    %v1921 = vpop.f32.mrb[0].mxu0
    %v1922 = vadd.f32 %v285, %v1921
    %v1923 = vpop.f32.mrb[0].mxu0
    %v1924 = vpop.f32.mrb[0].mxu0
    %v1925 = vadd.f32 %v285, %v1924
    %v1926 = vpop.f32.mrb[0].mxu0
    %1927 = vmatprep.mubr.bf16.mxu0 0
    %1928 = vmatmul.mubr.bf16.gmra.mrb[0].mxu0 %v846
    %v1929 = vpop.f32.mrb[0].mxu0
    %v1930 = vadd.f32 %v285, %v1929
    %v1931 = vpop.f32.mrb[0].mxu0
    %v1932 = vpop.f32.mrb[0].mxu0
    %v1933 = vadd.f32 %v285, %v1932
    %v1934 = vpop.f32.mrb[0].mxu0
    %1935 = vdwg.mxu0
    %v1936 = vmax.f32 %v1042, 0.0
    %v1937 = vmax.f32 %v1045, 0.0
    %v1938 = vmax.f32 %v1050, 0.0
    %v1939 = vmax.f32 %v1053, 0.0
    %v1940 = vmax.f32 %v1058, 0.0
    %v1941 = vmax.f32 %v1061, 0.0
    %v1942 = vmax.f32 %v1066, 0.0
    %v1943 = vmax.f32 %v1069, 0.0
    %v1944 = vmax.f32 %v1074, 0.0
    %v1945 = vmax.f32 %v1077, 0.0
    %v1946 = vmax.f32 %v1082, 0.0
    %v1947 = vmax.f32 %v1085, 0.0
    %v1948 = vmax.f32 %v1090, 0.0
    %v1949 = vmax.f32 %v1093, 0.0
    %v1950 = vmax.f32 %v1098, 0.0
    %v1951 = vmax.f32 %v1101, 0.0
    %v1952 = vmax.f32 %v1106, 0.0
    %v1953 = vmax.f32 %v1109, 0.0
    %v1954 = vmax.f32 %v1114, 0.0
    %v1955 = vmax.f32 %v1117, 0.0
    %v1956 = vmax.f32 %v1122, 0.0
    %v1957 = vmax.f32 %v1125, 0.0
    %v1958 = vmax.f32 %v1130, 0.0
    %v1959 = vmax.f32 %v1133, 0.0
    %v1960 = vmax.f32 %v1138, 0.0
    %v1961 = vmax.f32 %v1141, 0.0
    %v1962 = vmax.f32 %v1146, 0.0
    %v1963 = vmax.f32 %v1149, 0.0
    %v1964 = vmax.f32 %v1154, 0.0
    %v1965 = vmax.f32 %v1157, 0.0
    %v1966 = vmax.f32 %v1162, 0.0
    %v1967 = vmax.f32 %v1165, 0.0
    %v1968 = vmax.f32 %v1170, 0.0
    %v1969 = vmax.f32 %v1173, 0.0
    %v1970 = vmax.f32 %v1178, 0.0
    %v1971 = vmax.f32 %v1181, 0.0
    %v1972 = vmax.f32 %v1186, 0.0
    %v1973 = vmax.f32 %v1189, 0.0
    %v1974 = vmax.f32 %v1194, 0.0
    %v1975 = vmax.f32 %v1197, 0.0
    %v1976 = vmax.f32 %v1202, 0.0
    %v1977 = vmax.f32 %v1205, 0.0
    %v1978 = vmax.f32 %v1210, 0.0
    %v1979 = vmax.f32 %v1213, 0.0
    %v1980 = vmax.f32 %v1218, 0.0
    %v1981 = vmax.f32 %v1221, 0.0
    %v1982 = vmax.f32 %v1226, 0.0
    %v1983 = vmax.f32 %v1229, 0.0
    %v1984 = vmax.f32 %v1234, 0.0
    %v1985 = vmax.f32 %v1237, 0.0
    %v1986 = vmax.f32 %v1242, 0.0
    %v1987 = vmax.f32 %v1245, 0.0
    %v1988 = vmax.f32 %v1250, 0.0
    %v1989 = vmax.f32 %v1253, 0.0
    %v1990 = vmax.f32 %v1258, 0.0
    %v1991 = vmax.f32 %v1261, 0.0
    %v1992 = vmax.f32 %v1266, 0.0
    %v1993 = vmax.f32 %v1269, 0.0
    %v1994 = vmax.f32 %v1274, 0.0
    %v1995 = vmax.f32 %v1277, 0.0
    %v1996 = vmax.f32 %v1282, 0.0
    %v1997 = vmax.f32 %v1285, 0.0
    %v1998 = vmax.f32 %v1290, 0.0
    %v1999 = vmax.f32 %v1293, 0.0
    %v2000 = vmax.f32 %v1298, 0.0
    %v2001 = vmax.f32 %v1301, 0.0
    %v2002 = vmax.f32 %v1306, 0.0
    %v2003 = vmax.f32 %v1309, 0.0
    %v2004 = vmax.f32 %v1314, 0.0
    %v2005 = vmax.f32 %v1317, 0.0
    %v2006 = vmax.f32 %v1322, 0.0
    %v2007 = vmax.f32 %v1325, 0.0
    %v2008 = vmax.f32 %v1330, 0.0
    %v2009 = vmax.f32 %v1333, 0.0
    %v2010 = vmax.f32 %v1338, 0.0
    %v2011 = vmax.f32 %v1341, 0.0
    %v2012 = vmax.f32 %v1346, 0.0
    %v2013 = vmax.f32 %v1349, 0.0
    %v2014 = vmax.f32 %v1354, 0.0
    %v2015 = vmax.f32 %v1357, 0.0
    %v2016 = vmax.f32 %v1362, 0.0
    %v2017 = vmax.f32 %v1365, 0.0
    %v2018 = vmax.f32 %v1370, 0.0
    %v2019 = vmax.f32 %v1373, 0.0
    %v2020 = vmax.f32 %v1378, 0.0
    %v2021 = vmax.f32 %v1381, 0.0
    %v2022 = vmax.f32 %v1386, 0.0
    %v2023 = vmax.f32 %v1389, 0.0
    %v2024 = vmax.f32 %v1394, 0.0
    %v2025 = vmax.f32 %v1397, 0.0
    %v2026 = vmax.f32 %v1402, 0.0
    %v2027 = vmax.f32 %v1405, 0.0
    %v2028 = vmax.f32 %v1410, 0.0
    %v2029 = vmax.f32 %v1413, 0.0
    %v2030 = vmax.f32 %v1418, 0.0
    %v2031 = vmax.f32 %v1421, 0.0
    %v2032 = vmax.f32 %v1426, 0.0
    %v2033 = vmax.f32 %v1429, 0.0
    %v2034 = vmax.f32 %v1434, 0.0
    %v2035 = vmax.f32 %v1437, 0.0
    %v2036 = vmax.f32 %v1442, 0.0
    %v2037 = vmax.f32 %v1445, 0.0
    %v2038 = vmax.f32 %v1450, 0.0
    %v2039 = vmax.f32 %v1453, 0.0
    %v2040 = vmax.f32 %v1458, 0.0
    %v2041 = vmax.f32 %v1461, 0.0
    %v2042 = vmax.f32 %v1466, 0.0
    %v2043 = vmax.f32 %v1469, 0.0
    %v2044 = vmax.f32 %v1474, 0.0
    %v2045 = vmax.f32 %v1477, 0.0
    %v2046 = vmax.f32 %v1482, 0.0
    %v2047 = vmax.f32 %v1485, 0.0
    %v2048 = vmax.f32 %v1490, 0.0
    %v2049 = vmax.f32 %v1493, 0.0
    %v2050 = vmax.f32 %v1498, 0.0
    %v2051 = vmax.f32 %v1501, 0.0
    %v2052 = vmax.f32 %v1506, 0.0
    %v2053 = vmax.f32 %v1509, 0.0
    %v2054 = vmax.f32 %v1514, 0.0
    %v2055 = vmax.f32 %v1517, 0.0
    %v2056 = vmax.f32 %v1522, 0.0
    %v2057 = vmax.f32 %v1525, 0.0
    %v2058 = vmax.f32 %v1530, 0.0
    %v2059 = vmax.f32 %v1533, 0.0
    %v2060 = vmax.f32 %v1538, 0.0
    %v2061 = vmax.f32 %v1541, 0.0
    %v2062 = vmax.f32 %v1546, 0.0
    %v2063 = vmax.f32 %v1549, 0.0
    %v2064 = vmax.f32 %v1554, 0.0
    %v2065 = vmax.f32 %v1557, 0.0
    %v2066 = vmax.f32 %v1562, 0.0
    %v2067 = vmax.f32 %v1565, 0.0
    %v2068 = vmax.f32 %v1570, 0.0
    %v2069 = vmax.f32 %v1573, 0.0
    %v2070 = vmax.f32 %v1578, 0.0
    %v2071 = vmax.f32 %v1581, 0.0
    %v2072 = vmax.f32 %v1586, 0.0
    %v2073 = vmax.f32 %v1589, 0.0
    %v2074 = vmax.f32 %v1594, 0.0
    %v2075 = vmax.f32 %v1597, 0.0
    %v2076 = vmax.f32 %v1602, 0.0
    %v2077 = vmax.f32 %v1605, 0.0
    %v2078 = vmax.f32 %v1610, 0.0
    %v2079 = vmax.f32 %v1613, 0.0
    %v2080 = vmax.f32 %v1618, 0.0
    %v2081 = vmax.f32 %v1621, 0.0
    %v2082 = vmax.f32 %v1626, 0.0
    %v2083 = vmax.f32 %v1629, 0.0
    %v2084 = vmax.f32 %v1634, 0.0
    %v2085 = vmax.f32 %v1637, 0.0
    %v2086 = vmax.f32 %v1642, 0.0
    %v2087 = vmax.f32 %v1645, 0.0
    %v2088 = vmax.f32 %v1650, 0.0
    %v2089 = vmax.f32 %v1653, 0.0
    %v2090 = vmax.f32 %v1658, 0.0
    %v2091 = vmax.f32 %v1661, 0.0
    %v2092 = vmax.f32 %v1666, 0.0
    %v2093 = vmax.f32 %v1669, 0.0
    %v2094 = vmax.f32 %v1674, 0.0
    %v2095 = vmax.f32 %v1677, 0.0
    %v2096 = vmax.f32 %v1682, 0.0
    %v2097 = vmax.f32 %v1685, 0.0
    %v2098 = vmax.f32 %v1690, 0.0
    %v2099 = vmax.f32 %v1693, 0.0
    %v2100 = vmax.f32 %v1698, 0.0
    %v2101 = vmax.f32 %v1701, 0.0
    %v2102 = vmax.f32 %v1706, 0.0
    %v2103 = vmax.f32 %v1709, 0.0
    %v2104 = vmax.f32 %v1714, 0.0
    %v2105 = vmax.f32 %v1717, 0.0
    %v2106 = vmax.f32 %v1722, 0.0
    %v2107 = vmax.f32 %v1725, 0.0
    %v2108 = vmax.f32 %v1730, 0.0
    %v2109 = vmax.f32 %v1733, 0.0
    %v2110 = vmax.f32 %v1738, 0.0
    %v2111 = vmax.f32 %v1741, 0.0
    %v2112 = vmax.f32 %v1746, 0.0
    %v2113 = vmax.f32 %v1749, 0.0
    %v2114 = vmax.f32 %v1754, 0.0
    %v2115 = vmax.f32 %v1757, 0.0
    %v2116 = vmax.f32 %v1762, 0.0
    %v2117 = vmax.f32 %v1765, 0.0
    %v2118 = vmax.f32 %v1770, 0.0
    %v2119 = vmax.f32 %v1773, 0.0
    %v2120 = vmax.f32 %v1778, 0.0
    %v2121 = vmax.f32 %v1781, 0.0
    %v2122 = vmax.f32 %v1786, 0.0
    %v2123 = vmax.f32 %v1789, 0.0
    %v2124 = vmax.f32 %v1794, 0.0
    %v2125 = vmax.f32 %v1797, 0.0
    %v2126 = vmax.f32 %v1802, 0.0
    %v2127 = vmax.f32 %v1805, 0.0
    %v2128 = vmax.f32 %v1810, 0.0
    %v2129 = vmax.f32 %v1813, 0.0
    %v2130 = vmax.f32 %v1818, 0.0
    %v2131 = vmax.f32 %v1821, 0.0
    %v2132 = vmax.f32 %v1826, 0.0
    %v2133 = vmax.f32 %v1829, 0.0
    %v2134 = vmax.f32 %v1834, 0.0
    %v2135 = vmax.f32 %v1837, 0.0
    %v2136 = vmax.f32 %v1842, 0.0
    %v2137 = vmax.f32 %v1845, 0.0
    %v2138 = vmax.f32 %v1850, 0.0
    %v2139 = vmax.f32 %v1853, 0.0
    %v2140 = vmax.f32 %v1858, 0.0
    %v2141 = vmax.f32 %v1861, 0.0
    %v2142 = vmax.f32 %v1866, 0.0
    %v2143 = vmax.f32 %v1869, 0.0
    %v2144 = vmax.f32 %v1874, 0.0
    %v2145 = vmax.f32 %v1877, 0.0
    %v2146 = vmax.f32 %v1882, 0.0
    %v2147 = vmax.f32 %v1885, 0.0
    %v2148 = vmax.f32 %v1890, 0.0
    %v2149 = vmax.f32 %v1893, 0.0
    %v2150 = vmax.f32 %v1898, 0.0
    %v2151 = vmax.f32 %v1901, 0.0
    %v2152 = vmax.f32 %v1906, 0.0
    %v2153 = vmax.f32 %v1909, 0.0
    %v2154 = vmax.f32 %v1914, 0.0
    %v2155 = vmax.f32 %v1917, 0.0
    %v2156 = vmax.f32 %v1922, 0.0
    %v2157 = vmax.f32 %v1925, 0.0
    %v2158 = vmax.f32 %v1930, 0.0
    %v2159 = vmax.f32 %v1933, 0.0
    %v2160 = vmax.f32 %v1936, %v1940
    %v2161 = vmax.f32 %v1937, %v1941
    %v2162 = vmax.f32 %v1938, %v1942
    %v2163 = vmax.f32 %v1939, %v1943
    %v2164 = vmax.f32 %v1944, %v1948
    %v2165 = vmax.f32 %v1945, %v1949
    %v2166 = vmax.f32 %v1946, %v1950
    %v2167 = vmax.f32 %v1947, %v1951
    %v2168 = vmax.f32 %v1952, %v1956
    %v2169 = vmax.f32 %v1953, %v1957
    %v2170 = vmax.f32 %v1954, %v1958
    %v2171 = vmax.f32 %v1955, %v1959
    %v2172 = vmax.f32 %v1960, %v1964
    %v2173 = vmax.f32 %v1961, %v1965
    %v2174 = vmax.f32 %v1962, %v1966
    %v2175 = vmax.f32 %v1963, %v1967
    %v2176 = vmax.f32 %v1968, %v1972
    %v2177 = vmax.f32 %v1969, %v1973
    %v2178 = vmax.f32 %v1970, %v1974
    %v2179 = vmax.f32 %v1971, %v1975
    %v2180 = vmax.f32 %v1976, %v1980
    %v2181 = vmax.f32 %v1977, %v1981
    %v2182 = vmax.f32 %v1978, %v1982
    %v2183 = vmax.f32 %v1979, %v1983
    %v2184 = vmax.f32 %v1984, %v1988
    %v2185 = vmax.f32 %v1985, %v1989
    %v2186 = vmax.f32 %v1986, %v1990
    %v2187 = vmax.f32 %v1987, %v1991
    %v2188 = vmax.f32 %v1992, %v1996
    %v2189 = vmax.f32 %v1993, %v1997
    %v2190 = vmax.f32 %v1994, %v1998
    %v2191 = vmax.f32 %v1995, %v1999
    %v2192 = vmax.f32 %v2000, %v2004
    %v2193 = vmax.f32 %v2001, %v2005
    %v2194 = vmax.f32 %v2002, %v2006
    %v2195 = vmax.f32 %v2003, %v2007
    %v2196 = vmax.f32 %v2008, %v2012
    %v2197 = vmax.f32 %v2009, %v2013
    %v2198 = vmax.f32 %v2010, %v2014
    %v2199 = vmax.f32 %v2011, %v2015
    %v2200 = vmax.f32 %v2016, %v2020
    %v2201 = vmax.f32 %v2017, %v2021
    %v2202 = vmax.f32 %v2018, %v2022
    %v2203 = vmax.f32 %v2019, %v2023
    %v2204 = vmax.f32 %v2024, %v2028
    %v2205 = vmax.f32 %v2025, %v2029
    %v2206 = vmax.f32 %v2026, %v2030
    %v2207 = vmax.f32 %v2027, %v2031
    %v2208 = vmax.f32 %v2032, %v2036
    %v2209 = vmax.f32 %v2033, %v2037
    %v2210 = vmax.f32 %v2034, %v2038
    %v2211 = vmax.f32 %v2035, %v2039
    %v2212 = vmax.f32 %v2040, %v2044
    %v2213 = vmax.f32 %v2041, %v2045
    %v2214 = vmax.f32 %v2042, %v2046
    %v2215 = vmax.f32 %v2043, %v2047
    %v2216 = vmax.f32 %v2048, %v2052
    %v2217 = vmax.f32 %v2049, %v2053
    %v2218 = vmax.f32 %v2050, %v2054
    %v2219 = vmax.f32 %v2051, %v2055
    %v2220 = vmax.f32 %v2056, %v2060
    %v2221 = vmax.f32 %v2057, %v2061
    %v2222 = vmax.f32 %v2058, %v2062
    %v2223 = vmax.f32 %v2059, %v2063
    %v2224 = vmax.f32 %v2064, %v2068
    %v2225 = vmax.f32 %v2065, %v2069
    %v2226 = vmax.f32 %v2066, %v2070
    %v2227 = vmax.f32 %v2067, %v2071
    %v2228 = vmax.f32 %v2072, %v2076
    %v2229 = vmax.f32 %v2073, %v2077
    %v2230 = vmax.f32 %v2074, %v2078
    %v2231 = vmax.f32 %v2075, %v2079
    %v2232 = vmax.f32 %v2080, %v2084
    %v2233 = vmax.f32 %v2081, %v2085
    %v2234 = vmax.f32 %v2082, %v2086
    %v2235 = vmax.f32 %v2083, %v2087
    %v2236 = vmax.f32 %v2088, %v2092
    %v2237 = vmax.f32 %v2089, %v2093
    %v2238 = vmax.f32 %v2090, %v2094
    %v2239 = vmax.f32 %v2091, %v2095
    %v2240 = vmax.f32 %v2096, %v2100
    %v2241 = vmax.f32 %v2097, %v2101
    %v2242 = vmax.f32 %v2098, %v2102
    %v2243 = vmax.f32 %v2099, %v2103
    %v2244 = vmax.f32 %v2104, %v2108
    %v2245 = vmax.f32 %v2105, %v2109
    %v2246 = vmax.f32 %v2106, %v2110
    %v2247 = vmax.f32 %v2107, %v2111
    %v2248 = vmax.f32 %v2112, %v2116
    %v2249 = vmax.f32 %v2113, %v2117
    %v2250 = vmax.f32 %v2114, %v2118
    %v2251 = vmax.f32 %v2115, %v2119
    %v2252 = vmax.f32 %v2120, %v2124
    %v2253 = vmax.f32 %v2121, %v2125
    %v2254 = vmax.f32 %v2122, %v2126
    %v2255 = vmax.f32 %v2123, %v2127
    %v2256 = vmax.f32 %v2128, %v2132
    %v2257 = vmax.f32 %v2129, %v2133
    %v2258 = vmax.f32 %v2130, %v2134
    %v2259 = vmax.f32 %v2131, %v2135
    %v2260 = vmax.f32 %v2136, %v2140
    %v2261 = vmax.f32 %v2137, %v2141
    %v2262 = vmax.f32 %v2138, %v2142
    %v2263 = vmax.f32 %v2139, %v2143
    %v2264 = vmax.f32 %v2144, %v2148
    %v2265 = vmax.f32 %v2145, %v2149
    %v2266 = vmax.f32 %v2146, %v2150
    %v2267 = vmax.f32 %v2147, %v2151
    %v2268 = vmax.f32 %v2152, %v2156
    %v2269 = vmax.f32 %v2153, %v2157
    %v2270 = vmax.f32 %v2154, %v2158
    %v2271 = vmax.f32 %v2155, %v2159
    %2272 = vst [vmem:[#allocation2] sm:$0xff] %v2160
    %2273 = vst [vmem:[#allocation2 + $0x8] sm:$0xff] %v2161
    %2274 = vst [vmem:[#allocation2 + $0x10] sm:$0xff] %v2162
    %2275 = vst [vmem:[#allocation2 + $0x18] sm:$0xff] %v2163
    %2276 = vst [vmem:[#allocation2 + $0x28] sm:$0xff] %v2164
    %2277 = vst [vmem:[#allocation2 + $0x30] sm:$0xff] %v2165
    %2278 = vst [vmem:[#allocation2 + $0x38] sm:$0xff] %v2166
    %2279 = vst [vmem:[#allocation2 + $0x40] sm:$0xff] %v2167
    %2280 = vst [vmem:[#allocation2 + $0x50] sm:$0xff] %v2168
    %2281 = vst [vmem:[#allocation2 + $0x58] sm:$0xff] %v2169
    %2282 = vst [vmem:[#allocation2 + $0x60] sm:$0xff] %v2170
    %2283 = vst [vmem:[#allocation2 + $0x68] sm:$0xff] %v2171
    %2284 = vst [vmem:[#allocation2 + $0x78] sm:$0xff] %v2172
    %2285 = vst [vmem:[#allocation2 + $0x80] sm:$0xff] %v2173
    %2286 = vst [vmem:[#allocation2 + $0x88] sm:$0xff] %v2174
    %2287 = vst [vmem:[#allocation2 + $0x90] sm:$0xff] %v2175
    %2288 = vst [vmem:[#allocation2 + $0xa0] sm:$0xff] %v2176
    %2289 = vst [vmem:[#allocation2 + $0xa8] sm:$0xff] %v2177
    %2290 = vst [vmem:[#allocation2 + $0xb0] sm:$0xff] %v2178
    %2291 = vst [vmem:[#allocation2 + $0xb8] sm:$0xff] %v2179
    %2292 = vst [vmem:[#allocation2 + $0xc8] sm:$0xff] %v2180
    %2293 = vst [vmem:[#allocation2 + $0xd0] sm:$0xff] %v2181
    %2294 = vst [vmem:[#allocation2 + $0xd8] sm:$0xff] %v2182
    %2295 = vst [vmem:[#allocation2 + $0xe0] sm:$0xff] %v2183
    %2296 = vst [vmem:[#allocation2 + $0xf0] sm:$0xff] %v2184
    %2297 = vst [vmem:[#allocation2 + $0xf8] sm:$0xff] %v2185
    %2298 = vst [vmem:[#allocation2 + $0x100] sm:$0xff] %v2186
    %2299 = vst [vmem:[#allocation2 + $0x108] sm:$0xff] %v2187
    %2300 = vst [vmem:[#allocation2 + $0x118] sm:$0xff] %v2188
    %2301 = vst [vmem:[#allocation2 + $0x120] sm:$0xff] %v2189
    %2302 = vst [vmem:[#allocation2 + $0x128] sm:$0xff] %v2190
    %2303 = vst [vmem:[#allocation2 + $0x130] sm:$0xff] %v2191
    %2304 = vst [vmem:[#allocation2 + $0x140] sm:$0xff] %v2192
    %2305 = vst [vmem:[#allocation2 + $0x148] sm:$0xff] %v2193
    %2306 = vst [vmem:[#allocation2 + $0x150] sm:$0xff] %v2194
    %2307 = vst [vmem:[#allocation2 + $0x158] sm:$0xff] %v2195
    %2308 = vst [vmem:[#allocation2 + $0x168] sm:$0xff] %v2196
    %2309 = vst [vmem:[#allocation2 + $0x170] sm:$0xff] %v2197
    %2310 = vst [vmem:[#allocation2 + $0x178] sm:$0xff] %v2198
    %2311 = vst [vmem:[#allocation2 + $0x180] sm:$0xff] %v2199
    %2312 = vst [vmem:[#allocation2 + $0x190] sm:$0xff] %v2200
    %2313 = vst [vmem:[#allocation2 + $0x198] sm:$0xff] %v2201
    %2314 = vst [vmem:[#allocation2 + $0x1a0] sm:$0xff] %v2202
    %2315 = vst [vmem:[#allocation2 + $0x1a8] sm:$0xff] %v2203
    %2316 = vst [vmem:[#allocation2 + $0x1b8] sm:$0xff] %v2204
    %2317 = vst [vmem:[#allocation2 + $0x1c0] sm:$0xff] %v2205
    %2318 = vst [vmem:[#allocation2 + $0x1c8] sm:$0xff] %v2206
    %2319 = vst [vmem:[#allocation2 + $0x1d0] sm:$0xff] %v2207
    %2320 = vst [vmem:[#allocation2 + $0x1e0] sm:$0xff] %v2208
    %2321 = vst [vmem:[#allocation2 + $0x1e8] sm:$0xff] %v2209
    %2322 = vst [vmem:[#allocation2 + $0x1f0] sm:$0xff] %v2210
    %2323 = vst [vmem:[#allocation2 + $0x1f8] sm:$0xff] %v2211
    %2324 = vst [vmem:[#allocation2 + $0x208] sm:$0xff] %v2212
    %2325 = vst [vmem:[#allocation2 + $0x210] sm:$0xff] %v2213
    %2326 = vst [vmem:[#allocation2 + $0x218] sm:$0xff] %v2214
    %2327 = vst [vmem:[#allocation2 + $0x220] sm:$0xff] %v2215
    %2328 = vst [vmem:[#allocation2 + $0x230] sm:$0xff] %v2216
    %2329 = vst [vmem:[#allocation2 + $0x238] sm:$0xff] %v2217
    %2330 = vst [vmem:[#allocation2 + $0x240] sm:$0xff] %v2218
    %2331 = vst [vmem:[#allocation2 + $0x248] sm:$0xff] %v2219
    %2332 = vst [vmem:[#allocation2 + $0x258] sm:$0xff] %v2220
    %2333 = vst [vmem:[#allocation2 + $0x260] sm:$0xff] %v2221
    %2334 = vst [vmem:[#allocation2 + $0x268] sm:$0xff] %v2222
    %2335 = vst [vmem:[#allocation2 + $0x270] sm:$0xff] %v2223
    %2336 = vst [vmem:[#allocation2 + $0x280] sm:$0xff] %v2224
    %2337 = vst [vmem:[#allocation2 + $0x288] sm:$0xff] %v2225
    %2338 = vst [vmem:[#allocation2 + $0x290] sm:$0xff] %v2226
    %2339 = vst [vmem:[#allocation2 + $0x298] sm:$0xff] %v2227
    %2340 = vst [vmem:[#allocation2 + $0x2a8] sm:$0xff] %v2228
    %2341 = vst [vmem:[#allocation2 + $0x2b0] sm:$0xff] %v2229
    %2342 = vst [vmem:[#allocation2 + $0x2b8] sm:$0xff] %v2230
    %2343 = vst [vmem:[#allocation2 + $0x2c0] sm:$0xff] %v2231
    %2344 = vst [vmem:[#allocation2 + $0x2d0] sm:$0xff] %v2232
    %2345 = vst [vmem:[#allocation2 + $0x2d8] sm:$0xff] %v2233
    %2346 = vst [vmem:[#allocation2 + $0x2e0] sm:$0xff] %v2234
    %2347 = vst [vmem:[#allocation2 + $0x2e8] sm:$0xff] %v2235
    %2348 = vst [vmem:[#allocation2 + $0x2f8] sm:$0xff] %v2236
    %2349 = vst [vmem:[#allocation2 + $0x300] sm:$0xff] %v2237
    %2350 = vst [vmem:[#allocation2 + $0x308] sm:$0xff] %v2238
    %2351 = vst [vmem:[#allocation2 + $0x310] sm:$0xff] %v2239
    %2352 = vst [vmem:[#allocation2 + $0x320] sm:$0xff] %v2240
    %2353 = vst [vmem:[#allocation2 + $0x328] sm:$0xff] %v2241
    %2354 = vst [vmem:[#allocation2 + $0x330] sm:$0xff] %v2242
    %2355 = vst [vmem:[#allocation2 + $0x338] sm:$0xff] %v2243
    %2356 = vst [vmem:[#allocation2 + $0x348] sm:$0xff] %v2244
    %2357 = vst [vmem:[#allocation2 + $0x350] sm:$0xff] %v2245
    %2358 = vst [vmem:[#allocation2 + $0x358] sm:$0xff] %v2246
    %2359 = vst [vmem:[#allocation2 + $0x360] sm:$0xff] %v2247
    %2360 = vst [vmem:[#allocation2 + $0x370] sm:$0xff] %v2248
    %2361 = vst [vmem:[#allocation2 + $0x378] sm:$0xff] %v2249
    %2362 = vst [vmem:[#allocation2 + $0x380] sm:$0xff] %v2250
    %2363 = vst [vmem:[#allocation2 + $0x388] sm:$0xff] %v2251
    %2364 = vst [vmem:[#allocation2 + $0x398] sm:$0xff] %v2252
    %2365 = vst [vmem:[#allocation2 + $0x3a0] sm:$0xff] %v2253
    %2366 = vst [vmem:[#allocation2 + $0x3a8] sm:$0xff] %v2254
    %2367 = vst [vmem:[#allocation2 + $0x3b0] sm:$0xff] %v2255
    %2368 = vst [vmem:[#allocation2 + $0x3c0] sm:$0xff] %v2256
    %2369 = vst [vmem:[#allocation2 + $0x3c8] sm:$0xff] %v2257
    %2370 = vst [vmem:[#allocation2 + $0x3d0] sm:$0xff] %v2258
    %2371 = vst [vmem:[#allocation2 + $0x3d8] sm:$0xff] %v2259
    %2372 = vst [vmem:[#allocation2 + $0x3e8] sm:$0xff] %v2260
    %2373 = vst [vmem:[#allocation2 + $0x3f0] sm:$0xff] %v2261
    %2374 = vst [vmem:[#allocation2 + $0x3f8] sm:$0xff] %v2262
    %2375 = vst [vmem:[#allocation2 + $0x400] sm:$0xff] %v2263
    %2376 = vst [vmem:[#allocation2 + $0x410] sm:$0xff] %v2264
    %2377 = vst [vmem:[#allocation2 + $0x418] sm:$0xff] %v2265
    %2378 = vst [vmem:[#allocation2 + $0x420] sm:$0xff] %v2266
    %2379 = vst [vmem:[#allocation2 + $0x428] sm:$0xff] %v2267
    %2380 = vst [vmem:[#allocation2 + $0x438] sm:$0xff] %v2268
    %2381 = vst [vmem:[#allocation2 + $0x440] sm:$0xff] %v2269
    %2382 = vst [vmem:[#allocation2 + $0x448] sm:$0xff] %v2270
    %2383 = vst [vmem:[#allocation2 + $0x450] sm:$0xff] %v2271
    %2384 = vst [vmem:[#allocation2 + $0x20] sm:$0xff] 0.0
    %2385 = vst [vmem:[#allocation2 + $0x48] sm:$0xff] 0.0
    %2386 = vst [vmem:[#allocation2 + $0x70] sm:$0xff] 0.0
    %2387 = vst [vmem:[#allocation2 + $0x98] sm:$0xff] 0.0
    %2388 = vst [vmem:[#allocation2 + $0xc0] sm:$0xff] 0.0
    %2389 = vst [vmem:[#allocation2 + $0xe8] sm:$0xff] 0.0
    %2390 = vst [vmem:[#allocation2 + $0x110] sm:$0xff] 0.0
    %2391 = vst [vmem:[#allocation2 + $0x138] sm:$0xff] 0.0
    %2392 = vst [vmem:[#allocation2 + $0x160] sm:$0xff] 0.0
    %2393 = vst [vmem:[#allocation2 + $0x188] sm:$0xff] 0.0
    %2394 = vst [vmem:[#allocation2 + $0x1b0] sm:$0xff] 0.0
    %2395 = vst [vmem:[#allocation2 + $0x1d8] sm:$0xff] 0.0
    %2396 = vst [vmem:[#allocation2 + $0x200] sm:$0xff] 0.0
    %2397 = vst [vmem:[#allocation2 + $0x228] sm:$0xff] 0.0
    %2398 = vst [vmem:[#allocation2 + $0x250] sm:$0xff] 0.0
    %2399 = vst [vmem:[#allocation2 + $0x278] sm:$0xff] 0.0
    %2400 = vst [vmem:[#allocation2 + $0x2a0] sm:$0xff] 0.0
    %2401 = vst [vmem:[#allocation2 + $0x2c8] sm:$0xff] 0.0
    %2402 = vst [vmem:[#allocation2 + $0x2f0] sm:$0xff] 0.0
    %2403 = vst [vmem:[#allocation2 + $0x318] sm:$0xff] 0.0
    %2404 = vst [vmem:[#allocation2 + $0x340] sm:$0xff] 0.0
    %2405 = vst [vmem:[#allocation2 + $0x368] sm:$0xff] 0.0
    %2406 = vst [vmem:[#allocation2 + $0x390] sm:$0xff] 0.0
    %2407 = vst [vmem:[#allocation2 + $0x3b8] sm:$0xff] 0.0
    %2408 = vst [vmem:[#allocation2 + $0x3e0] sm:$0xff] 0.0
    %2409 = vst [vmem:[#allocation2 + $0x408] sm:$0xff] 0.0
    %2410 = vst [vmem:[#allocation2 + $0x430] sm:$0xff] 0.0
    %2411 = vst [vmem:[#allocation2 + $0x458] sm:$0xff] 0.0
    %v2412 = vld [vmem:[#allocation2] ss:$2 sm:$0xff]
    %s2413 = scalar_lea.vmem [#allocation2], 16
    %v2414 = vld [vmem:[%s2413] ss:$2 sm:$0xff]
    %s2415 = scalar_lea.vmem [#allocation2], 32
    %v2416 = vld [vmem:[%s2415] ss:$2 sm:$0xf]
    %s2417 = scalar_lea.vmem [#allocation2], 40
    %v2418 = vld [vmem:[%s2417] ss:$2 sm:$0xff]
    %s2419 = scalar_lea.vmem [#allocation2], 56
    %v2420 = vld [vmem:[%s2419] ss:$2 sm:$0xff]
    %s2421 = scalar_lea.vmem [#allocation2], 72
    %v2422 = vld [vmem:[%s2421] ss:$2 sm:$0xf]
    %s2423 = scalar_lea.vmem [#allocation2], 80
    %v2424 = vld [vmem:[%s2423] ss:$2 sm:$0xff]
    %s2425 = scalar_lea.vmem [#allocation2], 96
    %v2426 = vld [vmem:[%s2425] ss:$2 sm:$0xff]
    %s2427 = scalar_lea.vmem [#allocation2], 112
    %v2428 = vld [vmem:[%s2427] ss:$2 sm:$0xf]
    %s2429 = scalar_lea.vmem [#allocation2], 120
    %v2430 = vld [vmem:[%s2429] ss:$2 sm:$0xff]
    %s2431 = scalar_lea.vmem [#allocation2], 136
    %v2432 = vld [vmem:[%s2431] ss:$2 sm:$0xff]
    %s2433 = scalar_lea.vmem [#allocation2], 152
    %v2434 = vld [vmem:[%s2433] ss:$2 sm:$0xf]
    %s2435 = scalar_lea.vmem [#allocation2], 160
    %v2436 = vld [vmem:[%s2435] ss:$2 sm:$0xff]
    %s2437 = scalar_lea.vmem [#allocation2], 176
    %v2438 = vld [vmem:[%s2437] ss:$2 sm:$0xff]
    %s2439 = scalar_lea.vmem [#allocation2], 192
    %v2440 = vld [vmem:[%s2439] ss:$2 sm:$0xf]
    %s2441 = scalar_lea.vmem [#allocation2], 200
    %v2442 = vld [vmem:[%s2441] ss:$2 sm:$0xff]
    %s2443 = scalar_lea.vmem [#allocation2], 216
    %v2444 = vld [vmem:[%s2443] ss:$2 sm:$0xff]
    %s2445 = scalar_lea.vmem [#allocation2], 232
    %v2446 = vld [vmem:[%s2445] ss:$2 sm:$0xf]
    %s2447 = scalar_lea.vmem [#allocation2], 240
    %v2448 = vld [vmem:[%s2447] ss:$2 sm:$0xff]
    %s2449 = scalar_lea.vmem [#allocation2], 256
    %v2450 = vld [vmem:[%s2449] ss:$2 sm:$0xff]
    %s2451 = scalar_lea.vmem [#allocation2], 272
    %v2452 = vld [vmem:[%s2451] ss:$2 sm:$0xf]
    %s2453 = scalar_lea.vmem [#allocation2], 280
    %v2454 = vld [vmem:[%s2453] ss:$2 sm:$0xff]
    %s2455 = scalar_lea.vmem [#allocation2], 296
    %v2456 = vld [vmem:[%s2455] ss:$2 sm:$0xff]
    %s2457 = scalar_lea.vmem [#allocation2], 312
    %v2458 = vld [vmem:[%s2457] ss:$2 sm:$0xf]
    %s2459 = scalar_lea.vmem [#allocation2], 320
    %v2460 = vld [vmem:[%s2459] ss:$2 sm:$0xff]
    %s2461 = scalar_lea.vmem [#allocation2], 336
    %v2462 = vld [vmem:[%s2461] ss:$2 sm:$0xff]
    %s2463 = scalar_lea.vmem [#allocation2], 352
    %v2464 = vld [vmem:[%s2463] ss:$2 sm:$0xf]
    %s2465 = scalar_lea.vmem [#allocation2], 360
    %v2466 = vld [vmem:[%s2465] ss:$2 sm:$0xff]
    %s2467 = scalar_lea.vmem [#allocation2], 376
    %v2468 = vld [vmem:[%s2467] ss:$2 sm:$0xff]
    %s2469 = scalar_lea.vmem [#allocation2], 392
    %v2470 = vld [vmem:[%s2469] ss:$2 sm:$0xf]
    %s2471 = scalar_lea.vmem [#allocation2], 400
    %v2472 = vld [vmem:[%s2471] ss:$2 sm:$0xff]
    %s2473 = scalar_lea.vmem [#allocation2], 416
    %v2474 = vld [vmem:[%s2473] ss:$2 sm:$0xff]
    %s2475 = scalar_lea.vmem [#allocation2], 432
    %v2476 = vld [vmem:[%s2475] ss:$2 sm:$0xf]
    %s2477 = scalar_lea.vmem [#allocation2], 440
    %v2478 = vld [vmem:[%s2477] ss:$2 sm:$0xff]
    %s2479 = scalar_lea.vmem [#allocation2], 456
    %v2480 = vld [vmem:[%s2479] ss:$2 sm:$0xff]
    %s2481 = scalar_lea.vmem [#allocation2], 472
    %v2482 = vld [vmem:[%s2481] ss:$2 sm:$0xf]
    %s2483 = scalar_lea.vmem [#allocation2], 480
    %v2484 = vld [vmem:[%s2483] ss:$2 sm:$0xff]
    %s2485 = scalar_lea.vmem [#allocation2], 496
    %v2486 = vld [vmem:[%s2485] ss:$2 sm:$0xff]
    %s2487 = scalar_lea.vmem [#allocation2], 512
    %v2488 = vld [vmem:[%s2487] ss:$2 sm:$0xf]
    %s2489 = scalar_lea.vmem [#allocation2], 520
    %v2490 = vld [vmem:[%s2489] ss:$2 sm:$0xff]
    %s2491 = scalar_lea.vmem [#allocation2], 536
    %v2492 = vld [vmem:[%s2491] ss:$2 sm:$0xff]
    %s2493 = scalar_lea.vmem [#allocation2], 552
    %v2494 = vld [vmem:[%s2493] ss:$2 sm:$0xf]
    %s2495 = scalar_lea.vmem [#allocation2], 560
    %v2496 = vld [vmem:[%s2495] ss:$2 sm:$0xff]
    %s2497 = scalar_lea.vmem [#allocation2], 576
    %v2498 = vld [vmem:[%s2497] ss:$2 sm:$0xff]
    %s2499 = scalar_lea.vmem [#allocation2], 592
    %v2500 = vld [vmem:[%s2499] ss:$2 sm:$0xf]
    %s2501 = scalar_lea.vmem [#allocation2], 600
    %v2502 = vld [vmem:[%s2501] ss:$2 sm:$0xff]
    %s2503 = scalar_lea.vmem [#allocation2], 616
    %v2504 = vld [vmem:[%s2503] ss:$2 sm:$0xff]
    %s2505 = scalar_lea.vmem [#allocation2], 632
    %v2506 = vld [vmem:[%s2505] ss:$2 sm:$0xf]
    %s2507 = scalar_lea.vmem [#allocation2], 640
    %v2508 = vld [vmem:[%s2507] ss:$2 sm:$0xff]
    %s2509 = scalar_lea.vmem [#allocation2], 656
    %v2510 = vld [vmem:[%s2509] ss:$2 sm:$0xff]
    %s2511 = scalar_lea.vmem [#allocation2], 672
    %v2512 = vld [vmem:[%s2511] ss:$2 sm:$0xf]
    %s2513 = scalar_lea.vmem [#allocation2], 680
    %v2514 = vld [vmem:[%s2513] ss:$2 sm:$0xff]
    %s2515 = scalar_lea.vmem [#allocation2], 696
    %v2516 = vld [vmem:[%s2515] ss:$2 sm:$0xff]
    %s2517 = scalar_lea.vmem [#allocation2], 712
    %v2518 = vld [vmem:[%s2517] ss:$2 sm:$0xf]
    %s2519 = scalar_lea.vmem [#allocation2], 720
    %v2520 = vld [vmem:[%s2519] ss:$2 sm:$0xff]
    %s2521 = scalar_lea.vmem [#allocation2], 736
    %v2522 = vld [vmem:[%s2521] ss:$2 sm:$0xff]
    %s2523 = scalar_lea.vmem [#allocation2], 752
    %v2524 = vld [vmem:[%s2523] ss:$2 sm:$0xf]
    %s2525 = scalar_lea.vmem [#allocation2], 760
    %v2526 = vld [vmem:[%s2525] ss:$2 sm:$0xff]
    %s2527 = scalar_lea.vmem [#allocation2], 776
    %v2528 = vld [vmem:[%s2527] ss:$2 sm:$0xff]
    %s2529 = scalar_lea.vmem [#allocation2], 792
    %v2530 = vld [vmem:[%s2529] ss:$2 sm:$0xf]
    %s2531 = scalar_lea.vmem [#allocation2], 800
    %v2532 = vld [vmem:[%s2531] ss:$2 sm:$0xff]
    %s2533 = scalar_lea.vmem [#allocation2], 816
    %v2534 = vld [vmem:[%s2533] ss:$2 sm:$0xff]
    %s2535 = scalar_lea.vmem [#allocation2], 832
    %v2536 = vld [vmem:[%s2535] ss:$2 sm:$0xf]
    %s2537 = scalar_lea.vmem [#allocation2], 840
    %v2538 = vld [vmem:[%s2537] ss:$2 sm:$0xff]
    %s2539 = scalar_lea.vmem [#allocation2], 856
    %v2540 = vld [vmem:[%s2539] ss:$2 sm:$0xff]
    %s2541 = scalar_lea.vmem [#allocation2], 872
    %v2542 = vld [vmem:[%s2541] ss:$2 sm:$0xf]
    %s2543 = scalar_lea.vmem [#allocation2], 880
    %v2544 = vld [vmem:[%s2543] ss:$2 sm:$0xff]
    %s2545 = scalar_lea.vmem [#allocation2], 896
    %v2546 = vld [vmem:[%s2545] ss:$2 sm:$0xff]
    %s2547 = scalar_lea.vmem [#allocation2], 912
    %v2548 = vld [vmem:[%s2547] ss:$2 sm:$0xf]
    %s2549 = scalar_lea.vmem [#allocation2], 920
    %v2550 = vld [vmem:[%s2549] ss:$2 sm:$0xff]
    %s2551 = scalar_lea.vmem [#allocation2], 936
    %v2552 = vld [vmem:[%s2551] ss:$2 sm:$0xff]
    %s2553 = scalar_lea.vmem [#allocation2], 952
    %v2554 = vld [vmem:[%s2553] ss:$2 sm:$0xf]
    %s2555 = scalar_lea.vmem [#allocation2], 960
    %v2556 = vld [vmem:[%s2555] ss:$2 sm:$0xff]
    %s2557 = scalar_lea.vmem [#allocation2], 976
    %v2558 = vld [vmem:[%s2557] ss:$2 sm:$0xff]
    %s2559 = scalar_lea.vmem [#allocation2], 992
    %v2560 = vld [vmem:[%s2559] ss:$2 sm:$0xf]
    %s2561 = scalar_lea.vmem [#allocation2], 1000
    %v2562 = vld [vmem:[%s2561] ss:$2 sm:$0xff]
    %s2563 = scalar_lea.vmem [#allocation2], 1016
    %v2564 = vld [vmem:[%s2563] ss:$2 sm:$0xff]
    %s2565 = scalar_lea.vmem [#allocation2], 1032
    %v2566 = vld [vmem:[%s2565] ss:$2 sm:$0xf]
    %s2567 = scalar_lea.vmem [#allocation2], 1040
    %v2568 = vld [vmem:[%s2567] ss:$2 sm:$0xff]
    %s2569 = scalar_lea.vmem [#allocation2], 1056
    %v2570 = vld [vmem:[%s2569] ss:$2 sm:$0xff]
    %s2571 = scalar_lea.vmem [#allocation2], 1072
    %v2572 = vld [vmem:[%s2571] ss:$2 sm:$0xf]
    %s2573 = scalar_lea.vmem [#allocation2], 1080
    %v2574 = vld [vmem:[%s2573] ss:$2 sm:$0xff]
    %s2575 = scalar_lea.vmem [#allocation2], 1096
    %v2576 = vld [vmem:[%s2575] ss:$2 sm:$0xff]
    %s2577 = scalar_lea.vmem [#allocation2], 1112
    %v2578 = vld [vmem:[%s2577] ss:$2 sm:$0xf]
    %s2579 = scalar_lea.vmem [#allocation2], 1
    %v2580 = vld [vmem:[%s2579] ss:$2 sm:$0xff]
    %s2581 = scalar_lea.vmem [#allocation2], 17
    %v2582 = vld [vmem:[%s2581] ss:$2 sm:$0xff]
    %s2583 = scalar_lea.vmem [#allocation2], 33
    %v2584 = vld [vmem:[%s2583] ss:$2 sm:$0xf]
    %s2585 = scalar_lea.vmem [#allocation2], 41
    %v2586 = vld [vmem:[%s2585] ss:$2 sm:$0xff]
    %s2587 = scalar_lea.vmem [#allocation2], 57
    %v2588 = vld [vmem:[%s2587] ss:$2 sm:$0xff]
    %s2589 = scalar_lea.vmem [#allocation2], 73
    %v2590 = vld [vmem:[%s2589] ss:$2 sm:$0xf]
    %s2591 = scalar_lea.vmem [#allocation2], 81
    %v2592 = vld [vmem:[%s2591] ss:$2 sm:$0xff]
    %s2593 = scalar_lea.vmem [#allocation2], 97
    %v2594 = vld [vmem:[%s2593] ss:$2 sm:$0xff]
    %s2595 = scalar_lea.vmem [#allocation2], 113
    %v2596 = vld [vmem:[%s2595] ss:$2 sm:$0xf]
    %s2597 = scalar_lea.vmem [#allocation2], 121
    %v2598 = vld [vmem:[%s2597] ss:$2 sm:$0xff]
    %s2599 = scalar_lea.vmem [#allocation2], 137
    %v2600 = vld [vmem:[%s2599] ss:$2 sm:$0xff]
    %s2601 = scalar_lea.vmem [#allocation2], 153
    %v2602 = vld [vmem:[%s2601] ss:$2 sm:$0xf]
    %s2603 = scalar_lea.vmem [#allocation2], 161
    %v2604 = vld [vmem:[%s2603] ss:$2 sm:$0xff]
    %s2605 = scalar_lea.vmem [#allocation2], 177
    %v2606 = vld [vmem:[%s2605] ss:$2 sm:$0xff]
    %s2607 = scalar_lea.vmem [#allocation2], 193
    %v2608 = vld [vmem:[%s2607] ss:$2 sm:$0xf]
    %s2609 = scalar_lea.vmem [#allocation2], 201
    %v2610 = vld [vmem:[%s2609] ss:$2 sm:$0xff]
    %s2611 = scalar_lea.vmem [#allocation2], 217
    %v2612 = vld [vmem:[%s2611] ss:$2 sm:$0xff]
    %s2613 = scalar_lea.vmem [#allocation2], 233
    %v2614 = vld [vmem:[%s2613] ss:$2 sm:$0xf]
    %s2615 = scalar_lea.vmem [#allocation2], 241
    %v2616 = vld [vmem:[%s2615] ss:$2 sm:$0xff]
    %s2617 = scalar_lea.vmem [#allocation2], 257
    %v2618 = vld [vmem:[%s2617] ss:$2 sm:$0xff]
    %s2619 = scalar_lea.vmem [#allocation2], 273
    %v2620 = vld [vmem:[%s2619] ss:$2 sm:$0xf]
    %s2621 = scalar_lea.vmem [#allocation2], 281
    %v2622 = vld [vmem:[%s2621] ss:$2 sm:$0xff]
    %s2623 = scalar_lea.vmem [#allocation2], 297
    %v2624 = vld [vmem:[%s2623] ss:$2 sm:$0xff]
    %s2625 = scalar_lea.vmem [#allocation2], 313
    %v2626 = vld [vmem:[%s2625] ss:$2 sm:$0xf]
    %s2627 = scalar_lea.vmem [#allocation2], 321
    %v2628 = vld [vmem:[%s2627] ss:$2 sm:$0xff]
    %s2629 = scalar_lea.vmem [#allocation2], 337
    %v2630 = vld [vmem:[%s2629] ss:$2 sm:$0xff]
    %s2631 = scalar_lea.vmem [#allocation2], 353
    %v2632 = vld [vmem:[%s2631] ss:$2 sm:$0xf]
    %s2633 = scalar_lea.vmem [#allocation2], 361
    %v2634 = vld [vmem:[%s2633] ss:$2 sm:$0xff]
    %s2635 = scalar_lea.vmem [#allocation2], 377
    %v2636 = vld [vmem:[%s2635] ss:$2 sm:$0xff]
    %s2637 = scalar_lea.vmem [#allocation2], 393
    %v2638 = vld [vmem:[%s2637] ss:$2 sm:$0xf]
    %s2639 = scalar_lea.vmem [#allocation2], 401
    %v2640 = vld [vmem:[%s2639] ss:$2 sm:$0xff]
    %s2641 = scalar_lea.vmem [#allocation2], 417
    %v2642 = vld [vmem:[%s2641] ss:$2 sm:$0xff]
    %s2643 = scalar_lea.vmem [#allocation2], 433
    %v2644 = vld [vmem:[%s2643] ss:$2 sm:$0xf]
    %s2645 = scalar_lea.vmem [#allocation2], 441
    %v2646 = vld [vmem:[%s2645] ss:$2 sm:$0xff]
    %s2647 = scalar_lea.vmem [#allocation2], 457
    %v2648 = vld [vmem:[%s2647] ss:$2 sm:$0xff]
    %s2649 = scalar_lea.vmem [#allocation2], 473
    %v2650 = vld [vmem:[%s2649] ss:$2 sm:$0xf]
    %s2651 = scalar_lea.vmem [#allocation2], 481
    %v2652 = vld [vmem:[%s2651] ss:$2 sm:$0xff]
    %s2653 = scalar_lea.vmem [#allocation2], 497
    %v2654 = vld [vmem:[%s2653] ss:$2 sm:$0xff]
    %s2655 = scalar_lea.vmem [#allocation2], 513
    %v2656 = vld [vmem:[%s2655] ss:$2 sm:$0xf]
    %s2657 = scalar_lea.vmem [#allocation2], 521
    %v2658 = vld [vmem:[%s2657] ss:$2 sm:$0xff]
    %s2659 = scalar_lea.vmem [#allocation2], 537
    %v2660 = vld [vmem:[%s2659] ss:$2 sm:$0xff]
    %s2661 = scalar_lea.vmem [#allocation2], 553
    %v2662 = vld [vmem:[%s2661] ss:$2 sm:$0xf]
    %s2663 = scalar_lea.vmem [#allocation2], 561
    %v2664 = vld [vmem:[%s2663] ss:$2 sm:$0xff]
    %s2665 = scalar_lea.vmem [#allocation2], 577
    %v2666 = vld [vmem:[%s2665] ss:$2 sm:$0xff]
    %s2667 = scalar_lea.vmem [#allocation2], 593
    %v2668 = vld [vmem:[%s2667] ss:$2 sm:$0xf]
    %s2669 = scalar_lea.vmem [#allocation2], 601
    %v2670 = vld [vmem:[%s2669] ss:$2 sm:$0xff]
    %s2671 = scalar_lea.vmem [#allocation2], 617
    %v2672 = vld [vmem:[%s2671] ss:$2 sm:$0xff]
    %s2673 = scalar_lea.vmem [#allocation2], 633
    %v2674 = vld [vmem:[%s2673] ss:$2 sm:$0xf]
    %s2675 = scalar_lea.vmem [#allocation2], 641
    %v2676 = vld [vmem:[%s2675] ss:$2 sm:$0xff]
    %s2677 = scalar_lea.vmem [#allocation2], 657
    %v2678 = vld [vmem:[%s2677] ss:$2 sm:$0xff]
    %s2679 = scalar_lea.vmem [#allocation2], 673
    %v2680 = vld [vmem:[%s2679] ss:$2 sm:$0xf]
    %s2681 = scalar_lea.vmem [#allocation2], 681
    %v2682 = vld [vmem:[%s2681] ss:$2 sm:$0xff]
    %s2683 = scalar_lea.vmem [#allocation2], 697
    %v2684 = vld [vmem:[%s2683] ss:$2 sm:$0xff]
    %s2685 = scalar_lea.vmem [#allocation2], 713
    %v2686 = vld [vmem:[%s2685] ss:$2 sm:$0xf]
    %s2687 = scalar_lea.vmem [#allocation2], 721
    %v2688 = vld [vmem:[%s2687] ss:$2 sm:$0xff]
    %s2689 = scalar_lea.vmem [#allocation2], 737
    %v2690 = vld [vmem:[%s2689] ss:$2 sm:$0xff]
    %s2691 = scalar_lea.vmem [#allocation2], 753
    %v2692 = vld [vmem:[%s2691] ss:$2 sm:$0xf]
    %s2693 = scalar_lea.vmem [#allocation2], 761
    %v2694 = vld [vmem:[%s2693] ss:$2 sm:$0xff]
    %s2695 = scalar_lea.vmem [#allocation2], 777
    %v2696 = vld [vmem:[%s2695] ss:$2 sm:$0xff]
    %s2697 = scalar_lea.vmem [#allocation2], 793
    %v2698 = vld [vmem:[%s2697] ss:$2 sm:$0xf]
    %s2699 = scalar_lea.vmem [#allocation2], 801
    %v2700 = vld [vmem:[%s2699] ss:$2 sm:$0xff]
    %s2701 = scalar_lea.vmem [#allocation2], 817
    %v2702 = vld [vmem:[%s2701] ss:$2 sm:$0xff]
    %s2703 = scalar_lea.vmem [#allocation2], 833
    %v2704 = vld [vmem:[%s2703] ss:$2 sm:$0xf]
    %s2705 = scalar_lea.vmem [#allocation2], 841
    %v2706 = vld [vmem:[%s2705] ss:$2 sm:$0xff]
    %s2707 = scalar_lea.vmem [#allocation2], 857
    %v2708 = vld [vmem:[%s2707] ss:$2 sm:$0xff]
    %s2709 = scalar_lea.vmem [#allocation2], 873
    %v2710 = vld [vmem:[%s2709] ss:$2 sm:$0xf]
    %s2711 = scalar_lea.vmem [#allocation2], 881
    %v2712 = vld [vmem:[%s2711] ss:$2 sm:$0xff]
    %s2713 = scalar_lea.vmem [#allocation2], 897
    %v2714 = vld [vmem:[%s2713] ss:$2 sm:$0xff]
    %s2715 = scalar_lea.vmem [#allocation2], 913
    %v2716 = vld [vmem:[%s2715] ss:$2 sm:$0xf]
    %s2717 = scalar_lea.vmem [#allocation2], 921
    %v2718 = vld [vmem:[%s2717] ss:$2 sm:$0xff]
    %s2719 = scalar_lea.vmem [#allocation2], 937
    %v2720 = vld [vmem:[%s2719] ss:$2 sm:$0xff]
    %s2721 = scalar_lea.vmem [#allocation2], 953
    %v2722 = vld [vmem:[%s2721] ss:$2 sm:$0xf]
    %s2723 = scalar_lea.vmem [#allocation2], 961
    %v2724 = vld [vmem:[%s2723] ss:$2 sm:$0xff]
    %s2725 = scalar_lea.vmem [#allocation2], 977
    %v2726 = vld [vmem:[%s2725] ss:$2 sm:$0xff]
    %s2727 = scalar_lea.vmem [#allocation2], 993
    %v2728 = vld [vmem:[%s2727] ss:$2 sm:$0xf]
    %s2729 = scalar_lea.vmem [#allocation2], 1001
    %v2730 = vld [vmem:[%s2729] ss:$2 sm:$0xff]
    %s2731 = scalar_lea.vmem [#allocation2], 1017
    %v2732 = vld [vmem:[%s2731] ss:$2 sm:$0xff]
    %s2733 = scalar_lea.vmem [#allocation2], 1033
    %v2734 = vld [vmem:[%s2733] ss:$2 sm:$0xf]
    %s2735 = scalar_lea.vmem [#allocation2], 1041
    %v2736 = vld [vmem:[%s2735] ss:$2 sm:$0xff]
    %s2737 = scalar_lea.vmem [#allocation2], 1057
    %v2738 = vld [vmem:[%s2737] ss:$2 sm:$0xff]
    %s2739 = scalar_lea.vmem [#allocation2], 1073
    %v2740 = vld [vmem:[%s2739] ss:$2 sm:$0xf]
    %s2741 = scalar_lea.vmem [#allocation2], 1081
    %v2742 = vld [vmem:[%s2741] ss:$2 sm:$0xff]
    %s2743 = scalar_lea.vmem [#allocation2], 1097
    %v2744 = vld [vmem:[%s2743] ss:$2 sm:$0xff]
    %s2745 = scalar_lea.vmem [#allocation2], 1113
    %v2746 = vld [vmem:[%s2745] ss:$2 sm:$0xf]
    %v2747 = vmax.f32 %v2412, %v2580
    %v2748 = vmax.f32 %v2414, %v2582
    %v2749 = vmax.f32 %v2416, %v2584
    %v2750 = vmax.f32 %v2418, %v2586
    %v2751 = vmax.f32 %v2420, %v2588
    %v2752 = vmax.f32 %v2422, %v2590
    %v2753 = vmax.f32 %v2424, %v2592
    %v2754 = vmax.f32 %v2426, %v2594
    %v2755 = vmax.f32 %v2428, %v2596
    %v2756 = vmax.f32 %v2430, %v2598
    %v2757 = vmax.f32 %v2432, %v2600
    %v2758 = vmax.f32 %v2434, %v2602
    %v2759 = vmax.f32 %v2436, %v2604
    %v2760 = vmax.f32 %v2438, %v2606
    %v2761 = vmax.f32 %v2440, %v2608
    %v2762 = vmax.f32 %v2442, %v2610
    %v2763 = vmax.f32 %v2444, %v2612
    %v2764 = vmax.f32 %v2446, %v2614
    %v2765 = vmax.f32 %v2448, %v2616
    %v2766 = vmax.f32 %v2450, %v2618
    %v2767 = vmax.f32 %v2452, %v2620
    %v2768 = vmax.f32 %v2454, %v2622
    %v2769 = vmax.f32 %v2456, %v2624
    %v2770 = vmax.f32 %v2458, %v2626
    %v2771 = vmax.f32 %v2460, %v2628
    %v2772 = vmax.f32 %v2462, %v2630
    %v2773 = vmax.f32 %v2464, %v2632
    %v2774 = vmax.f32 %v2466, %v2634
    %v2775 = vmax.f32 %v2468, %v2636
    %v2776 = vmax.f32 %v2470, %v2638
    %v2777 = vmax.f32 %v2472, %v2640
    %v2778 = vmax.f32 %v2474, %v2642
    %v2779 = vmax.f32 %v2476, %v2644
    %v2780 = vmax.f32 %v2478, %v2646
    %v2781 = vmax.f32 %v2480, %v2648
    %v2782 = vmax.f32 %v2482, %v2650
    %v2783 = vmax.f32 %v2484, %v2652
    %v2784 = vmax.f32 %v2486, %v2654
    %v2785 = vmax.f32 %v2488, %v2656
    %v2786 = vmax.f32 %v2490, %v2658
    %v2787 = vmax.f32 %v2492, %v2660
    %v2788 = vmax.f32 %v2494, %v2662
    %v2789 = vmax.f32 %v2496, %v2664
    %v2790 = vmax.f32 %v2498, %v2666
    %v2791 = vmax.f32 %v2500, %v2668
    %v2792 = vmax.f32 %v2502, %v2670
    %v2793 = vmax.f32 %v2504, %v2672
    %v2794 = vmax.f32 %v2506, %v2674
    %v2795 = vmax.f32 %v2508, %v2676
    %v2796 = vmax.f32 %v2510, %v2678
    %v2797 = vmax.f32 %v2512, %v2680
    %v2798 = vmax.f32 %v2514, %v2682
    %v2799 = vmax.f32 %v2516, %v2684
    %v2800 = vmax.f32 %v2518, %v2686
    %v2801 = vmax.f32 %v2520, %v2688
    %v2802 = vmax.f32 %v2522, %v2690
    %v2803 = vmax.f32 %v2524, %v2692
    %v2804 = vmax.f32 %v2526, %v2694
    %v2805 = vmax.f32 %v2528, %v2696
    %v2806 = vmax.f32 %v2530, %v2698
    %v2807 = vmax.f32 %v2532, %v2700
    %v2808 = vmax.f32 %v2534, %v2702
    %v2809 = vmax.f32 %v2536, %v2704
    %v2810 = vmax.f32 %v2538, %v2706
    %v2811 = vmax.f32 %v2540, %v2708
    %v2812 = vmax.f32 %v2542, %v2710
    %v2813 = vmax.f32 %v2544, %v2712
    %v2814 = vmax.f32 %v2546, %v2714
    %v2815 = vmax.f32 %v2548, %v2716
    %v2816 = vmax.f32 %v2550, %v2718
    %v2817 = vmax.f32 %v2552, %v2720
    %v2818 = vmax.f32 %v2554, %v2722
    %v2819 = vmax.f32 %v2556, %v2724
    %v2820 = vmax.f32 %v2558, %v2726
    %v2821 = vmax.f32 %v2560, %v2728
    %v2822 = vmax.f32 %v2562, %v2730
    %v2823 = vmax.f32 %v2564, %v2732
    %v2824 = vmax.f32 %v2566, %v2734
    %v2825 = vmax.f32 %v2568, %v2736
    %v2826 = vmax.f32 %v2570, %v2738
    %v2827 = vmax.f32 %v2572, %v2740
    %v2828 = vmax.f32 %v2574, %v2742
    %v2829 = vmax.f32 %v2576, %v2744
    %v2830 = vmax.f32 %v2578, %v2746
    %vm2915 = vcmask 1046528
    %v2916 = vrot.slane %v2747, 1
    %v2917 = vrot.slane %v2748, 1
    %v2918 = vsel %vm2915, %v2916, %v2917
    %v2919 = vrot.slane %v2749, 1
    %v2920 = vsel %vm2915, %v2917, %v2919
    %v2921 = vrot.slane %v2750, 1
    %v2922 = vrot.slane %v2751, 1
    %v2923 = vsel %vm2915, %v2921, %v2922
    %v2924 = vrot.slane %v2752, 1
    %v2925 = vsel %vm2915, %v2922, %v2924
    %v2926 = vrot.slane %v2753, 1
    %v2927 = vrot.slane %v2754, 1
    %v2928 = vsel %vm2915, %v2926, %v2927
    %v2929 = vrot.slane %v2755, 1
    %v2930 = vsel %vm2915, %v2927, %v2929
    %v2931 = vrot.slane %v2756, 1
    %v2932 = vrot.slane %v2757, 1
    %v2933 = vsel %vm2915, %v2931, %v2932
    %v2934 = vrot.slane %v2758, 1
    %v2935 = vsel %vm2915, %v2932, %v2934
    %v2936 = vrot.slane %v2759, 1
    %v2937 = vrot.slane %v2760, 1
    %v2938 = vsel %vm2915, %v2936, %v2937
    %v2939 = vrot.slane %v2761, 1
    %v2940 = vsel %vm2915, %v2937, %v2939
    %v2941 = vrot.slane %v2762, 1
    %v2942 = vrot.slane %v2763, 1
    %v2943 = vsel %vm2915, %v2941, %v2942
    %v2944 = vrot.slane %v2764, 1
    %v2945 = vsel %vm2915, %v2942, %v2944
    %v2946 = vrot.slane %v2765, 1
    %v2947 = vrot.slane %v2766, 1
    %v2948 = vsel %vm2915, %v2946, %v2947
    %v2949 = vrot.slane %v2767, 1
    %v2950 = vsel %vm2915, %v2947, %v2949
    %v2951 = vrot.slane %v2768, 1
    %v2952 = vrot.slane %v2769, 1
    %v2953 = vsel %vm2915, %v2951, %v2952
    %v2954 = vrot.slane %v2770, 1
    %v2955 = vsel %vm2915, %v2952, %v2954
    %v2956 = vrot.slane %v2771, 1
    %v2957 = vrot.slane %v2772, 1
    %v2958 = vsel %vm2915, %v2956, %v2957
    %v2959 = vrot.slane %v2773, 1
    %v2960 = vsel %vm2915, %v2957, %v2959
    %v2961 = vrot.slane %v2774, 1
    %v2962 = vrot.slane %v2775, 1
    %v2963 = vsel %vm2915, %v2961, %v2962
    %v2964 = vrot.slane %v2776, 1
    %v2965 = vsel %vm2915, %v2962, %v2964
    %v2966 = vrot.slane %v2777, 1
    %v2967 = vrot.slane %v2778, 1
    %v2968 = vsel %vm2915, %v2966, %v2967
    %v2969 = vrot.slane %v2779, 1
    %v2970 = vsel %vm2915, %v2967, %v2969
    %v2971 = vrot.slane %v2780, 1
    %v2972 = vrot.slane %v2781, 1
    %v2973 = vsel %vm2915, %v2971, %v2972
    %v2974 = vrot.slane %v2782, 1
    %v2975 = vsel %vm2915, %v2972, %v2974
    %v2976 = vrot.slane %v2783, 1
    %v2977 = vrot.slane %v2784, 1
    %v2978 = vsel %vm2915, %v2976, %v2977
    %v2979 = vrot.slane %v2785, 1
    %v2980 = vsel %vm2915, %v2977, %v2979
    %v2981 = vrot.slane %v2786, 1
    %v2982 = vrot.slane %v2787, 1
    %v2983 = vsel %vm2915, %v2981, %v2982
    %v2984 = vrot.slane %v2788, 1
    %v2985 = vsel %vm2915, %v2982, %v2984
    %v2986 = vrot.slane %v2789, 1
    %v2987 = vrot.slane %v2790, 1
    %v2988 = vsel %vm2915, %v2986, %v2987
    %v2989 = vrot.slane %v2791, 1
    %v2990 = vsel %vm2915, %v2987, %v2989
    %v2991 = vrot.slane %v2792, 1
    %v2992 = vrot.slane %v2793, 1
    %v2993 = vsel %vm2915, %v2991, %v2992
    %v2994 = vrot.slane %v2794, 1
    %v2995 = vsel %vm2915, %v2992, %v2994
    %v2996 = vrot.slane %v2795, 1
    %v2997 = vrot.slane %v2796, 1
    %v2998 = vsel %vm2915, %v2996, %v2997
    %v2999 = vrot.slane %v2797, 1
    %v3000 = vsel %vm2915, %v2997, %v2999
    %v3001 = vrot.slane %v2798, 1
    %v3002 = vrot.slane %v2799, 1
    %v3003 = vsel %vm2915, %v3001, %v3002
    %v3004 = vrot.slane %v2800, 1
    %v3005 = vsel %vm2915, %v3002, %v3004
    %v3006 = vrot.slane %v2801, 1
    %v3007 = vrot.slane %v2802, 1
    %v3008 = vsel %vm2915, %v3006, %v3007
    %v3009 = vrot.slane %v2803, 1
    %v3010 = vsel %vm2915, %v3007, %v3009
    %v3011 = vrot.slane %v2804, 1
    %v3012 = vrot.slane %v2805, 1
    %v3013 = vsel %vm2915, %v3011, %v3012
    %v3014 = vrot.slane %v2806, 1
    %v3015 = vsel %vm2915, %v3012, %v3014
    %v3016 = vrot.slane %v2807, 1
    %v3017 = vrot.slane %v2808, 1
    %v3018 = vsel %vm2915, %v3016, %v3017
    %v3019 = vrot.slane %v2809, 1
    %v3020 = vsel %vm2915, %v3017, %v3019
    %v3021 = vrot.slane %v2810, 1
    %v3022 = vrot.slane %v2811, 1
    %v3023 = vsel %vm2915, %v3021, %v3022
    %v3024 = vrot.slane %v2812, 1
    %v3025 = vsel %vm2915, %v3022, %v3024
    %v3026 = vrot.slane %v2813, 1
    %v3027 = vrot.slane %v2814, 1
    %v3028 = vsel %vm2915, %v3026, %v3027
    %v3029 = vrot.slane %v2815, 1
    %v3030 = vsel %vm2915, %v3027, %v3029
    %v3031 = vrot.slane %v2816, 1
    %v3032 = vrot.slane %v2817, 1
    %v3033 = vsel %vm2915, %v3031, %v3032
    %v3034 = vrot.slane %v2818, 1
    %v3035 = vsel %vm2915, %v3032, %v3034
    %v3036 = vrot.slane %v2819, 1
    %v3037 = vrot.slane %v2820, 1
    %v3038 = vsel %vm2915, %v3036, %v3037
    %v3039 = vrot.slane %v2821, 1
    %v3040 = vsel %vm2915, %v3037, %v3039
    %v3041 = vrot.slane %v2822, 1
    %v3042 = vrot.slane %v2823, 1
    %v3043 = vsel %vm2915, %v3041, %v3042
    %v3044 = vrot.slane %v2824, 1
    %v3045 = vsel %vm2915, %v3042, %v3044
    %v3046 = vrot.slane %v2825, 1
    %v3047 = vrot.slane %v2826, 1
    %v3048 = vsel %vm2915, %v3046, %v3047
    %v3049 = vrot.slane %v2827, 1
    %v3050 = vsel %vm2915, %v3047, %v3049
    %v3051 = vrot.slane %v2828, 1
    %v3052 = vrot.slane %v2829, 1
    %v3053 = vsel %vm2915, %v3051, %v3052
    %v3054 = vrot.slane %v2830, 1
    %v3055 = vsel %vm2915, %v3052, %v3054
    %3112 = vrot.lane.b32.xlu0 %v2918, 18
    %v3113 = vpop.permute.xlu0 %3112
    %3114 = vrot.lane.b32.xlu0 %v2920, 18
    %v3115 = vpop.permute.xlu0 %3114
    %3116 = vrot.lane.b32.xlu0 %v2923, 18
    %v3117 = vpop.permute.xlu0 %3116
    %3118 = vrot.lane.b32.xlu0 %v2925, 18
    %v3119 = vpop.permute.xlu0 %3118
    %3120 = vrot.lane.b32.xlu0 %v2928, 18
    %v3121 = vpop.permute.xlu0 %3120
    %3122 = vrot.lane.b32.xlu0 %v2930, 18
    %v3123 = vpop.permute.xlu0 %3122
    %3124 = vrot.lane.b32.xlu0 %v2933, 18
    %v3125 = vpop.permute.xlu0 %3124
    %3126 = vrot.lane.b32.xlu0 %v2935, 18
    %v3127 = vpop.permute.xlu0 %3126
    %3128 = vrot.lane.b32.xlu0 %v2938, 18
    %v3129 = vpop.permute.xlu0 %3128
    %3130 = vrot.lane.b32.xlu0 %v2940, 18
    %v3131 = vpop.permute.xlu0 %3130
    %3132 = vrot.lane.b32.xlu0 %v2943, 18
    %v3133 = vpop.permute.xlu0 %3132
    %3134 = vrot.lane.b32.xlu0 %v2945, 18
    %v3135 = vpop.permute.xlu0 %3134
    %3136 = vrot.lane.b32.xlu0 %v2948, 18
    %v3137 = vpop.permute.xlu0 %3136
    %3138 = vrot.lane.b32.xlu0 %v2950, 18
    %v3139 = vpop.permute.xlu0 %3138
    %3140 = vrot.lane.b32.xlu0 %v2953, 18
    %v3141 = vpop.permute.xlu0 %3140
    %3142 = vrot.lane.b32.xlu0 %v2955, 18
    %v3143 = vpop.permute.xlu0 %3142
    %3144 = vrot.lane.b32.xlu0 %v2958, 18
    %v3145 = vpop.permute.xlu0 %3144
    %3146 = vrot.lane.b32.xlu0 %v2960, 18
    %v3147 = vpop.permute.xlu0 %3146
    %3148 = vrot.lane.b32.xlu0 %v2963, 18
    %v3149 = vpop.permute.xlu0 %3148
    %3150 = vrot.lane.b32.xlu0 %v2965, 18
    %v3151 = vpop.permute.xlu0 %3150
    %3152 = vrot.lane.b32.xlu0 %v2968, 18
    %v3153 = vpop.permute.xlu0 %3152
    %3154 = vrot.lane.b32.xlu0 %v2970, 18
    %v3155 = vpop.permute.xlu0 %3154
    %3156 = vrot.lane.b32.xlu0 %v2973, 18
    %v3157 = vpop.permute.xlu0 %3156
    %3158 = vrot.lane.b32.xlu0 %v2975, 18
    %v3159 = vpop.permute.xlu0 %3158
    %3160 = vrot.lane.b32.xlu0 %v2978, 18
    %v3161 = vpop.permute.xlu0 %3160
    %3162 = vrot.lane.b32.xlu0 %v2980, 18
    %v3163 = vpop.permute.xlu0 %3162
    %3164 = vrot.lane.b32.xlu0 %v2983, 18
    %v3165 = vpop.permute.xlu0 %3164
    %3166 = vrot.lane.b32.xlu0 %v2985, 18
    %v3167 = vpop.permute.xlu0 %3166
    %3168 = vrot.lane.b32.xlu0 %v2988, 18
    %v3169 = vpop.permute.xlu0 %3168
    %3170 = vrot.lane.b32.xlu0 %v2990, 18
    %v3171 = vpop.permute.xlu0 %3170
    %3172 = vrot.lane.b32.xlu0 %v2993, 18
    %v3173 = vpop.permute.xlu0 %3172
    %3174 = vrot.lane.b32.xlu0 %v2995, 18
    %v3175 = vpop.permute.xlu0 %3174
    %3176 = vrot.lane.b32.xlu0 %v2998, 18
    %v3177 = vpop.permute.xlu0 %3176
    %3178 = vrot.lane.b32.xlu0 %v3000, 18
    %v3179 = vpop.permute.xlu0 %3178
    %3180 = vrot.lane.b32.xlu0 %v3003, 18
    %v3181 = vpop.permute.xlu0 %3180
    %3182 = vrot.lane.b32.xlu0 %v3005, 18
    %v3183 = vpop.permute.xlu0 %3182
    %3184 = vrot.lane.b32.xlu0 %v3008, 18
    %v3185 = vpop.permute.xlu0 %3184
    %3186 = vrot.lane.b32.xlu0 %v3010, 18
    %v3187 = vpop.permute.xlu0 %3186
    %3188 = vrot.lane.b32.xlu0 %v3013, 18
    %v3189 = vpop.permute.xlu0 %3188
    %3190 = vrot.lane.b32.xlu0 %v3015, 18
    %v3191 = vpop.permute.xlu0 %3190
    %3192 = vrot.lane.b32.xlu0 %v3018, 18
    %v3193 = vpop.permute.xlu0 %3192
    %3194 = vrot.lane.b32.xlu0 %v3020, 18
    %v3195 = vpop.permute.xlu0 %3194
    %3196 = vrot.lane.b32.xlu0 %v3023, 18
    %v3197 = vpop.permute.xlu0 %3196
    %3198 = vrot.lane.b32.xlu0 %v3025, 18
    %v3199 = vpop.permute.xlu0 %3198
    %3200 = vrot.lane.b32.xlu0 %v3028, 18
    %v3201 = vpop.permute.xlu0 %3200
    %3202 = vrot.lane.b32.xlu0 %v3030, 18
    %v3203 = vpop.permute.xlu0 %3202
    %3204 = vrot.lane.b32.xlu0 %v3033, 18
    %v3205 = vpop.permute.xlu0 %3204
    %3206 = vrot.lane.b32.xlu0 %v3035, 18
    %v3207 = vpop.permute.xlu0 %3206
    %3208 = vrot.lane.b32.xlu0 %v3038, 18
    %v3209 = vpop.permute.xlu0 %3208
    %3210 = vrot.lane.b32.xlu0 %v3040, 18
    %v3211 = vpop.permute.xlu0 %3210
    %3212 = vrot.lane.b32.xlu0 %v3043, 18
    %v3213 = vpop.permute.xlu0 %3212
    %3214 = vrot.lane.b32.xlu0 %v3045, 18
    %v3215 = vpop.permute.xlu0 %3214
    %3216 = vrot.lane.b32.xlu0 %v3048, 18
    %v3217 = vpop.permute.xlu0 %3216
    %3218 = vrot.lane.b32.xlu0 %v3050, 18
    %v3219 = vpop.permute.xlu0 %3218
    %3220 = vrot.lane.b32.xlu0 %v3053, 18
    %v3221 = vpop.permute.xlu0 %3220
    %3222 = vrot.lane.b32.xlu0 %v3055, 18
    %v3223 = vpop.permute.xlu0 %3222
    %v3224 = vadd.f32 %v2747, %v3113
    %v3225 = vadd.f32 %v2748, %v3115
    %v3226 = vadd.f32 %v2750, %v3117
    %v3227 = vadd.f32 %v2751, %v3119
    %v3228 = vadd.f32 %v2753, %v3121
    %v3229 = vadd.f32 %v2754, %v3123
    %v3230 = vadd.f32 %v2756, %v3125
    %v3231 = vadd.f32 %v2757, %v3127
    %v3232 = vadd.f32 %v2759, %v3129
    %v3233 = vadd.f32 %v2760, %v3131
    %v3234 = vadd.f32 %v2762, %v3133
    %v3235 = vadd.f32 %v2763, %v3135
    %v3236 = vadd.f32 %v2765, %v3137
    %v3237 = vadd.f32 %v2766, %v3139
    %v3238 = vadd.f32 %v2768, %v3141
    %v3239 = vadd.f32 %v2769, %v3143
    %v3240 = vadd.f32 %v2771, %v3145
    %v3241 = vadd.f32 %v2772, %v3147
    %v3242 = vadd.f32 %v2774, %v3149
    %v3243 = vadd.f32 %v2775, %v3151
    %v3244 = vadd.f32 %v2777, %v3153
    %v3245 = vadd.f32 %v2778, %v3155
    %v3246 = vadd.f32 %v2780, %v3157
    %v3247 = vadd.f32 %v2781, %v3159
    %v3248 = vadd.f32 %v2783, %v3161
    %v3249 = vadd.f32 %v2784, %v3163
    %v3250 = vadd.f32 %v2786, %v3165
    %v3251 = vadd.f32 %v2787, %v3167
    %v3252 = vadd.f32 %v2789, %v3169
    %v3253 = vadd.f32 %v2790, %v3171
    %v3254 = vadd.f32 %v2792, %v3173
    %v3255 = vadd.f32 %v2793, %v3175
    %v3256 = vadd.f32 %v2795, %v3177
    %v3257 = vadd.f32 %v2796, %v3179
    %v3258 = vadd.f32 %v2798, %v3181
    %v3259 = vadd.f32 %v2799, %v3183
    %v3260 = vadd.f32 %v2801, %v3185
    %v3261 = vadd.f32 %v2802, %v3187
    %v3262 = vadd.f32 %v2804, %v3189
    %v3263 = vadd.f32 %v2805, %v3191
    %v3264 = vadd.f32 %v2807, %v3193
    %v3265 = vadd.f32 %v2808, %v3195
    %v3266 = vadd.f32 %v2810, %v3197
    %v3267 = vadd.f32 %v2811, %v3199
    %v3268 = vadd.f32 %v2813, %v3201
    %v3269 = vadd.f32 %v2814, %v3203
    %v3270 = vadd.f32 %v2816, %v3205
    %v3271 = vadd.f32 %v2817, %v3207
    %v3272 = vadd.f32 %v2819, %v3209
    %v3273 = vadd.f32 %v2820, %v3211
    %v3274 = vadd.f32 %v2822, %v3213
    %v3275 = vadd.f32 %v2823, %v3215
    %v3276 = vadd.f32 %v2825, %v3217
    %v3277 = vadd.f32 %v2826, %v3219
    %v3278 = vadd.f32 %v2828, %v3221
    %v3279 = vadd.f32 %v2829, %v3223
    %vm3280 = vcmask 1045504
    %v3281 = vrot.slane %v2747, 2
    %v3282 = vrot.slane %v2748, 2
    %v3283 = vsel %vm3280, %v3281, %v3282
    %v3284 = vrot.slane %v2749, 2
    %v3285 = vsel %vm3280, %v3282, %v3284
    %v3286 = vrot.slane %v2750, 2
    %v3287 = vrot.slane %v2751, 2
    %v3288 = vsel %vm3280, %v3286, %v3287
    %v3289 = vrot.slane %v2752, 2
    %v3290 = vsel %vm3280, %v3287, %v3289
    %v3291 = vrot.slane %v2753, 2
    %v3292 = vrot.slane %v2754, 2
    %v3293 = vsel %vm3280, %v3291, %v3292
    %v3294 = vrot.slane %v2755, 2
    %v3295 = vsel %vm3280, %v3292, %v3294
    %v3296 = vrot.slane %v2756, 2
    %v3297 = vrot.slane %v2757, 2
    %v3298 = vsel %vm3280, %v3296, %v3297
    %v3299 = vrot.slane %v2758, 2
    %v3300 = vsel %vm3280, %v3297, %v3299
    %v3301 = vrot.slane %v2759, 2
    %v3302 = vrot.slane %v2760, 2
    %v3303 = vsel %vm3280, %v3301, %v3302
    %v3304 = vrot.slane %v2761, 2
    %v3305 = vsel %vm3280, %v3302, %v3304
    %v3306 = vrot.slane %v2762, 2
    %v3307 = vrot.slane %v2763, 2
    %v3308 = vsel %vm3280, %v3306, %v3307
    %v3309 = vrot.slane %v2764, 2
    %v3310 = vsel %vm3280, %v3307, %v3309
    %v3311 = vrot.slane %v2765, 2
    %v3312 = vrot.slane %v2766, 2
    %v3313 = vsel %vm3280, %v3311, %v3312
    %v3314 = vrot.slane %v2767, 2
    %v3315 = vsel %vm3280, %v3312, %v3314
    %v3316 = vrot.slane %v2768, 2
    %v3317 = vrot.slane %v2769, 2
    %v3318 = vsel %vm3280, %v3316, %v3317
    %v3319 = vrot.slane %v2770, 2
    %v3320 = vsel %vm3280, %v3317, %v3319
    %v3321 = vrot.slane %v2771, 2
    %v3322 = vrot.slane %v2772, 2
    %v3323 = vsel %vm3280, %v3321, %v3322
    %v3324 = vrot.slane %v2773, 2
    %v3325 = vsel %vm3280, %v3322, %v3324
    %v3326 = vrot.slane %v2774, 2
    %v3327 = vrot.slane %v2775, 2
    %v3328 = vsel %vm3280, %v3326, %v3327
    %v3329 = vrot.slane %v2776, 2
    %v3330 = vsel %vm3280, %v3327, %v3329
    %v3331 = vrot.slane %v2777, 2
    %v3332 = vrot.slane %v2778, 2
    %v3333 = vsel %vm3280, %v3331, %v3332
    %v3334 = vrot.slane %v2779, 2
    %v3335 = vsel %vm3280, %v3332, %v3334
    %v3336 = vrot.slane %v2780, 2
    %v3337 = vrot.slane %v2781, 2
    %v3338 = vsel %vm3280, %v3336, %v3337
    %v3339 = vrot.slane %v2782, 2
    %v3340 = vsel %vm3280, %v3337, %v3339
    %v3341 = vrot.slane %v2783, 2
    %v3342 = vrot.slane %v2784, 2
    %v3343 = vsel %vm3280, %v3341, %v3342
    %v3344 = vrot.slane %v2785, 2
    %v3345 = vsel %vm3280, %v3342, %v3344
    %v3346 = vrot.slane %v2786, 2
    %v3347 = vrot.slane %v2787, 2
    %v3348 = vsel %vm3280, %v3346, %v3347
    %v3349 = vrot.slane %v2788, 2
    %v3350 = vsel %vm3280, %v3347, %v3349
    %v3351 = vrot.slane %v2789, 2
    %v3352 = vrot.slane %v2790, 2
    %v3353 = vsel %vm3280, %v3351, %v3352
    %v3354 = vrot.slane %v2791, 2
    %v3355 = vsel %vm3280, %v3352, %v3354
    %v3356 = vrot.slane %v2792, 2
    %v3357 = vrot.slane %v2793, 2
    %v3358 = vsel %vm3280, %v3356, %v3357
    %v3359 = vrot.slane %v2794, 2
    %v3360 = vsel %vm3280, %v3357, %v3359
    %v3361 = vrot.slane %v2795, 2
    %v3362 = vrot.slane %v2796, 2
    %v3363 = vsel %vm3280, %v3361, %v3362
    %v3364 = vrot.slane %v2797, 2
    %v3365 = vsel %vm3280, %v3362, %v3364
    %v3366 = vrot.slane %v2798, 2
    %v3367 = vrot.slane %v2799, 2
    %v3368 = vsel %vm3280, %v3366, %v3367
    %v3369 = vrot.slane %v2800, 2
    %v3370 = vsel %vm3280, %v3367, %v3369
    %v3371 = vrot.slane %v2801, 2
    %v3372 = vrot.slane %v2802, 2
    %v3373 = vsel %vm3280, %v3371, %v3372
    %v3374 = vrot.slane %v2803, 2
    %v3375 = vsel %vm3280, %v3372, %v3374
    %v3376 = vrot.slane %v2804, 2
    %v3377 = vrot.slane %v2805, 2
    %v3378 = vsel %vm3280, %v3376, %v3377
    %v3379 = vrot.slane %v2806, 2
    %v3380 = vsel %vm3280, %v3377, %v3379
    %v3381 = vrot.slane %v2807, 2
    %v3382 = vrot.slane %v2808, 2
    %v3383 = vsel %vm3280, %v3381, %v3382
    %v3384 = vrot.slane %v2809, 2
    %v3385 = vsel %vm3280, %v3382, %v3384
    %v3386 = vrot.slane %v2810, 2
    %v3387 = vrot.slane %v2811, 2
    %v3388 = vsel %vm3280, %v3386, %v3387
    %v3389 = vrot.slane %v2812, 2
    %v3390 = vsel %vm3280, %v3387, %v3389
    %v3391 = vrot.slane %v2813, 2
    %v3392 = vrot.slane %v2814, 2
    %v3393 = vsel %vm3280, %v3391, %v3392
    %v3394 = vrot.slane %v2815, 2
    %v3395 = vsel %vm3280, %v3392, %v3394
    %v3396 = vrot.slane %v2816, 2
    %v3397 = vrot.slane %v2817, 2
    %v3398 = vsel %vm3280, %v3396, %v3397
    %v3399 = vrot.slane %v2818, 2
    %v3400 = vsel %vm3280, %v3397, %v3399
    %v3401 = vrot.slane %v2819, 2
    %v3402 = vrot.slane %v2820, 2
    %v3403 = vsel %vm3280, %v3401, %v3402
    %v3404 = vrot.slane %v2821, 2
    %v3405 = vsel %vm3280, %v3402, %v3404
    %v3406 = vrot.slane %v2822, 2
    %v3407 = vrot.slane %v2823, 2
    %v3408 = vsel %vm3280, %v3406, %v3407
    %v3409 = vrot.slane %v2824, 2
    %v3410 = vsel %vm3280, %v3407, %v3409
    %v3411 = vrot.slane %v2825, 2
    %v3412 = vrot.slane %v2826, 2
    %v3413 = vsel %vm3280, %v3411, %v3412
    %v3414 = vrot.slane %v2827, 2
    %v3415 = vsel %vm3280, %v3412, %v3414
    %v3416 = vrot.slane %v2828, 2
    %v3417 = vrot.slane %v2829, 2
    %v3418 = vsel %vm3280, %v3416, %v3417
    %v3419 = vrot.slane %v2830, 2
    %v3420 = vsel %vm3280, %v3417, %v3419
    %3477 = vrot.lane.b32.xlu0 %v3283, 36
    %v3478 = vpop.permute.xlu0 %3477
    %3479 = vrot.lane.b32.xlu0 %v3285, 36
    %v3480 = vpop.permute.xlu0 %3479
    %3481 = vrot.lane.b32.xlu0 %v3288, 36
    %v3482 = vpop.permute.xlu0 %3481
    %3483 = vrot.lane.b32.xlu0 %v3290, 36
    %v3484 = vpop.permute.xlu0 %3483
    %3485 = vrot.lane.b32.xlu0 %v3293, 36
    %v3486 = vpop.permute.xlu0 %3485
    %3487 = vrot.lane.b32.xlu0 %v3295, 36
    %v3488 = vpop.permute.xlu0 %3487
    %3489 = vrot.lane.b32.xlu0 %v3298, 36
    %v3490 = vpop.permute.xlu0 %3489
    %3491 = vrot.lane.b32.xlu0 %v3300, 36
    %v3492 = vpop.permute.xlu0 %3491
    %3493 = vrot.lane.b32.xlu0 %v3303, 36
    %v3494 = vpop.permute.xlu0 %3493
    %3495 = vrot.lane.b32.xlu0 %v3305, 36
    %v3496 = vpop.permute.xlu0 %3495
    %3497 = vrot.lane.b32.xlu0 %v3308, 36
    %v3498 = vpop.permute.xlu0 %3497
    %3499 = vrot.lane.b32.xlu0 %v3310, 36
    %v3500 = vpop.permute.xlu0 %3499
    %3501 = vrot.lane.b32.xlu0 %v3313, 36
    %v3502 = vpop.permute.xlu0 %3501
    %3503 = vrot.lane.b32.xlu0 %v3315, 36
    %v3504 = vpop.permute.xlu0 %3503
    %3505 = vrot.lane.b32.xlu0 %v3318, 36
    %v3506 = vpop.permute.xlu0 %3505
    %3507 = vrot.lane.b32.xlu0 %v3320, 36
    %v3508 = vpop.permute.xlu0 %3507
    %3509 = vrot.lane.b32.xlu0 %v3323, 36
    %v3510 = vpop.permute.xlu0 %3509
    %3511 = vrot.lane.b32.xlu0 %v3325, 36
    %v3512 = vpop.permute.xlu0 %3511
    %3513 = vrot.lane.b32.xlu0 %v3328, 36
    %v3514 = vpop.permute.xlu0 %3513
    %3515 = vrot.lane.b32.xlu0 %v3330, 36
    %v3516 = vpop.permute.xlu0 %3515
    %3517 = vrot.lane.b32.xlu0 %v3333, 36
    %v3518 = vpop.permute.xlu0 %3517
    %3519 = vrot.lane.b32.xlu0 %v3335, 36
    %v3520 = vpop.permute.xlu0 %3519
    %3521 = vrot.lane.b32.xlu0 %v3338, 36
    %v3522 = vpop.permute.xlu0 %3521
    %3523 = vrot.lane.b32.xlu0 %v3340, 36
    %v3524 = vpop.permute.xlu0 %3523
    %3525 = vrot.lane.b32.xlu0 %v3343, 36
    %v3526 = vpop.permute.xlu0 %3525
    %3527 = vrot.lane.b32.xlu0 %v3345, 36
    %v3528 = vpop.permute.xlu0 %3527
    %3529 = vrot.lane.b32.xlu0 %v3348, 36
    %v3530 = vpop.permute.xlu0 %3529
    %3531 = vrot.lane.b32.xlu0 %v3350, 36
    %v3532 = vpop.permute.xlu0 %3531
    %3533 = vrot.lane.b32.xlu0 %v3353, 36
    %v3534 = vpop.permute.xlu0 %3533
    %3535 = vrot.lane.b32.xlu0 %v3355, 36
    %v3536 = vpop.permute.xlu0 %3535
    %3537 = vrot.lane.b32.xlu0 %v3358, 36
    %v3538 = vpop.permute.xlu0 %3537
    %3539 = vrot.lane.b32.xlu0 %v3360, 36
    %v3540 = vpop.permute.xlu0 %3539
    %3541 = vrot.lane.b32.xlu0 %v3363, 36
    %v3542 = vpop.permute.xlu0 %3541
    %3543 = vrot.lane.b32.xlu0 %v3365, 36
    %v3544 = vpop.permute.xlu0 %3543
    %3545 = vrot.lane.b32.xlu0 %v3368, 36
    %v3546 = vpop.permute.xlu0 %3545
    %3547 = vrot.lane.b32.xlu0 %v3370, 36
    %v3548 = vpop.permute.xlu0 %3547
    %3549 = vrot.lane.b32.xlu0 %v3373, 36
    %v3550 = vpop.permute.xlu0 %3549
    %3551 = vrot.lane.b32.xlu0 %v3375, 36
    %v3552 = vpop.permute.xlu0 %3551
    %3553 = vrot.lane.b32.xlu0 %v3378, 36
    %v3554 = vpop.permute.xlu0 %3553
    %3555 = vrot.lane.b32.xlu0 %v3380, 36
    %v3556 = vpop.permute.xlu0 %3555
    %3557 = vrot.lane.b32.xlu0 %v3383, 36
    %v3558 = vpop.permute.xlu0 %3557
    %3559 = vrot.lane.b32.xlu0 %v3385, 36
    %v3560 = vpop.permute.xlu0 %3559
    %3561 = vrot.lane.b32.xlu0 %v3388, 36
    %v3562 = vpop.permute.xlu0 %3561
    %3563 = vrot.lane.b32.xlu0 %v3390, 36
    %v3564 = vpop.permute.xlu0 %3563
    %3565 = vrot.lane.b32.xlu0 %v3393, 36
    %v3566 = vpop.permute.xlu0 %3565
    %3567 = vrot.lane.b32.xlu0 %v3395, 36
    %v3568 = vpop.permute.xlu0 %3567
    %3569 = vrot.lane.b32.xlu0 %v3398, 36
    %v3570 = vpop.permute.xlu0 %3569
    %3571 = vrot.lane.b32.xlu0 %v3400, 36
    %v3572 = vpop.permute.xlu0 %3571
    %3573 = vrot.lane.b32.xlu0 %v3403, 36
    %v3574 = vpop.permute.xlu0 %3573
    %3575 = vrot.lane.b32.xlu0 %v3405, 36
    %v3576 = vpop.permute.xlu0 %3575
    %3577 = vrot.lane.b32.xlu0 %v3408, 36
    %v3578 = vpop.permute.xlu0 %3577
    %3579 = vrot.lane.b32.xlu0 %v3410, 36
    %v3580 = vpop.permute.xlu0 %3579
    %3581 = vrot.lane.b32.xlu0 %v3413, 36
    %v3582 = vpop.permute.xlu0 %3581
    %3583 = vrot.lane.b32.xlu0 %v3415, 36
    %v3584 = vpop.permute.xlu0 %3583
    %3585 = vrot.lane.b32.xlu0 %v3418, 36
    %v3586 = vpop.permute.xlu0 %3585
    %3587 = vrot.lane.b32.xlu0 %v3420, 36
    %v3588 = vpop.permute.xlu0 %3587
    %v3589 = vadd.f32 %v3224, %v3478
    %v3590 = vadd.f32 %v3225, %v3480
    %v3591 = vadd.f32 %v3226, %v3482
    %v3592 = vadd.f32 %v3227, %v3484
    %v3593 = vadd.f32 %v3228, %v3486
    %v3594 = vadd.f32 %v3229, %v3488
    %v3595 = vadd.f32 %v3230, %v3490
    %v3596 = vadd.f32 %v3231, %v3492
    %v3597 = vadd.f32 %v3232, %v3494
    %v3598 = vadd.f32 %v3233, %v3496
    %v3599 = vadd.f32 %v3234, %v3498
    %v3600 = vadd.f32 %v3235, %v3500
    %v3601 = vadd.f32 %v3236, %v3502
    %v3602 = vadd.f32 %v3237, %v3504
    %v3603 = vadd.f32 %v3238, %v3506
    %v3604 = vadd.f32 %v3239, %v3508
    %v3605 = vadd.f32 %v3240, %v3510
    %v3606 = vadd.f32 %v3241, %v3512
    %v3607 = vadd.f32 %v3242, %v3514
    %v3608 = vadd.f32 %v3243, %v3516
    %v3609 = vadd.f32 %v3244, %v3518
    %v3610 = vadd.f32 %v3245, %v3520
    %v3611 = vadd.f32 %v3246, %v3522
    %v3612 = vadd.f32 %v3247, %v3524
    %v3613 = vadd.f32 %v3248, %v3526
    %v3614 = vadd.f32 %v3249, %v3528
    %v3615 = vadd.f32 %v3250, %v3530
    %v3616 = vadd.f32 %v3251, %v3532
    %v3617 = vadd.f32 %v3252, %v3534
    %v3618 = vadd.f32 %v3253, %v3536
    %v3619 = vadd.f32 %v3254, %v3538
    %v3620 = vadd.f32 %v3255, %v3540
    %v3621 = vadd.f32 %v3256, %v3542
    %v3622 = vadd.f32 %v3257, %v3544
    %v3623 = vadd.f32 %v3258, %v3546
    %v3624 = vadd.f32 %v3259, %v3548
    %v3625 = vadd.f32 %v3260, %v3550
    %v3626 = vadd.f32 %v3261, %v3552
    %v3627 = vadd.f32 %v3262, %v3554
    %v3628 = vadd.f32 %v3263, %v3556
    %v3629 = vadd.f32 %v3264, %v3558
    %v3630 = vadd.f32 %v3265, %v3560
    %v3631 = vadd.f32 %v3266, %v3562
    %v3632 = vadd.f32 %v3267, %v3564
    %v3633 = vadd.f32 %v3268, %v3566
    %v3634 = vadd.f32 %v3269, %v3568
    %v3635 = vadd.f32 %v3270, %v3570
    %v3636 = vadd.f32 %v3271, %v3572
    %v3637 = vadd.f32 %v3272, %v3574
    %v3638 = vadd.f32 %v3273, %v3576
    %v3639 = vadd.f32 %v3274, %v3578
    %v3640 = vadd.f32 %v3275, %v3580
    %v3641 = vadd.f32 %v3276, %v3582
    %v3642 = vadd.f32 %v3277, %v3584
    %v3643 = vadd.f32 %v3278, %v3586
    %v3644 = vadd.f32 %v3279, %v3588
    %vm3645 = vcmask 1044480
    %v3646 = vrot.slane %v2747, 3
    %v3647 = vrot.slane %v2748, 3
    %v3648 = vsel %vm3645, %v3646, %v3647
    %v3649 = vrot.slane %v2749, 3
    %v3650 = vsel %vm3645, %v3647, %v3649
    %v3651 = vrot.slane %v2750, 3
    %v3652 = vrot.slane %v2751, 3
    %v3653 = vsel %vm3645, %v3651, %v3652
    %v3654 = vrot.slane %v2752, 3
    %v3655 = vsel %vm3645, %v3652, %v3654
    %v3656 = vrot.slane %v2753, 3
    %v3657 = vrot.slane %v2754, 3
    %v3658 = vsel %vm3645, %v3656, %v3657
    %v3659 = vrot.slane %v2755, 3
    %v3660 = vsel %vm3645, %v3657, %v3659
    %v3661 = vrot.slane %v2756, 3
    %v3662 = vrot.slane %v2757, 3
    %v3663 = vsel %vm3645, %v3661, %v3662
    %v3664 = vrot.slane %v2758, 3
    %v3665 = vsel %vm3645, %v3662, %v3664
    %v3666 = vrot.slane %v2759, 3
    %v3667 = vrot.slane %v2760, 3
    %v3668 = vsel %vm3645, %v3666, %v3667
    %v3669 = vrot.slane %v2761, 3
    %v3670 = vsel %vm3645, %v3667, %v3669
    %v3671 = vrot.slane %v2762, 3
    %v3672 = vrot.slane %v2763, 3
    %v3673 = vsel %vm3645, %v3671, %v3672
    %v3674 = vrot.slane %v2764, 3
    %v3675 = vsel %vm3645, %v3672, %v3674
    %v3676 = vrot.slane %v2765, 3
    %v3677 = vrot.slane %v2766, 3
    %v3678 = vsel %vm3645, %v3676, %v3677
    %v3679 = vrot.slane %v2767, 3
    %v3680 = vsel %vm3645, %v3677, %v3679
    %v3681 = vrot.slane %v2768, 3
    %v3682 = vrot.slane %v2769, 3
    %v3683 = vsel %vm3645, %v3681, %v3682
    %v3684 = vrot.slane %v2770, 3
    %v3685 = vsel %vm3645, %v3682, %v3684
    %v3686 = vrot.slane %v2771, 3
    %v3687 = vrot.slane %v2772, 3
    %v3688 = vsel %vm3645, %v3686, %v3687
    %v3689 = vrot.slane %v2773, 3
    %v3690 = vsel %vm3645, %v3687, %v3689
    %v3691 = vrot.slane %v2774, 3
    %v3692 = vrot.slane %v2775, 3
    %v3693 = vsel %vm3645, %v3691, %v3692
    %v3694 = vrot.slane %v2776, 3
    %v3695 = vsel %vm3645, %v3692, %v3694
    %v3696 = vrot.slane %v2777, 3
    %v3697 = vrot.slane %v2778, 3
    %v3698 = vsel %vm3645, %v3696, %v3697
    %v3699 = vrot.slane %v2779, 3
    %v3700 = vsel %vm3645, %v3697, %v3699
    %v3701 = vrot.slane %v2780, 3
    %v3702 = vrot.slane %v2781, 3
    %v3703 = vsel %vm3645, %v3701, %v3702
    %v3704 = vrot.slane %v2782, 3
    %v3705 = vsel %vm3645, %v3702, %v3704
    %v3706 = vrot.slane %v2783, 3
    %v3707 = vrot.slane %v2784, 3
    %v3708 = vsel %vm3645, %v3706, %v3707
    %v3709 = vrot.slane %v2785, 3
    %v3710 = vsel %vm3645, %v3707, %v3709
    %v3711 = vrot.slane %v2786, 3
    %v3712 = vrot.slane %v2787, 3
    %v3713 = vsel %vm3645, %v3711, %v3712
    %v3714 = vrot.slane %v2788, 3
    %v3715 = vsel %vm3645, %v3712, %v3714
    %v3716 = vrot.slane %v2789, 3
    %v3717 = vrot.slane %v2790, 3
    %v3718 = vsel %vm3645, %v3716, %v3717
    %v3719 = vrot.slane %v2791, 3
    %v3720 = vsel %vm3645, %v3717, %v3719
    %v3721 = vrot.slane %v2792, 3
    %v3722 = vrot.slane %v2793, 3
    %v3723 = vsel %vm3645, %v3721, %v3722
    %v3724 = vrot.slane %v2794, 3
    %v3725 = vsel %vm3645, %v3722, %v3724
    %v3726 = vrot.slane %v2795, 3
    %v3727 = vrot.slane %v2796, 3
    %v3728 = vsel %vm3645, %v3726, %v3727
    %v3729 = vrot.slane %v2797, 3
    %v3730 = vsel %vm3645, %v3727, %v3729
    %v3731 = vrot.slane %v2798, 3
    %v3732 = vrot.slane %v2799, 3
    %v3733 = vsel %vm3645, %v3731, %v3732
    %v3734 = vrot.slane %v2800, 3
    %v3735 = vsel %vm3645, %v3732, %v3734
    %v3736 = vrot.slane %v2801, 3
    %v3737 = vrot.slane %v2802, 3
    %v3738 = vsel %vm3645, %v3736, %v3737
    %v3739 = vrot.slane %v2803, 3
    %v3740 = vsel %vm3645, %v3737, %v3739
    %v3741 = vrot.slane %v2804, 3
    %v3742 = vrot.slane %v2805, 3
    %v3743 = vsel %vm3645, %v3741, %v3742
    %v3744 = vrot.slane %v2806, 3
    %v3745 = vsel %vm3645, %v3742, %v3744
    %v3746 = vrot.slane %v2807, 3
    %v3747 = vrot.slane %v2808, 3
    %v3748 = vsel %vm3645, %v3746, %v3747
    %v3749 = vrot.slane %v2809, 3
    %v3750 = vsel %vm3645, %v3747, %v3749
    %v3751 = vrot.slane %v2810, 3
    %v3752 = vrot.slane %v2811, 3
    %v3753 = vsel %vm3645, %v3751, %v3752
    %v3754 = vrot.slane %v2812, 3
    %v3755 = vsel %vm3645, %v3752, %v3754
    %v3756 = vrot.slane %v2813, 3
    %v3757 = vrot.slane %v2814, 3
    %v3758 = vsel %vm3645, %v3756, %v3757
    %v3759 = vrot.slane %v2815, 3
    %v3760 = vsel %vm3645, %v3757, %v3759
    %v3761 = vrot.slane %v2816, 3
    %v3762 = vrot.slane %v2817, 3
    %v3763 = vsel %vm3645, %v3761, %v3762
    %v3764 = vrot.slane %v2818, 3
    %v3765 = vsel %vm3645, %v3762, %v3764
    %v3766 = vrot.slane %v2819, 3
    %v3767 = vrot.slane %v2820, 3
    %v3768 = vsel %vm3645, %v3766, %v3767
    %v3769 = vrot.slane %v2821, 3
    %v3770 = vsel %vm3645, %v3767, %v3769
    %v3771 = vrot.slane %v2822, 3
    %v3772 = vrot.slane %v2823, 3
    %v3773 = vsel %vm3645, %v3771, %v3772
    %v3774 = vrot.slane %v2824, 3
    %v3775 = vsel %vm3645, %v3772, %v3774
    %v3776 = vrot.slane %v2825, 3
    %v3777 = vrot.slane %v2826, 3
    %v3778 = vsel %vm3645, %v3776, %v3777
    %v3779 = vrot.slane %v2827, 3
    %v3780 = vsel %vm3645, %v3777, %v3779
    %v3781 = vrot.slane %v2828, 3
    %v3782 = vrot.slane %v2829, 3
    %v3783 = vsel %vm3645, %v3781, %v3782
    %v3784 = vrot.slane %v2830, 3
    %v3785 = vsel %vm3645, %v3782, %v3784
    %3842 = vrot.lane.b32.xlu0 %v3648, 54
    %v3843 = vpop.permute.xlu0 %3842
    %3844 = vrot.lane.b32.xlu0 %v3650, 54
    %v3845 = vpop.permute.xlu0 %3844
    %3846 = vrot.lane.b32.xlu0 %v3653, 54
    %v3847 = vpop.permute.xlu0 %3846
    %3848 = vrot.lane.b32.xlu0 %v3655, 54
    %v3849 = vpop.permute.xlu0 %3848
    %3850 = vrot.lane.b32.xlu0 %v3658, 54
    %v3851 = vpop.permute.xlu0 %3850
    %3852 = vrot.lane.b32.xlu0 %v3660, 54
    %v3853 = vpop.permute.xlu0 %3852
    %3854 = vrot.lane.b32.xlu0 %v3663, 54
    %v3855 = vpop.permute.xlu0 %3854
    %3856 = vrot.lane.b32.xlu0 %v3665, 54
    %v3857 = vpop.permute.xlu0 %3856
    %3858 = vrot.lane.b32.xlu0 %v3668, 54
    %v3859 = vpop.permute.xlu0 %3858
    %3860 = vrot.lane.b32.xlu0 %v3670, 54
    %v3861 = vpop.permute.xlu0 %3860
    %3862 = vrot.lane.b32.xlu0 %v3673, 54
    %v3863 = vpop.permute.xlu0 %3862
    %3864 = vrot.lane.b32.xlu0 %v3675, 54
    %v3865 = vpop.permute.xlu0 %3864
    %3866 = vrot.lane.b32.xlu0 %v3678, 54
    %v3867 = vpop.permute.xlu0 %3866
    %3868 = vrot.lane.b32.xlu0 %v3680, 54
    %v3869 = vpop.permute.xlu0 %3868
    %3870 = vrot.lane.b32.xlu0 %v3683, 54
    %v3871 = vpop.permute.xlu0 %3870
    %3872 = vrot.lane.b32.xlu0 %v3685, 54
    %v3873 = vpop.permute.xlu0 %3872
    %3874 = vrot.lane.b32.xlu0 %v3688, 54
    %v3875 = vpop.permute.xlu0 %3874
    %3876 = vrot.lane.b32.xlu0 %v3690, 54
    %v3877 = vpop.permute.xlu0 %3876
    %3878 = vrot.lane.b32.xlu0 %v3693, 54
    %v3879 = vpop.permute.xlu0 %3878
    %3880 = vrot.lane.b32.xlu0 %v3695, 54
    %v3881 = vpop.permute.xlu0 %3880
    %3882 = vrot.lane.b32.xlu0 %v3698, 54
    %v3883 = vpop.permute.xlu0 %3882
    %3884 = vrot.lane.b32.xlu0 %v3700, 54
    %v3885 = vpop.permute.xlu0 %3884
    %3886 = vrot.lane.b32.xlu0 %v3703, 54
    %v3887 = vpop.permute.xlu0 %3886
    %3888 = vrot.lane.b32.xlu0 %v3705, 54
    %v3889 = vpop.permute.xlu0 %3888
    %3890 = vrot.lane.b32.xlu0 %v3708, 54
    %v3891 = vpop.permute.xlu0 %3890
    %3892 = vrot.lane.b32.xlu0 %v3710, 54
    %v3893 = vpop.permute.xlu0 %3892
    %3894 = vrot.lane.b32.xlu0 %v3713, 54
    %v3895 = vpop.permute.xlu0 %3894
    %3896 = vrot.lane.b32.xlu0 %v3715, 54
    %v3897 = vpop.permute.xlu0 %3896
    %3898 = vrot.lane.b32.xlu0 %v3718, 54
    %v3899 = vpop.permute.xlu0 %3898
    %3900 = vrot.lane.b32.xlu0 %v3720, 54
    %v3901 = vpop.permute.xlu0 %3900
    %3902 = vrot.lane.b32.xlu0 %v3723, 54
    %v3903 = vpop.permute.xlu0 %3902
    %3904 = vrot.lane.b32.xlu0 %v3725, 54
    %v3905 = vpop.permute.xlu0 %3904
    %3906 = vrot.lane.b32.xlu0 %v3728, 54
    %v3907 = vpop.permute.xlu0 %3906
    %3908 = vrot.lane.b32.xlu0 %v3730, 54
    %v3909 = vpop.permute.xlu0 %3908
    %3910 = vrot.lane.b32.xlu0 %v3733, 54
    %v3911 = vpop.permute.xlu0 %3910
    %3912 = vrot.lane.b32.xlu0 %v3735, 54
    %v3913 = vpop.permute.xlu0 %3912
    %3914 = vrot.lane.b32.xlu0 %v3738, 54
    %v3915 = vpop.permute.xlu0 %3914
    %3916 = vrot.lane.b32.xlu0 %v3740, 54
    %v3917 = vpop.permute.xlu0 %3916
    %3918 = vrot.lane.b32.xlu0 %v3743, 54
    %v3919 = vpop.permute.xlu0 %3918
    %3920 = vrot.lane.b32.xlu0 %v3745, 54
    %v3921 = vpop.permute.xlu0 %3920
    %3922 = vrot.lane.b32.xlu0 %v3748, 54
    %v3923 = vpop.permute.xlu0 %3922
    %3924 = vrot.lane.b32.xlu0 %v3750, 54
    %v3925 = vpop.permute.xlu0 %3924
    %3926 = vrot.lane.b32.xlu0 %v3753, 54
    %v3927 = vpop.permute.xlu0 %3926
    %3928 = vrot.lane.b32.xlu0 %v3755, 54
    %v3929 = vpop.permute.xlu0 %3928
    %3930 = vrot.lane.b32.xlu0 %v3758, 54
    %v3931 = vpop.permute.xlu0 %3930
    %3932 = vrot.lane.b32.xlu0 %v3760, 54
    %v3933 = vpop.permute.xlu0 %3932
    %3934 = vrot.lane.b32.xlu0 %v3763, 54
    %v3935 = vpop.permute.xlu0 %3934
    %3936 = vrot.lane.b32.xlu0 %v3765, 54
    %v3937 = vpop.permute.xlu0 %3936
    %3938 = vrot.lane.b32.xlu0 %v3768, 54
    %v3939 = vpop.permute.xlu0 %3938
    %3940 = vrot.lane.b32.xlu0 %v3770, 54
    %v3941 = vpop.permute.xlu0 %3940
    %3942 = vrot.lane.b32.xlu0 %v3773, 54
    %v3943 = vpop.permute.xlu0 %3942
    %3944 = vrot.lane.b32.xlu0 %v3775, 54
    %v3945 = vpop.permute.xlu0 %3944
    %3946 = vrot.lane.b32.xlu0 %v3778, 54
    %v3947 = vpop.permute.xlu0 %3946
    %3948 = vrot.lane.b32.xlu0 %v3780, 54
    %v3949 = vpop.permute.xlu0 %3948
    %3950 = vrot.lane.b32.xlu0 %v3783, 54
    %v3951 = vpop.permute.xlu0 %3950
    %3952 = vrot.lane.b32.xlu0 %v3785, 54
    %v3953 = vpop.permute.xlu0 %3952
    %v3954 = vadd.f32 %v3589, %v3843
    %v3955 = vadd.f32 %v3590, %v3845
    %v3956 = vadd.f32 %v3591, %v3847
    %v3957 = vadd.f32 %v3592, %v3849
    %v3958 = vadd.f32 %v3593, %v3851
    %v3959 = vadd.f32 %v3594, %v3853
    %v3960 = vadd.f32 %v3595, %v3855
    %v3961 = vadd.f32 %v3596, %v3857
    %v3962 = vadd.f32 %v3597, %v3859
    %v3963 = vadd.f32 %v3598, %v3861
    %v3964 = vadd.f32 %v3599, %v3863
    %v3965 = vadd.f32 %v3600, %v3865
    %v3966 = vadd.f32 %v3601, %v3867
    %v3967 = vadd.f32 %v3602, %v3869
    %v3968 = vadd.f32 %v3603, %v3871
    %v3969 = vadd.f32 %v3604, %v3873
    %v3970 = vadd.f32 %v3605, %v3875
    %v3971 = vadd.f32 %v3606, %v3877
    %v3972 = vadd.f32 %v3607, %v3879
    %v3973 = vadd.f32 %v3608, %v3881
    %v3974 = vadd.f32 %v3609, %v3883
    %v3975 = vadd.f32 %v3610, %v3885
    %v3976 = vadd.f32 %v3611, %v3887
    %v3977 = vadd.f32 %v3612, %v3889
    %v3978 = vadd.f32 %v3613, %v3891
    %v3979 = vadd.f32 %v3614, %v3893
    %v3980 = vadd.f32 %v3615, %v3895
    %v3981 = vadd.f32 %v3616, %v3897
    %v3982 = vadd.f32 %v3617, %v3899
    %v3983 = vadd.f32 %v3618, %v3901
    %v3984 = vadd.f32 %v3619, %v3903
    %v3985 = vadd.f32 %v3620, %v3905
    %v3986 = vadd.f32 %v3621, %v3907
    %v3987 = vadd.f32 %v3622, %v3909
    %v3988 = vadd.f32 %v3623, %v3911
    %v3989 = vadd.f32 %v3624, %v3913
    %v3990 = vadd.f32 %v3625, %v3915
    %v3991 = vadd.f32 %v3626, %v3917
    %v3992 = vadd.f32 %v3627, %v3919
    %v3993 = vadd.f32 %v3628, %v3921
    %v3994 = vadd.f32 %v3629, %v3923
    %v3995 = vadd.f32 %v3630, %v3925
    %v3996 = vadd.f32 %v3631, %v3927
    %v3997 = vadd.f32 %v3632, %v3929
    %v3998 = vadd.f32 %v3633, %v3931
    %v3999 = vadd.f32 %v3634, %v3933
    %v4000 = vadd.f32 %v3635, %v3935
    %v4001 = vadd.f32 %v3636, %v3937
    %v4002 = vadd.f32 %v3637, %v3939
    %v4003 = vadd.f32 %v3638, %v3941
    %v4004 = vadd.f32 %v3639, %v3943
    %v4005 = vadd.f32 %v3640, %v3945
    %v4006 = vadd.f32 %v3641, %v3947
    %v4007 = vadd.f32 %v3642, %v3949
    %v4008 = vadd.f32 %v3643, %v3951
    %v4009 = vadd.f32 %v3644, %v3953
    %vm4010 = vcmask 1043456
    %v4011 = vrot.slane %v2747, 4
    %v4012 = vrot.slane %v2748, 4
    %v4013 = vsel %vm4010, %v4011, %v4012
    %v4014 = vrot.slane %v2749, 4
    %v4015 = vsel %vm4010, %v4012, %v4014
    %v4016 = vrot.slane %v2750, 4
    %v4017 = vrot.slane %v2751, 4
    %v4018 = vsel %vm4010, %v4016, %v4017
    %v4019 = vrot.slane %v2752, 4
    %v4020 = vsel %vm4010, %v4017, %v4019
    %v4021 = vrot.slane %v2753, 4
    %v4022 = vrot.slane %v2754, 4
    %v4023 = vsel %vm4010, %v4021, %v4022
    %v4024 = vrot.slane %v2755, 4
    %v4025 = vsel %vm4010, %v4022, %v4024
    %v4026 = vrot.slane %v2756, 4
    %v4027 = vrot.slane %v2757, 4
    %v4028 = vsel %vm4010, %v4026, %v4027
    %v4029 = vrot.slane %v2758, 4
    %v4030 = vsel %vm4010, %v4027, %v4029
    %v4031 = vrot.slane %v2759, 4
    %v4032 = vrot.slane %v2760, 4
    %v4033 = vsel %vm4010, %v4031, %v4032
    %v4034 = vrot.slane %v2761, 4
    %v4035 = vsel %vm4010, %v4032, %v4034
    %v4036 = vrot.slane %v2762, 4
    %v4037 = vrot.slane %v2763, 4
    %v4038 = vsel %vm4010, %v4036, %v4037
    %v4039 = vrot.slane %v2764, 4
    %v4040 = vsel %vm4010, %v4037, %v4039
    %v4041 = vrot.slane %v2765, 4
    %v4042 = vrot.slane %v2766, 4
    %v4043 = vsel %vm4010, %v4041, %v4042
    %v4044 = vrot.slane %v2767, 4
    %v4045 = vsel %vm4010, %v4042, %v4044
    %v4046 = vrot.slane %v2768, 4
    %v4047 = vrot.slane %v2769, 4
    %v4048 = vsel %vm4010, %v4046, %v4047
    %v4049 = vrot.slane %v2770, 4
    %v4050 = vsel %vm4010, %v4047, %v4049
    %v4051 = vrot.slane %v2771, 4
    %v4052 = vrot.slane %v2772, 4
    %v4053 = vsel %vm4010, %v4051, %v4052
    %v4054 = vrot.slane %v2773, 4
    %v4055 = vsel %vm4010, %v4052, %v4054
    %v4056 = vrot.slane %v2774, 4
    %v4057 = vrot.slane %v2775, 4
    %v4058 = vsel %vm4010, %v4056, %v4057
    %v4059 = vrot.slane %v2776, 4
    %v4060 = vsel %vm4010, %v4057, %v4059
    %v4061 = vrot.slane %v2777, 4
    %v4062 = vrot.slane %v2778, 4
    %v4063 = vsel %vm4010, %v4061, %v4062
    %v4064 = vrot.slane %v2779, 4
    %v4065 = vsel %vm4010, %v4062, %v4064
    %v4066 = vrot.slane %v2780, 4
    %v4067 = vrot.slane %v2781, 4
    %v4068 = vsel %vm4010, %v4066, %v4067
    %v4069 = vrot.slane %v2782, 4
    %v4070 = vsel %vm4010, %v4067, %v4069
    %v4071 = vrot.slane %v2783, 4
    %v4072 = vrot.slane %v2784, 4
    %v4073 = vsel %vm4010, %v4071, %v4072
    %v4074 = vrot.slane %v2785, 4
    %v4075 = vsel %vm4010, %v4072, %v4074
    %v4076 = vrot.slane %v2786, 4
    %v4077 = vrot.slane %v2787, 4
    %v4078 = vsel %vm4010, %v4076, %v4077
    %v4079 = vrot.slane %v2788, 4
    %v4080 = vsel %vm4010, %v4077, %v4079
    %v4081 = vrot.slane %v2789, 4
    %v4082 = vrot.slane %v2790, 4
    %v4083 = vsel %vm4010, %v4081, %v4082
    %v4084 = vrot.slane %v2791, 4
    %v4085 = vsel %vm4010, %v4082, %v4084
    %v4086 = vrot.slane %v2792, 4
    %v4087 = vrot.slane %v2793, 4
    %v4088 = vsel %vm4010, %v4086, %v4087
    %v4089 = vrot.slane %v2794, 4
    %v4090 = vsel %vm4010, %v4087, %v4089
    %v4091 = vrot.slane %v2795, 4
    %v4092 = vrot.slane %v2796, 4
    %v4093 = vsel %vm4010, %v4091, %v4092
    %v4094 = vrot.slane %v2797, 4
    %v4095 = vsel %vm4010, %v4092, %v4094
    %v4096 = vrot.slane %v2798, 4
    %v4097 = vrot.slane %v2799, 4
    %v4098 = vsel %vm4010, %v4096, %v4097
    %v4099 = vrot.slane %v2800, 4
    %v4100 = vsel %vm4010, %v4097, %v4099
    %v4101 = vrot.slane %v2801, 4
    %v4102 = vrot.slane %v2802, 4
    %v4103 = vsel %vm4010, %v4101, %v4102
    %v4104 = vrot.slane %v2803, 4
    %v4105 = vsel %vm4010, %v4102, %v4104
    %v4106 = vrot.slane %v2804, 4
    %v4107 = vrot.slane %v2805, 4
    %v4108 = vsel %vm4010, %v4106, %v4107
    %v4109 = vrot.slane %v2806, 4
    %v4110 = vsel %vm4010, %v4107, %v4109
    %v4111 = vrot.slane %v2807, 4
    %v4112 = vrot.slane %v2808, 4
    %v4113 = vsel %vm4010, %v4111, %v4112
    %v4114 = vrot.slane %v2809, 4
    %v4115 = vsel %vm4010, %v4112, %v4114
    %v4116 = vrot.slane %v2810, 4
    %v4117 = vrot.slane %v2811, 4
    %v4118 = vsel %vm4010, %v4116, %v4117
    %v4119 = vrot.slane %v2812, 4
    %v4120 = vsel %vm4010, %v4117, %v4119
    %v4121 = vrot.slane %v2813, 4
    %v4122 = vrot.slane %v2814, 4
    %v4123 = vsel %vm4010, %v4121, %v4122
    %v4124 = vrot.slane %v2815, 4
    %v4125 = vsel %vm4010, %v4122, %v4124
    %v4126 = vrot.slane %v2816, 4
    %v4127 = vrot.slane %v2817, 4
    %v4128 = vsel %vm4010, %v4126, %v4127
    %v4129 = vrot.slane %v2818, 4
    %v4130 = vsel %vm4010, %v4127, %v4129
    %v4131 = vrot.slane %v2819, 4
    %v4132 = vrot.slane %v2820, 4
    %v4133 = vsel %vm4010, %v4131, %v4132
    %v4134 = vrot.slane %v2821, 4
    %v4135 = vsel %vm4010, %v4132, %v4134
    %v4136 = vrot.slane %v2822, 4
    %v4137 = vrot.slane %v2823, 4
    %v4138 = vsel %vm4010, %v4136, %v4137
    %v4139 = vrot.slane %v2824, 4
    %v4140 = vsel %vm4010, %v4137, %v4139
    %v4141 = vrot.slane %v2825, 4
    %v4142 = vrot.slane %v2826, 4
    %v4143 = vsel %vm4010, %v4141, %v4142
    %v4144 = vrot.slane %v2827, 4
    %v4145 = vsel %vm4010, %v4142, %v4144
    %v4146 = vrot.slane %v2828, 4
    %v4147 = vrot.slane %v2829, 4
    %v4148 = vsel %vm4010, %v4146, %v4147
    %v4149 = vrot.slane %v2830, 4
    %v4150 = vsel %vm4010, %v4147, %v4149
    %4207 = vrot.lane.b32.xlu0 %v4013, 72
    %v4208 = vpop.permute.xlu0 %4207
    %4209 = vrot.lane.b32.xlu0 %v4015, 72
    %v4210 = vpop.permute.xlu0 %4209
    %4211 = vrot.lane.b32.xlu0 %v4018, 72
    %v4212 = vpop.permute.xlu0 %4211
    %4213 = vrot.lane.b32.xlu0 %v4020, 72
    %v4214 = vpop.permute.xlu0 %4213
    %4215 = vrot.lane.b32.xlu0 %v4023, 72
    %v4216 = vpop.permute.xlu0 %4215
    %4217 = vrot.lane.b32.xlu0 %v4025, 72
    %v4218 = vpop.permute.xlu0 %4217
    %4219 = vrot.lane.b32.xlu0 %v4028, 72
    %v4220 = vpop.permute.xlu0 %4219
    %4221 = vrot.lane.b32.xlu0 %v4030, 72
    %v4222 = vpop.permute.xlu0 %4221
    %4223 = vrot.lane.b32.xlu0 %v4033, 72
    %v4224 = vpop.permute.xlu0 %4223
    %4225 = vrot.lane.b32.xlu0 %v4035, 72
    %v4226 = vpop.permute.xlu0 %4225
    %4227 = vrot.lane.b32.xlu0 %v4038, 72
    %v4228 = vpop.permute.xlu0 %4227
    %4229 = vrot.lane.b32.xlu0 %v4040, 72
    %v4230 = vpop.permute.xlu0 %4229
    %4231 = vrot.lane.b32.xlu0 %v4043, 72
    %v4232 = vpop.permute.xlu0 %4231
    %4233 = vrot.lane.b32.xlu0 %v4045, 72
    %v4234 = vpop.permute.xlu0 %4233
    %4235 = vrot.lane.b32.xlu0 %v4048, 72
    %v4236 = vpop.permute.xlu0 %4235
    %4237 = vrot.lane.b32.xlu0 %v4050, 72
    %v4238 = vpop.permute.xlu0 %4237
    %4239 = vrot.lane.b32.xlu0 %v4053, 72
    %v4240 = vpop.permute.xlu0 %4239
    %4241 = vrot.lane.b32.xlu0 %v4055, 72
    %v4242 = vpop.permute.xlu0 %4241
    %4243 = vrot.lane.b32.xlu0 %v4058, 72
    %v4244 = vpop.permute.xlu0 %4243
    %4245 = vrot.lane.b32.xlu0 %v4060, 72
    %v4246 = vpop.permute.xlu0 %4245
    %4247 = vrot.lane.b32.xlu0 %v4063, 72
    %v4248 = vpop.permute.xlu0 %4247
    %4249 = vrot.lane.b32.xlu0 %v4065, 72
    %v4250 = vpop.permute.xlu0 %4249
    %4251 = vrot.lane.b32.xlu0 %v4068, 72
    %v4252 = vpop.permute.xlu0 %4251
    %4253 = vrot.lane.b32.xlu0 %v4070, 72
    %v4254 = vpop.permute.xlu0 %4253
    %4255 = vrot.lane.b32.xlu0 %v4073, 72
    %v4256 = vpop.permute.xlu0 %4255
    %4257 = vrot.lane.b32.xlu0 %v4075, 72
    %v4258 = vpop.permute.xlu0 %4257
    %4259 = vrot.lane.b32.xlu0 %v4078, 72
    %v4260 = vpop.permute.xlu0 %4259
    %4261 = vrot.lane.b32.xlu0 %v4080, 72
    %v4262 = vpop.permute.xlu0 %4261
    %4263 = vrot.lane.b32.xlu0 %v4083, 72
    %v4264 = vpop.permute.xlu0 %4263
    %4265 = vrot.lane.b32.xlu0 %v4085, 72
    %v4266 = vpop.permute.xlu0 %4265
    %4267 = vrot.lane.b32.xlu0 %v4088, 72
    %v4268 = vpop.permute.xlu0 %4267
    %4269 = vrot.lane.b32.xlu0 %v4090, 72
    %v4270 = vpop.permute.xlu0 %4269
    %4271 = vrot.lane.b32.xlu0 %v4093, 72
    %v4272 = vpop.permute.xlu0 %4271
    %4273 = vrot.lane.b32.xlu0 %v4095, 72
    %v4274 = vpop.permute.xlu0 %4273
    %4275 = vrot.lane.b32.xlu0 %v4098, 72
    %v4276 = vpop.permute.xlu0 %4275
    %4277 = vrot.lane.b32.xlu0 %v4100, 72
    %v4278 = vpop.permute.xlu0 %4277
    %4279 = vrot.lane.b32.xlu0 %v4103, 72
    %v4280 = vpop.permute.xlu0 %4279
    %4281 = vrot.lane.b32.xlu0 %v4105, 72
    %v4282 = vpop.permute.xlu0 %4281
    %4283 = vrot.lane.b32.xlu0 %v4108, 72
    %v4284 = vpop.permute.xlu0 %4283
    %4285 = vrot.lane.b32.xlu0 %v4110, 72
    %v4286 = vpop.permute.xlu0 %4285
    %4287 = vrot.lane.b32.xlu0 %v4113, 72
    %v4288 = vpop.permute.xlu0 %4287
    %4289 = vrot.lane.b32.xlu0 %v4115, 72
    %v4290 = vpop.permute.xlu0 %4289
    %4291 = vrot.lane.b32.xlu0 %v4118, 72
    %v4292 = vpop.permute.xlu0 %4291
    %4293 = vrot.lane.b32.xlu0 %v4120, 72
    %v4294 = vpop.permute.xlu0 %4293
    %4295 = vrot.lane.b32.xlu0 %v4123, 72
    %v4296 = vpop.permute.xlu0 %4295
    %4297 = vrot.lane.b32.xlu0 %v4125, 72
    %v4298 = vpop.permute.xlu0 %4297
    %4299 = vrot.lane.b32.xlu0 %v4128, 72
    %v4300 = vpop.permute.xlu0 %4299
    %4301 = vrot.lane.b32.xlu0 %v4130, 72
    %v4302 = vpop.permute.xlu0 %4301
    %4303 = vrot.lane.b32.xlu0 %v4133, 72
    %v4304 = vpop.permute.xlu0 %4303
    %4305 = vrot.lane.b32.xlu0 %v4135, 72
    %v4306 = vpop.permute.xlu0 %4305
    %4307 = vrot.lane.b32.xlu0 %v4138, 72
    %v4308 = vpop.permute.xlu0 %4307
    %4309 = vrot.lane.b32.xlu0 %v4140, 72
    %v4310 = vpop.permute.xlu0 %4309
    %4311 = vrot.lane.b32.xlu0 %v4143, 72
    %v4312 = vpop.permute.xlu0 %4311
    %4313 = vrot.lane.b32.xlu0 %v4145, 72
    %v4314 = vpop.permute.xlu0 %4313
    %4315 = vrot.lane.b32.xlu0 %v4148, 72
    %v4316 = vpop.permute.xlu0 %4315
    %4317 = vrot.lane.b32.xlu0 %v4150, 72
    %v4318 = vpop.permute.xlu0 %4317
    %v4319 = vadd.f32 %v3954, %v4208
    %v4320 = vadd.f32 %v3955, %v4210
    %v4321 = vadd.f32 %v3956, %v4212
    %v4322 = vadd.f32 %v3957, %v4214
    %v4323 = vadd.f32 %v3958, %v4216
    %v4324 = vadd.f32 %v3959, %v4218
    %v4325 = vadd.f32 %v3960, %v4220
    %v4326 = vadd.f32 %v3961, %v4222
    %v4327 = vadd.f32 %v3962, %v4224
    %v4328 = vadd.f32 %v3963, %v4226
    %v4329 = vadd.f32 %v3964, %v4228
    %v4330 = vadd.f32 %v3965, %v4230
    %v4331 = vadd.f32 %v3966, %v4232
    %v4332 = vadd.f32 %v3967, %v4234
    %v4333 = vadd.f32 %v3968, %v4236
    %v4334 = vadd.f32 %v3969, %v4238
    %v4335 = vadd.f32 %v3970, %v4240
    %v4336 = vadd.f32 %v3971, %v4242
    %v4337 = vadd.f32 %v3972, %v4244
    %v4338 = vadd.f32 %v3973, %v4246
    %v4339 = vadd.f32 %v3974, %v4248
    %v4340 = vadd.f32 %v3975, %v4250
    %v4341 = vadd.f32 %v3976, %v4252
    %v4342 = vadd.f32 %v3977, %v4254
    %v4343 = vadd.f32 %v3978, %v4256
    %v4344 = vadd.f32 %v3979, %v4258
    %v4345 = vadd.f32 %v3980, %v4260
    %v4346 = vadd.f32 %v3981, %v4262
    %v4347 = vadd.f32 %v3982, %v4264
    %v4348 = vadd.f32 %v3983, %v4266
    %v4349 = vadd.f32 %v3984, %v4268
    %v4350 = vadd.f32 %v3985, %v4270
    %v4351 = vadd.f32 %v3986, %v4272
    %v4352 = vadd.f32 %v3987, %v4274
    %v4353 = vadd.f32 %v3988, %v4276
    %v4354 = vadd.f32 %v3989, %v4278
    %v4355 = vadd.f32 %v3990, %v4280
    %v4356 = vadd.f32 %v3991, %v4282
    %v4357 = vadd.f32 %v3992, %v4284
    %v4358 = vadd.f32 %v3993, %v4286
    %v4359 = vadd.f32 %v3994, %v4288
    %v4360 = vadd.f32 %v3995, %v4290
    %v4361 = vadd.f32 %v3996, %v4292
    %v4362 = vadd.f32 %v3997, %v4294
    %v4363 = vadd.f32 %v3998, %v4296
    %v4364 = vadd.f32 %v3999, %v4298
    %v4365 = vadd.f32 %v4000, %v4300
    %v4366 = vadd.f32 %v4001, %v4302
    %v4367 = vadd.f32 %v4002, %v4304
    %v4368 = vadd.f32 %v4003, %v4306
    %v4369 = vadd.f32 %v4004, %v4308
    %v4370 = vadd.f32 %v4005, %v4310
    %v4371 = vadd.f32 %v4006, %v4312
    %v4372 = vadd.f32 %v4007, %v4314
    %v4373 = vadd.f32 %v4008, %v4316
    %v4374 = vadd.f32 %v4009, %v4318
    %v4375 = vpack.c.bf16 %v4320, %v4319
    %v4376 = vpack.c.bf16 %v4322, %v4321
    %v4377 = vpack.c.bf16 %v4324, %v4323
    %v4378 = vpack.c.bf16 %v4326, %v4325
    %v4379 = vpack.c.bf16 %v4328, %v4327
    %v4380 = vpack.c.bf16 %v4330, %v4329
    %v4381 = vpack.c.bf16 %v4332, %v4331
    %v4382 = vpack.c.bf16 %v4334, %v4333
    %v4383 = vpack.c.bf16 %v4336, %v4335
    %v4384 = vpack.c.bf16 %v4338, %v4337
    %v4385 = vpack.c.bf16 %v4348, %v4347
    %v4386 = vpack.c.bf16 %v4350, %v4349
    %v4387 = vpack.c.bf16 %v4352, %v4351
    %v4388 = vpack.c.bf16 %v4354, %v4353
    %v4389 = vpack.c.bf16 %v4356, %v4355
    %v4390 = vpack.c.bf16 %v4358, %v4357
    %v4391 = vpack.c.bf16 %v4360, %v4359
    %v4392 = vpack.c.bf16 %v4362, %v4361
    %v4393 = vpack.c.bf16 %v4364, %v4363
    %v4394 = vpack.c.bf16 %v4366, %v4365
    %v4395 = vpack.c.bf16 %v4340, %v4339
    %v4396 = vpack.c.bf16 %v4368, %v4367
    %v4397 = vpack.c.bf16 %v4342, %v4341
    %v4398 = vpack.c.bf16 %v4370, %v4369
    %v4399 = vpack.c.bf16 %v4344, %v4343
    %v4400 = vpack.c.bf16 %v4372, %v4371
    %v4401 = vpack.c.bf16 %v4346, %v4345
    %v4402 = vpack.c.bf16 %v4374, %v4373
    %v4403 = vld [vmem:[%s3] sm:$0xf]
    %v4404 = vld [vmem:[%s3 + $0x4] sm:$0xf]
    %v4405 = vld [vmem:[%s3 + $0x8] sm:$0xf]
    %v4406 = vld [vmem:[%s3 + $0xc] sm:$0xf]
    %v4407 = vld [vmem:[%s3 + $0x10] sm:$0xf]
    %v4408 = vld [vmem:[%s3 + $0x14] sm:$0xf]
    %v4409 = vld [vmem:[%s3 + $0x18] sm:$0xf]
    %v4410 = vld [vmem:[%s3 + $0x1c] sm:$0xf]
    %v4411 = vld [vmem:[%s3 + $0x20] sm:$0xf]
    %v4412 = vld [vmem:[%s3 + $0x24] sm:$0xf]
    %v4413 = vld [vmem:[%s3 + $0x28] sm:$0xf]
    %v4414 = vld [vmem:[%s3 + $0x2c] sm:$0xf]
    %v4415 = vld [vmem:[%s3 + $0x30] sm:$0xf]
    %v4416 = vld [vmem:[%s3 + $0x34] sm:$0xf]
    %v4417 = vld [vmem:[%s3 + $0x38] sm:$0xf]
    %v4418 = vld [vmem:[%s3 + $0x3c] sm:$0xf]
    %v4419 = vld [vmem:[%s3 + $0x40] sm:$0xf]
    %v4420 = vld [vmem:[%s3 + $0x44] sm:$0xf]
    %v4421 = vld [vmem:[%s3 + $0x48] sm:$0xf]
    %v4422 = vld [vmem:[%s3 + $0x4c] sm:$0xf]
    %v4423 = vld [vmem:[%s3 + $0x50] sm:$0xf]
    %v4424 = vld [vmem:[%s3 + $0x54] sm:$0xf]
    %v4425 = vld [vmem:[%s3 + $0x58] sm:$0xf]
    %v4426 = vld [vmem:[%s3 + $0x5c] sm:$0xf]
    %v4427 = vld [vmem:[%s3 + $0x60] sm:$0xf]
    %v4428 = vld [vmem:[%s3 + $0x64] sm:$0xf]
    %v4429 = vld [vmem:[%s3 + $0x68] sm:$0xf]
    %v4430 = vld [vmem:[%s3 + $0x6c] sm:$0xf]
    %v4431 = vld [vmem:[%s3 + $0x70] sm:$0xf]
    %v4432 = vld [vmem:[%s3 + $0x74] sm:$0xf]
    %v4433 = vld [vmem:[%s3 + $0x78] sm:$0xf]
    %v4434 = vld [vmem:[%s3 + $0x7c] sm:$0xf]
    %v4435 = vld [vmem:[%s3 + $0x80] sm:$0xf]
    %v4436 = vld [vmem:[%s3 + $0x84] sm:$0xf]
    %v4437 = vld [vmem:[%s3 + $0x88] sm:$0xf]
    %v4438 = vld [vmem:[%s3 + $0x8c] sm:$0xf]
    %v4439 = vld [vmem:[%s3 + $0x90] sm:$0xf]
    %v4440 = vld [vmem:[%s3 + $0x94] sm:$0xf]
    %v4441 = vld [vmem:[%s3 + $0x98] sm:$0xf]
    %v4442 = vld [vmem:[%s3 + $0x9c] sm:$0xf]
    %v4443 = vld [vmem:[%s3 + $0xa0] sm:$0xf]
    %v4444 = vld [vmem:[%s3 + $0xa4] sm:$0xf]
    %v4445 = vld [vmem:[%s3 + $0xa8] sm:$0xf]
    %v4446 = vld [vmem:[%s3 + $0xac] sm:$0xf]
    %v4447 = vld [vmem:[%s3 + $0xb0] sm:$0xf]
    %v4448 = vld [vmem:[%s3 + $0xb4] sm:$0xf]
    %v4449 = vld [vmem:[%s3 + $0xb8] sm:$0xf]
    %v4450 = vld [vmem:[%s3 + $0xbc] sm:$0xf]
    %v4451 = vld [vmem:[%s3 + $0xc0] sm:$0xf]
    %v4452 = vld [vmem:[%s3 + $0xc4] sm:$0xf]
    %v4453 = vld [vmem:[%s3 + $0xc8] sm:$0xf]
    %v4454 = vld [vmem:[%s3 + $0xcc] sm:$0xf]
    %v4455 = vld [vmem:[%s3 + $0xd0] sm:$0xf]
    %v4456 = vld [vmem:[%s3 + $0xd4] sm:$0xf]
    %v4457 = vld [vmem:[%s3 + $0xd8] sm:$0xf]
    %v4458 = vld [vmem:[%s3 + $0xdc] sm:$0xf]
    %v4459 = vld [vmem:[%s3 + $0xe0] sm:$0xf]
    %v4460 = vld [vmem:[%s3 + $0xe4] sm:$0xf]
    %v4461 = vld [vmem:[%s3 + $0xe8] sm:$0xf]
    %v4462 = vld [vmem:[%s3 + $0xec] sm:$0xf]
    %v4463 = vld [vmem:[%s3 + $0xf0] sm:$0xf]
    %v4464 = vld [vmem:[%s3 + $0xf4] sm:$0xf]
    %v4465 = vld [vmem:[%s3 + $0xf8] sm:$0xf]
    %v4466 = vld [vmem:[%s3 + $0xfc] sm:$0xf]
    %v4467 = vld [vmem:[%s3 + $0x100] sm:$0xf]
    %v4468 = vld [vmem:[%s3 + $0x104] sm:$0xf]
    %v4469 = vld [vmem:[%s3 + $0x108] sm:$0xf]
    %v4470 = vld [vmem:[%s3 + $0x10c] sm:$0xf]
    %v4471 = vld [vmem:[%s3 + $0x110] sm:$0xf]
    %v4472 = vld [vmem:[%s3 + $0x114] sm:$0xf]
    %v4473 = vld [vmem:[%s3 + $0x118] sm:$0xf]
    %v4474 = vld [vmem:[%s3 + $0x11c] sm:$0xf]
    %v4475 = vld [vmem:[%s3 + $0x120] sm:$0xf]
    %v4476 = vld [vmem:[%s3 + $0x124] sm:$0xf]
    %v4477 = vld [vmem:[%s3 + $0x128] sm:$0xf]
    %v4478 = vld [vmem:[%s3 + $0x12c] sm:$0xf]
    %v4479 = vld [vmem:[%s3 + $0x130] sm:$0xf]
    %v4480 = vld [vmem:[%s3 + $0x134] sm:$0xf]
    %v4481 = vld [vmem:[%s3 + $0x138] sm:$0xf]
    %v4482 = vld [vmem:[%s3 + $0x13c] sm:$0xf]
    %v4483 = vld [vmem:[%s4] sm:$0x1]
    %v4485 = vlaneseq
    %v4486 = vshrl.u32 %v4485, 7
    %v4487 = vsub.s32 0, %v4486
    %v4488 = vrot.slane %v4483, %v4487
    %v4570 = vunpack.c.l.b16 %v4403
    %v4571 = vunpack.c.l.b16 %v4404
    %v4572 = vunpack.c.l.b16 %v4405
    %v4573 = vunpack.c.l.b16 %v4406
    %v4574 = vunpack.c.l.b16 %v4407
    %v4575 = vunpack.c.l.b16 %v4408
    %v4576 = vunpack.c.l.b16 %v4409
    %v4577 = vunpack.c.l.b16 %v4410
    %v4578 = vunpack.c.l.b16 %v4411
    %v4579 = vunpack.c.l.b16 %v4412
    %v4580 = vunpack.c.l.b16 %v4413
    %v4581 = vunpack.c.l.b16 %v4414
    %v4582 = vunpack.c.l.b16 %v4415
    %v4583 = vunpack.c.l.b16 %v4416
    %v4584 = vunpack.c.l.b16 %v4417
    %v4585 = vunpack.c.l.b16 %v4418
    %v4586 = vunpack.c.l.b16 %v4419
    %v4587 = vunpack.c.l.b16 %v4420
    %v4588 = vunpack.c.l.b16 %v4421
    %v4589 = vunpack.c.l.b16 %v4422
    %v4590 = vunpack.c.l.b16 %v4423
    %v4591 = vunpack.c.l.b16 %v4424
    %v4592 = vunpack.c.l.b16 %v4425
    %v4593 = vunpack.c.l.b16 %v4426
    %v4594 = vunpack.c.l.b16 %v4427
    %v4595 = vunpack.c.l.b16 %v4428
    %v4596 = vunpack.c.l.b16 %v4429
    %v4597 = vunpack.c.l.b16 %v4430
    %v4598 = vunpack.c.l.b16 %v4431
    %v4599 = vunpack.c.l.b16 %v4432
    %v4600 = vunpack.c.l.b16 %v4433
    %v4601 = vunpack.c.l.b16 %v4434
    %v4602 = vunpack.c.l.b16 %v4435
    %v4603 = vunpack.c.l.b16 %v4436
    %v4604 = vunpack.c.l.b16 %v4437
    %v4605 = vunpack.c.l.b16 %v4438
    %v4606 = vunpack.c.l.b16 %v4439
    %v4607 = vunpack.c.l.b16 %v4440
    %v4608 = vunpack.c.l.b16 %v4441
    %v4609 = vunpack.c.l.b16 %v4442
    %v4610 = vunpack.c.l.b16 %v4443
    %v4611 = vunpack.c.l.b16 %v4444
    %v4612 = vunpack.c.l.b16 %v4445
    %v4613 = vunpack.c.l.b16 %v4446
    %v4614 = vunpack.c.l.b16 %v4447
    %v4615 = vunpack.c.l.b16 %v4448
    %v4616 = vunpack.c.l.b16 %v4449
    %v4617 = vunpack.c.l.b16 %v4450
    %v4618 = vunpack.c.l.b16 %v4451
    %v4619 = vunpack.c.l.b16 %v4452
    %v4620 = vunpack.c.l.b16 %v4453
    %v4621 = vunpack.c.l.b16 %v4454
    %v4622 = vunpack.c.l.b16 %v4455
    %v4623 = vunpack.c.l.b16 %v4456
    %v4624 = vunpack.c.l.b16 %v4457
    %v4625 = vunpack.c.l.b16 %v4458
    %v4626 = vunpack.c.l.b16 %v4459
    %v4627 = vunpack.c.l.b16 %v4460
    %v4628 = vunpack.c.l.b16 %v4461
    %v4629 = vunpack.c.l.b16 %v4462
    %v4630 = vunpack.c.l.b16 %v4463
    %v4631 = vunpack.c.l.b16 %v4464
    %v4632 = vunpack.c.l.b16 %v4465
    %v4633 = vunpack.c.l.b16 %v4466
    %v4634 = vunpack.c.l.b16 %v4467
    %v4635 = vunpack.c.l.b16 %v4468
    %v4636 = vunpack.c.l.b16 %v4469
    %v4637 = vunpack.c.l.b16 %v4470
    %v4638 = vunpack.c.l.b16 %v4471
    %v4639 = vunpack.c.l.b16 %v4472
    %v4640 = vunpack.c.l.b16 %v4473
    %v4641 = vunpack.c.l.b16 %v4474
    %v4642 = vunpack.c.l.b16 %v4475
    %v4643 = vunpack.c.l.b16 %v4476
    %v4644 = vunpack.c.l.b16 %v4477
    %v4645 = vunpack.c.l.b16 %v4478
    %v4646 = vunpack.c.l.b16 %v4479
    %v4647 = vunpack.c.l.b16 %v4480
    %v4648 = vunpack.c.l.b16 %v4481
    %v4649 = vunpack.c.l.b16 %v4482
    %v4650 = vpack.c.b16 %v4571, %v4570
    %v4651 = vpack.c.b16 %v4573, %v4572
    %v4652 = vpack.c.b16 %v4575, %v4574
    %v4653 = vpack.c.b16 %v4577, %v4576
    %v4654 = vpack.c.b16 %v4579, %v4578
    %v4655 = vpack.c.b16 %v4581, %v4580
    %v4656 = vpack.c.b16 %v4583, %v4582
    %v4657 = vpack.c.b16 %v4585, %v4584
    %v4658 = vpack.c.b16 %v4587, %v4586
    %v4659 = vpack.c.b16 %v4589, %v4588
    %v4660 = vpack.c.b16 %v4591, %v4590
    %v4661 = vpack.c.b16 %v4593, %v4592
    %v4662 = vpack.c.b16 %v4595, %v4594
    %v4663 = vpack.c.b16 %v4597, %v4596
    %v4664 = vpack.c.b16 %v4599, %v4598
    %v4665 = vpack.c.b16 %v4601, %v4600
    %v4666 = vpack.c.b16 %v4603, %v4602
    %v4667 = vpack.c.b16 %v4605, %v4604
    %v4668 = vpack.c.b16 %v4607, %v4606
    %v4669 = vpack.c.b16 %v4609, %v4608
    %v4670 = vpack.c.b16 %v4611, %v4610
    %v4671 = vpack.c.b16 %v4613, %v4612
    %v4672 = vpack.c.b16 %v4615, %v4614
    %v4673 = vpack.c.b16 %v4617, %v4616
    %v4674 = vpack.c.b16 %v4619, %v4618
    %v4675 = vpack.c.b16 %v4621, %v4620
    %v4676 = vpack.c.b16 %v4623, %v4622
    %v4677 = vpack.c.b16 %v4625, %v4624
    %v4678 = vpack.c.b16 %v4627, %v4626
    %v4679 = vpack.c.b16 %v4629, %v4628
    %v4680 = vpack.c.b16 %v4631, %v4630
    %v4681 = vpack.c.b16 %v4633, %v4632
    %v4682 = vpack.c.b16 %v4635, %v4634
    %v4683 = vpack.c.b16 %v4637, %v4636
    %v4684 = vpack.c.b16 %v4639, %v4638
    %v4685 = vpack.c.b16 %v4641, %v4640
    %v4686 = vpack.c.b16 %v4643, %v4642
    %v4687 = vpack.c.b16 %v4645, %v4644
    %v4688 = vpack.c.b16 %v4647, %v4646
    %v4689 = vpack.c.b16 %v4649, %v4648
    %4730 = vmatprep.subr.bf16.mxu0 0
    %4731 = vmatpush1.bf16.msra.mxu0 %v4650
    %4732 = vmatprep.subr.bf16.mxu0 0
    %4733 = vmatpush1.bf16.msra.mxu0 %v4651
    %4734 = vmatprep.subr.bf16.mxu0 0
    %4735 = vmatpush1.bf16.msra.mxu0 %v4652
    %4736 = vmatprep.subr.bf16.mxu0 0
    %4737 = vmatpush1.bf16.msra.mxu0 %v4653
    %4738 = vmatprep.subr.bf16.mxu0 0
    %4739 = vmatpush1.bf16.msra.mxu0 %v4654
    %4740 = vmatprep.subr.bf16.mxu0 0
    %4741 = vmatpush1.bf16.msra.mxu0 %v4655
    %4742 = vmatprep.subr.bf16.mxu0 0
    %4743 = vmatpush1.bf16.msra.mxu0 %v4656
    %4744 = vmatprep.subr.bf16.mxu0 0
    %4745 = vmatpush1.bf16.msra.mxu0 %v4657
    %4746 = vmatprep.subr.bf16.mxu0 0
    %4747 = vmatpush1.bf16.msra.mxu0 %v4658
    %4748 = vmatprep.subr.bf16.mxu0 0
    %4749 = vmatpush1.bf16.msra.mxu0 %v4659
    %4750 = vmatprep.subr.bf16.mxu0 0
    %4751 = vmatpush1.bf16.msra.mxu0 %v4660
    %4752 = vmatprep.subr.bf16.mxu0 0
    %4753 = vmatpush1.bf16.msra.mxu0 %v4661
    %4754 = vmatprep.subr.bf16.mxu0 0
    %4755 = vmatpush1.bf16.msra.mxu0 %v4662
    %4756 = vmatprep.subr.bf16.mxu0 0
    %4757 = vmatpush1.bf16.msra.mxu0 %v4663
    %4758 = vmatprep.subr.bf16.mxu0 0
    %4759 = vmatpush1.bf16.msra.mxu0 %v4664
    %4760 = vmatprep.subr.bf16.mxu0 0
    %4761 = vmatpush1.bf16.msra.mxu0 %v4665
    %4762 = vmatprep.mubr.bf16.mxu0 %v4376
    %4763 = vmatmul.mubr.bf16.gmra.mrb[0].mxu0 %v4375
    %v4764 = vpop.f32.mrb[0].mxu0
    %v4765 = vadd.f32 %v4488, %v4764
    %v4766 = vpop.f32.mrb[0].mxu0
    %v4767 = vpop.f32.mrb[0].mxu0
    %v4768 = vadd.f32 %v4488, %v4767
    %v4769 = vpop.f32.mrb[0].mxu0
    %4770 = vmatprep.mubr.bf16.mxu0 %v4377
    %4771 = vmatmul.mubr.bf16.gmra.mrb[0].mxu0 %v4376
    %v4772 = vpop.f32.mrb[0].mxu0
    %v4773 = vadd.f32 %v4488, %v4772
    %v4774 = vpop.f32.mrb[0].mxu0
    %v4775 = vpop.f32.mrb[0].mxu0
    %v4776 = vadd.f32 %v4488, %v4775
    %v4777 = vpop.f32.mrb[0].mxu0
    %4778 = vmatprep.mubr.bf16.mxu0 %v4378
    %4779 = vmatmul.mubr.bf16.gmra.mrb[0].mxu0 %v4377
    %v4780 = vpop.f32.mrb[0].mxu0
    %v4781 = vadd.f32 %v4488, %v4780
    %v4782 = vpop.f32.mrb[0].mxu0
    %v4783 = vpop.f32.mrb[0].mxu0
    %v4784 = vadd.f32 %v4488, %v4783
    %v4785 = vpop.f32.mrb[0].mxu0
    %4786 = vmatprep.mubr.bf16.mxu0 %v4379
    %4787 = vmatmul.mubr.bf16.gmra.mrb[0].mxu0 %v4378
    %v4788 = vpop.f32.mrb[0].mxu0
    %v4789 = vadd.f32 %v4488, %v4788
    %v4790 = vpop.f32.mrb[0].mxu0
    %v4791 = vpop.f32.mrb[0].mxu0
    %v4792 = vadd.f32 %v4488, %v4791
    %v4793 = vpop.f32.mrb[0].mxu0
    %4794 = vmatprep.mubr.bf16.mxu0 %v4380
    %4795 = vmatmul.mubr.bf16.gmra.mrb[0].mxu0 %v4379
    %v4796 = vpop.f32.mrb[0].mxu0
    %v4797 = vadd.f32 %v4488, %v4796
    %v4798 = vpop.f32.mrb[0].mxu0
    %v4799 = vpop.f32.mrb[0].mxu0
    %v4800 = vadd.f32 %v4488, %v4799
    %v4801 = vpop.f32.mrb[0].mxu0
    %4802 = vmatprep.mubr.bf16.mxu0 %v4381
    %4803 = vmatmul.mubr.bf16.gmra.mrb[0].mxu0 %v4380
    %v4804 = vpop.f32.mrb[0].mxu0
    %v4805 = vadd.f32 %v4488, %v4804
    %v4806 = vpop.f32.mrb[0].mxu0
    %v4807 = vpop.f32.mrb[0].mxu0
    %v4808 = vadd.f32 %v4488, %v4807
    %v4809 = vpop.f32.mrb[0].mxu0
    %4810 = vmatprep.mubr.bf16.mxu0 %v4382
    %4811 = vmatmul.mubr.bf16.gmra.mrb[0].mxu0 %v4381
    %v4812 = vpop.f32.mrb[0].mxu0
    %v4813 = vadd.f32 %v4488, %v4812
    %v4814 = vpop.f32.mrb[0].mxu0
    %v4815 = vpop.f32.mrb[0].mxu0
    %v4816 = vadd.f32 %v4488, %v4815
    %v4817 = vpop.f32.mrb[0].mxu0
    %4818 = vmatprep.mubr.bf16.mxu0 %v4383
    %4819 = vmatmul.mubr.bf16.gmra.mrb[0].mxu0 %v4382
    %v4820 = vpop.f32.mrb[0].mxu0
    %v4821 = vadd.f32 %v4488, %v4820
    %v4822 = vpop.f32.mrb[0].mxu0
    %v4823 = vpop.f32.mrb[0].mxu0
    %v4824 = vadd.f32 %v4488, %v4823
    %v4825 = vpop.f32.mrb[0].mxu0
    %4826 = vmatprep.mubr.bf16.mxu0 %v4384
    %4827 = vmatmul.mubr.bf16.gmra.mrb[0].mxu0 %v4383
    %v4828 = vpop.f32.mrb[0].mxu0
    %v4829 = vadd.f32 %v4488, %v4828
    %v4830 = vpop.f32.mrb[0].mxu0
    %v4831 = vpop.f32.mrb[0].mxu0
    %v4832 = vadd.f32 %v4488, %v4831
    %v4833 = vpop.f32.mrb[0].mxu0
    %4834 = vmatprep.mubr.bf16.mxu0 %v4395
    %4835 = vmatmul.mubr.bf16.gmra.mrb[0].mxu0 %v4384
    %v4836 = vpop.f32.mrb[0].mxu0
    %v4837 = vadd.f32 %v4488, %v4836
    %v4838 = vpop.f32.mrb[0].mxu0
    %v4839 = vpop.f32.mrb[0].mxu0
    %v4840 = vadd.f32 %v4488, %v4839
    %v4841 = vpop.f32.mrb[0].mxu0
    %4842 = vmatprep.mubr.bf16.mxu0 %v4386
    %4843 = vmatmul.mubr.bf16.gmra.mrb[0].mxu0 %v4385
    %v4844 = vpop.f32.mrb[0].mxu0
    %v4845 = vadd.f32 %v4488, %v4844
    %v4846 = vpop.f32.mrb[0].mxu0
    %v4847 = vpop.f32.mrb[0].mxu0
    %v4848 = vadd.f32 %v4488, %v4847
    %v4849 = vpop.f32.mrb[0].mxu0
    %4850 = vmatprep.mubr.bf16.mxu0 %v4387
    %4851 = vmatmul.mubr.bf16.gmra.mrb[0].mxu0 %v4386
    %v4852 = vpop.f32.mrb[0].mxu0
    %v4853 = vadd.f32 %v4488, %v4852
    %v4854 = vpop.f32.mrb[0].mxu0
    %v4855 = vpop.f32.mrb[0].mxu0
    %v4856 = vadd.f32 %v4488, %v4855
    %v4857 = vpop.f32.mrb[0].mxu0
    %4858 = vmatprep.mubr.bf16.mxu0 %v4388
    %4859 = vmatmul.mubr.bf16.gmra.mrb[0].mxu0 %v4387
    %v4860 = vpop.f32.mrb[0].mxu0
    %v4861 = vadd.f32 %v4488, %v4860
    %v4862 = vpop.f32.mrb[0].mxu0
    %v4863 = vpop.f32.mrb[0].mxu0
    %v4864 = vadd.f32 %v4488, %v4863
    %v4865 = vpop.f32.mrb[0].mxu0
    %4866 = vmatprep.mubr.bf16.mxu0 %v4389
    %4867 = vmatmul.mubr.bf16.gmra.mrb[0].mxu0 %v4388
    %v4868 = vpop.f32.mrb[0].mxu0
    %v4869 = vadd.f32 %v4488, %v4868
    %v4870 = vpop.f32.mrb[0].mxu0
    %v4871 = vpop.f32.mrb[0].mxu0
    %v4872 = vadd.f32 %v4488, %v4871
    %v4873 = vpop.f32.mrb[0].mxu0
    %4874 = vmatprep.mubr.bf16.mxu0 %v4390
    %4875 = vmatmul.mubr.bf16.gmra.mrb[0].mxu0 %v4389
    %v4876 = vpop.f32.mrb[0].mxu0
    %v4877 = vadd.f32 %v4488, %v4876
    %v4878 = vpop.f32.mrb[0].mxu0
    %v4879 = vpop.f32.mrb[0].mxu0
    %v4880 = vadd.f32 %v4488, %v4879
    %v4881 = vpop.f32.mrb[0].mxu0
    %4882 = vmatprep.mubr.bf16.mxu0 %v4391
    %4883 = vmatmul.mubr.bf16.gmra.mrb[0].mxu0 %v4390
    %v4884 = vpop.f32.mrb[0].mxu0
    %v4885 = vadd.f32 %v4488, %v4884
    %v4886 = vpop.f32.mrb[0].mxu0
    %v4887 = vpop.f32.mrb[0].mxu0
    %v4888 = vadd.f32 %v4488, %v4887
    %v4889 = vpop.f32.mrb[0].mxu0
    %4890 = vmatprep.mubr.bf16.mxu0 %v4392
    %4891 = vmatmul.mubr.bf16.gmra.mrb[0].mxu0 %v4391
    %v4892 = vpop.f32.mrb[0].mxu0
    %v4893 = vadd.f32 %v4488, %v4892
    %v4894 = vpop.f32.mrb[0].mxu0
    %v4895 = vpop.f32.mrb[0].mxu0
    %v4896 = vadd.f32 %v4488, %v4895
    %v4897 = vpop.f32.mrb[0].mxu0
    %4898 = vmatprep.mubr.bf16.mxu0 %v4393
    %4899 = vmatmul.mubr.bf16.gmra.mrb[0].mxu0 %v4392
    %v4900 = vpop.f32.mrb[0].mxu0
    %v4901 = vadd.f32 %v4488, %v4900
    %v4902 = vpop.f32.mrb[0].mxu0
    %v4903 = vpop.f32.mrb[0].mxu0
    %v4904 = vadd.f32 %v4488, %v4903
    %v4905 = vpop.f32.mrb[0].mxu0
    %4906 = vmatprep.mubr.bf16.mxu0 %v4394
    %4907 = vmatmul.mubr.bf16.gmra.mrb[0].mxu0 %v4393
    %v4908 = vpop.f32.mrb[0].mxu0
    %v4909 = vadd.f32 %v4488, %v4908
    %v4910 = vpop.f32.mrb[0].mxu0
    %v4911 = vpop.f32.mrb[0].mxu0
    %v4912 = vadd.f32 %v4488, %v4911
    %v4913 = vpop.f32.mrb[0].mxu0
    %4914 = vmatprep.mubr.bf16.mxu0 %v4396
    %4915 = vmatmul.mubr.bf16.gmra.mrb[0].mxu0 %v4394
    %v4916 = vpop.f32.mrb[0].mxu0
    %v4917 = vadd.f32 %v4488, %v4916
    %v4918 = vpop.f32.mrb[0].mxu0
    %v4919 = vpop.f32.mrb[0].mxu0
    %v4920 = vadd.f32 %v4488, %v4919
    %v4921 = vpop.f32.mrb[0].mxu0
    %4922 = vdwg.mxu0
    %4923 = vmatprep.subr.bf16.mxu0 0
    %4924 = vmatpush1.bf16.msra.mxu0 %v4666
    %4925 = vmatprep.subr.bf16.mxu0 0
    %4926 = vmatpush1.bf16.msra.mxu0 %v4667
    %4927 = vmatprep.subr.bf16.mxu0 0
    %4928 = vmatpush1.bf16.msra.mxu0 %v4668
    %4929 = vmatprep.subr.bf16.mxu0 0
    %4930 = vmatpush1.bf16.msra.mxu0 %v4669
    %4931 = vmatprep.subr.bf16.mxu0 0
    %4932 = vmatpush1.bf16.msra.mxu0 %v4670
    %4933 = vmatprep.subr.bf16.mxu0 0
    %4934 = vmatpush1.bf16.msra.mxu0 %v4671
    %4935 = vmatprep.subr.bf16.mxu0 0
    %4936 = vmatpush1.bf16.msra.mxu0 %v4672
    %4937 = vmatprep.subr.bf16.mxu0 0
    %4938 = vmatpush1.bf16.msra.mxu0 %v4673
    %4939 = vmatprep.subr.bf16.mxu0 0
    %4940 = vmatpush1.bf16.msra.mxu0 %v4674
    %4941 = vmatprep.subr.bf16.mxu0 0
    %4942 = vmatpush1.bf16.msra.mxu0 %v4675
    %4943 = vmatprep.subr.bf16.mxu0 0
    %4944 = vmatpush1.bf16.msra.mxu0 %v4676
    %4945 = vmatprep.subr.bf16.mxu0 0
    %4946 = vmatpush1.bf16.msra.mxu0 %v4677
    %4947 = vmatprep.subr.bf16.mxu0 0
    %4948 = vmatpush1.bf16.msra.mxu0 %v4678
    %4949 = vmatprep.subr.bf16.mxu0 0
    %4950 = vmatpush1.bf16.msra.mxu0 %v4679
    %4951 = vmatprep.subr.bf16.mxu0 0
    %4952 = vmatpush1.bf16.msra.mxu0 %v4680
    %4953 = vmatprep.subr.bf16.mxu0 0
    %4954 = vmatpush1.bf16.msra.mxu0 %v4681
    %4955 = vmatprep.mubr.bf16.mxu0 %v4378
    %4956 = vmatmul.mubr.bf16.gmra.mrb[0].mxu0 %v4377
    %v4957 = vpop.f32.mrb[0].mxu0
    %v4958 = vadd.f32 %v4765, %v4957
    %v4959 = vpop.f32.mrb[0].mxu0
    %v4960 = vpop.f32.mrb[0].mxu0
    %v4961 = vadd.f32 %v4768, %v4960
    %v4962 = vpop.f32.mrb[0].mxu0
    %4963 = vmatprep.mubr.bf16.mxu0 %v4379
    %4964 = vmatmul.mubr.bf16.gmra.mrb[0].mxu0 %v4378
    %v4965 = vpop.f32.mrb[0].mxu0
    %v4966 = vadd.f32 %v4773, %v4965
    %v4967 = vpop.f32.mrb[0].mxu0
    %v4968 = vpop.f32.mrb[0].mxu0
    %v4969 = vadd.f32 %v4776, %v4968
    %v4970 = vpop.f32.mrb[0].mxu0
    %4971 = vmatprep.mubr.bf16.mxu0 %v4380
    %4972 = vmatmul.mubr.bf16.gmra.mrb[0].mxu0 %v4379
    %v4973 = vpop.f32.mrb[0].mxu0
    %v4974 = vadd.f32 %v4781, %v4973
    %v4975 = vpop.f32.mrb[0].mxu0
    %v4976 = vpop.f32.mrb[0].mxu0
    %v4977 = vadd.f32 %v4784, %v4976
    %v4978 = vpop.f32.mrb[0].mxu0
    %4979 = vmatprep.mubr.bf16.mxu0 %v4381
    %4980 = vmatmul.mubr.bf16.gmra.mrb[0].mxu0 %v4380
    %v4981 = vpop.f32.mrb[0].mxu0
    %v4982 = vadd.f32 %v4789, %v4981
    %v4983 = vpop.f32.mrb[0].mxu0
    %v4984 = vpop.f32.mrb[0].mxu0
    %v4985 = vadd.f32 %v4792, %v4984
    %v4986 = vpop.f32.mrb[0].mxu0
    %4987 = vmatprep.mubr.bf16.mxu0 %v4382
    %4988 = vmatmul.mubr.bf16.gmra.mrb[0].mxu0 %v4381
    %v4989 = vpop.f32.mrb[0].mxu0
    %v4990 = vadd.f32 %v4797, %v4989
    %v4991 = vpop.f32.mrb[0].mxu0
    %v4992 = vpop.f32.mrb[0].mxu0
    %v4993 = vadd.f32 %v4800, %v4992
    %v4994 = vpop.f32.mrb[0].mxu0
    %4995 = vmatprep.mubr.bf16.mxu0 %v4383
    %4996 = vmatmul.mubr.bf16.gmra.mrb[0].mxu0 %v4382
    %v4997 = vpop.f32.mrb[0].mxu0
    %v4998 = vadd.f32 %v4805, %v4997
    %v4999 = vpop.f32.mrb[0].mxu0
    %v5000 = vpop.f32.mrb[0].mxu0
    %v5001 = vadd.f32 %v4808, %v5000
    %v5002 = vpop.f32.mrb[0].mxu0
    %5003 = vmatprep.mubr.bf16.mxu0 %v4384
    %5004 = vmatmul.mubr.bf16.gmra.mrb[0].mxu0 %v4383
    %v5005 = vpop.f32.mrb[0].mxu0
    %v5006 = vadd.f32 %v4813, %v5005
    %v5007 = vpop.f32.mrb[0].mxu0
    %v5008 = vpop.f32.mrb[0].mxu0
    %v5009 = vadd.f32 %v4816, %v5008
    %v5010 = vpop.f32.mrb[0].mxu0
    %5011 = vmatprep.mubr.bf16.mxu0 %v4395
    %5012 = vmatmul.mubr.bf16.gmra.mrb[0].mxu0 %v4384
    %v5013 = vpop.f32.mrb[0].mxu0
    %v5014 = vadd.f32 %v4821, %v5013
    %v5015 = vpop.f32.mrb[0].mxu0
    %v5016 = vpop.f32.mrb[0].mxu0
    %v5017 = vadd.f32 %v4824, %v5016
    %v5018 = vpop.f32.mrb[0].mxu0
    %5019 = vmatprep.mubr.bf16.mxu0 %v4397
    %5020 = vmatmul.mubr.bf16.gmra.mrb[0].mxu0 %v4395
    %v5021 = vpop.f32.mrb[0].mxu0
    %v5022 = vadd.f32 %v4829, %v5021
    %v5023 = vpop.f32.mrb[0].mxu0
    %v5024 = vpop.f32.mrb[0].mxu0
    %v5025 = vadd.f32 %v4832, %v5024
    %v5026 = vpop.f32.mrb[0].mxu0
    %5027 = vmatprep.mubr.bf16.mxu0 %v4399
    %5028 = vmatmul.mubr.bf16.gmra.mrb[0].mxu0 %v4397
    %v5029 = vpop.f32.mrb[0].mxu0
    %v5030 = vadd.f32 %v4837, %v5029
    %v5031 = vpop.f32.mrb[0].mxu0
    %v5032 = vpop.f32.mrb[0].mxu0
    %v5033 = vadd.f32 %v4840, %v5032
    %v5034 = vpop.f32.mrb[0].mxu0
    %5035 = vmatprep.mubr.bf16.mxu0 %v4388
    %5036 = vmatmul.mubr.bf16.gmra.mrb[0].mxu0 %v4387
    %v5037 = vpop.f32.mrb[0].mxu0
    %v5038 = vadd.f32 %v4845, %v5037
    %v5039 = vpop.f32.mrb[0].mxu0
    %v5040 = vpop.f32.mrb[0].mxu0
    %v5041 = vadd.f32 %v4848, %v5040
    %v5042 = vpop.f32.mrb[0].mxu0
    %5043 = vmatprep.mubr.bf16.mxu0 %v4389
    %5044 = vmatmul.mubr.bf16.gmra.mrb[0].mxu0 %v4388
    %v5045 = vpop.f32.mrb[0].mxu0
    %v5046 = vadd.f32 %v4853, %v5045
    %v5047 = vpop.f32.mrb[0].mxu0
    %v5048 = vpop.f32.mrb[0].mxu0
    %v5049 = vadd.f32 %v4856, %v5048
    %v5050 = vpop.f32.mrb[0].mxu0
    %5051 = vmatprep.mubr.bf16.mxu0 %v4390
    %5052 = vmatmul.mubr.bf16.gmra.mrb[0].mxu0 %v4389
    %v5053 = vpop.f32.mrb[0].mxu0
    %v5054 = vadd.f32 %v4861, %v5053
    %v5055 = vpop.f32.mrb[0].mxu0
    %v5056 = vpop.f32.mrb[0].mxu0
    %v5057 = vadd.f32 %v4864, %v5056
    %v5058 = vpop.f32.mrb[0].mxu0
    %5059 = vmatprep.mubr.bf16.mxu0 %v4391
    %5060 = vmatmul.mubr.bf16.gmra.mrb[0].mxu0 %v4390
    %v5061 = vpop.f32.mrb[0].mxu0
    %v5062 = vadd.f32 %v4869, %v5061
    %v5063 = vpop.f32.mrb[0].mxu0
    %v5064 = vpop.f32.mrb[0].mxu0
    %v5065 = vadd.f32 %v4872, %v5064
    %v5066 = vpop.f32.mrb[0].mxu0
    %5067 = vmatprep.mubr.bf16.mxu0 %v4392
    %5068 = vmatmul.mubr.bf16.gmra.mrb[0].mxu0 %v4391
    %v5069 = vpop.f32.mrb[0].mxu0
    %v5070 = vadd.f32 %v4877, %v5069
    %v5071 = vpop.f32.mrb[0].mxu0
    %v5072 = vpop.f32.mrb[0].mxu0
    %v5073 = vadd.f32 %v4880, %v5072
    %v5074 = vpop.f32.mrb[0].mxu0
    %5075 = vmatprep.mubr.bf16.mxu0 %v4393
    %5076 = vmatmul.mubr.bf16.gmra.mrb[0].mxu0 %v4392
    %v5077 = vpop.f32.mrb[0].mxu0
    %v5078 = vadd.f32 %v4885, %v5077
    %v5079 = vpop.f32.mrb[0].mxu0
    %v5080 = vpop.f32.mrb[0].mxu0
    %v5081 = vadd.f32 %v4888, %v5080
    %v5082 = vpop.f32.mrb[0].mxu0
    %5083 = vmatprep.mubr.bf16.mxu0 %v4394
    %5084 = vmatmul.mubr.bf16.gmra.mrb[0].mxu0 %v4393
    %v5085 = vpop.f32.mrb[0].mxu0
    %v5086 = vadd.f32 %v4893, %v5085
    %v5087 = vpop.f32.mrb[0].mxu0
    %v5088 = vpop.f32.mrb[0].mxu0
    %v5089 = vadd.f32 %v4896, %v5088
    %v5090 = vpop.f32.mrb[0].mxu0
    %5091 = vmatprep.mubr.bf16.mxu0 %v4396
    %5092 = vmatmul.mubr.bf16.gmra.mrb[0].mxu0 %v4394
    %v5093 = vpop.f32.mrb[0].mxu0
    %v5094 = vadd.f32 %v4901, %v5093
    %v5095 = vpop.f32.mrb[0].mxu0
    %v5096 = vpop.f32.mrb[0].mxu0
    %v5097 = vadd.f32 %v4904, %v5096
    %v5098 = vpop.f32.mrb[0].mxu0
    %5099 = vmatprep.mubr.bf16.mxu0 %v4398
    %5100 = vmatmul.mubr.bf16.gmra.mrb[0].mxu0 %v4396
    %v5101 = vpop.f32.mrb[0].mxu0
    %v5102 = vadd.f32 %v4909, %v5101
    %v5103 = vpop.f32.mrb[0].mxu0
    %v5104 = vpop.f32.mrb[0].mxu0
    %v5105 = vadd.f32 %v4912, %v5104
    %v5106 = vpop.f32.mrb[0].mxu0
    %5107 = vmatprep.mubr.bf16.mxu0 %v4400
    %5108 = vmatmul.mubr.bf16.gmra.mrb[0].mxu0 %v4398
    %v5109 = vpop.f32.mrb[0].mxu0
    %v5110 = vadd.f32 %v4917, %v5109
    %v5111 = vpop.f32.mrb[0].mxu0
    %v5112 = vpop.f32.mrb[0].mxu0
    %v5113 = vadd.f32 %v4920, %v5112
    %v5114 = vpop.f32.mrb[0].mxu0
    %5115 = vdwg.mxu0
    %5116 = vmatprep.subr.bf16.mxu0 0
    %5117 = vmatpush1.bf16.msra.mxu0 %v4682
    %5118 = vmatprep.subr.bf16.mxu0 0
    %5119 = vmatpush1.bf16.msra.mxu0 %v4683
    %5120 = vmatprep.subr.bf16.mxu0 0
    %5121 = vmatpush1.bf16.msra.mxu0 %v4684
    %5122 = vmatprep.subr.bf16.mxu0 0
    %5123 = vmatpush1.bf16.msra.mxu0 %v4685
    %5124 = vmatprep.subr.bf16.mxu0 0
    %5125 = vmatpush1.bf16.msra.mxu0 %v4686
    %5126 = vmatprep.subr.bf16.mxu0 0
    %5127 = vmatpush1.bf16.msra.mxu0 %v4687
    %5128 = vmatprep.subr.bf16.mxu0 0
    %5129 = vmatpush1.bf16.msra.mxu0 %v4688
    %5130 = vmatprep.subr.bf16.mxu0 0
    %5131 = vmatpush1.bf16.msra.mxu0 %v4689
    %5132 = vmatprep.subr.bf16.mxu0 0
    %5133 = vmatpush1.bf16.msra.mxu0 0
    %5134 = vmatprep.subr.bf16.mxu0 0
    %5135 = vmatpush1.bf16.msra.mxu0 0
    %5136 = vmatprep.subr.bf16.mxu0 0
    %5137 = vmatpush1.bf16.msra.mxu0 0
    %5138 = vmatprep.subr.bf16.mxu0 0
    %5139 = vmatpush1.bf16.msra.mxu0 0
    %5140 = vmatprep.subr.bf16.mxu0 0
    %5141 = vmatpush1.bf16.msra.mxu0 0
    %5142 = vmatprep.subr.bf16.mxu0 0
    %5143 = vmatpush1.bf16.msra.mxu0 0
    %5144 = vmatprep.subr.bf16.mxu0 0
    %5145 = vmatpush1.bf16.msra.mxu0 0
    %5146 = vmatprep.subr.bf16.mxu0 0
    %5147 = vmatpush1.bf16.msra.mxu0 0
    %5148 = vmatprep.mubr.bf16.mxu0 0
    %5149 = vmatmul.mubr.bf16.gmra.mrb[0].mxu0 %v4379
    %v5150 = vpop.f32.mrb[0].mxu0
    %v5151 = vadd.f32 %v4958, %v5150
    %v5152 = vpop.f32.mrb[0].mxu0
    %v5153 = vpop.f32.mrb[0].mxu0
    %v5154 = vadd.f32 %v4961, %v5153
    %v5155 = vpop.f32.mrb[0].mxu0
    %5156 = vmatprep.mubr.bf16.mxu0 0
    %5157 = vmatmul.mubr.bf16.gmra.mrb[0].mxu0 %v4380
    %v5158 = vpop.f32.mrb[0].mxu0
    %v5159 = vadd.f32 %v4966, %v5158
    %v5160 = vpop.f32.mrb[0].mxu0
    %v5161 = vpop.f32.mrb[0].mxu0
    %v5162 = vadd.f32 %v4969, %v5161
    %v5163 = vpop.f32.mrb[0].mxu0
    %5164 = vmatprep.mubr.bf16.mxu0 0
    %5165 = vmatmul.mubr.bf16.gmra.mrb[0].mxu0 %v4381
    %v5166 = vpop.f32.mrb[0].mxu0
    %v5167 = vadd.f32 %v4974, %v5166
    %v5168 = vpop.f32.mrb[0].mxu0
    %v5169 = vpop.f32.mrb[0].mxu0
    %v5170 = vadd.f32 %v4977, %v5169
    %v5171 = vpop.f32.mrb[0].mxu0
    %5172 = vmatprep.mubr.bf16.mxu0 0
    %5173 = vmatmul.mubr.bf16.gmra.mrb[0].mxu0 %v4382
    %v5174 = vpop.f32.mrb[0].mxu0
    %v5175 = vadd.f32 %v4982, %v5174
    %v5176 = vpop.f32.mrb[0].mxu0
    %v5177 = vpop.f32.mrb[0].mxu0
    %v5178 = vadd.f32 %v4985, %v5177
    %v5179 = vpop.f32.mrb[0].mxu0
    %5180 = vmatprep.mubr.bf16.mxu0 0
    %5181 = vmatmul.mubr.bf16.gmra.mrb[0].mxu0 %v4383
    %v5182 = vpop.f32.mrb[0].mxu0
    %v5183 = vadd.f32 %v4990, %v5182
    %v5184 = vpop.f32.mrb[0].mxu0
    %v5185 = vpop.f32.mrb[0].mxu0
    %v5186 = vadd.f32 %v4993, %v5185
    %v5187 = vpop.f32.mrb[0].mxu0
    %5188 = vmatprep.mubr.bf16.mxu0 0
    %5189 = vmatmul.mubr.bf16.gmra.mrb[0].mxu0 %v4384
    %v5190 = vpop.f32.mrb[0].mxu0
    %v5191 = vadd.f32 %v4998, %v5190
    %v5192 = vpop.f32.mrb[0].mxu0
    %v5193 = vpop.f32.mrb[0].mxu0
    %v5194 = vadd.f32 %v5001, %v5193
    %v5195 = vpop.f32.mrb[0].mxu0
    %5196 = vmatprep.mubr.bf16.mxu0 0
    %5197 = vmatmul.mubr.bf16.gmra.mrb[0].mxu0 %v4395
    %v5198 = vpop.f32.mrb[0].mxu0
    %v5199 = vadd.f32 %v5006, %v5198
    %v5200 = vpop.f32.mrb[0].mxu0
    %v5201 = vpop.f32.mrb[0].mxu0
    %v5202 = vadd.f32 %v5009, %v5201
    %v5203 = vpop.f32.mrb[0].mxu0
    %5204 = vmatprep.mubr.bf16.mxu0 0
    %5205 = vmatmul.mubr.bf16.gmra.mrb[0].mxu0 %v4397
    %v5206 = vpop.f32.mrb[0].mxu0
    %v5207 = vadd.f32 %v5014, %v5206
    %v5208 = vpop.f32.mrb[0].mxu0
    %v5209 = vpop.f32.mrb[0].mxu0
    %v5210 = vadd.f32 %v5017, %v5209
    %v5211 = vpop.f32.mrb[0].mxu0
    %5212 = vmatprep.mubr.bf16.mxu0 0
    %5213 = vmatmul.mubr.bf16.gmra.mrb[0].mxu0 %v4399
    %v5214 = vpop.f32.mrb[0].mxu0
    %v5215 = vadd.f32 %v5022, %v5214
    %v5216 = vpop.f32.mrb[0].mxu0
    %v5217 = vpop.f32.mrb[0].mxu0
    %v5218 = vadd.f32 %v5025, %v5217
    %v5219 = vpop.f32.mrb[0].mxu0
    %5220 = vmatprep.mubr.bf16.mxu0 0
    %5221 = vmatmul.mubr.bf16.gmra.mrb[0].mxu0 %v4401
    %v5222 = vpop.f32.mrb[0].mxu0
    %v5223 = vadd.f32 %v5030, %v5222
    %v5224 = vpop.f32.mrb[0].mxu0
    %v5225 = vpop.f32.mrb[0].mxu0
    %v5226 = vadd.f32 %v5033, %v5225
    %v5227 = vpop.f32.mrb[0].mxu0
    %5228 = vmatprep.mubr.bf16.mxu0 0
    %5229 = vmatmul.mubr.bf16.gmra.mrb[0].mxu0 %v4389
    %v5230 = vpop.f32.mrb[0].mxu0
    %v5231 = vadd.f32 %v5038, %v5230
    %v5232 = vpop.f32.mrb[0].mxu0
    %v5233 = vpop.f32.mrb[0].mxu0
    %v5234 = vadd.f32 %v5041, %v5233
    %v5235 = vpop.f32.mrb[0].mxu0
    %5236 = vmatprep.mubr.bf16.mxu0 0
    %5237 = vmatmul.mubr.bf16.gmra.mrb[0].mxu0 %v4390
    %v5238 = vpop.f32.mrb[0].mxu0
    %v5239 = vadd.f32 %v5046, %v5238
    %v5240 = vpop.f32.mrb[0].mxu0
    %v5241 = vpop.f32.mrb[0].mxu0
    %v5242 = vadd.f32 %v5049, %v5241
    %v5243 = vpop.f32.mrb[0].mxu0
    %5244 = vmatprep.mubr.bf16.mxu0 0
    %5245 = vmatmul.mubr.bf16.gmra.mrb[0].mxu0 %v4391
    %v5246 = vpop.f32.mrb[0].mxu0
    %v5247 = vadd.f32 %v5054, %v5246
    %v5248 = vpop.f32.mrb[0].mxu0
    %v5249 = vpop.f32.mrb[0].mxu0
    %v5250 = vadd.f32 %v5057, %v5249
    %v5251 = vpop.f32.mrb[0].mxu0
    %5252 = vmatprep.mubr.bf16.mxu0 0
    %5253 = vmatmul.mubr.bf16.gmra.mrb[0].mxu0 %v4392
    %v5254 = vpop.f32.mrb[0].mxu0
    %v5255 = vadd.f32 %v5062, %v5254
    %v5256 = vpop.f32.mrb[0].mxu0
    %v5257 = vpop.f32.mrb[0].mxu0
    %v5258 = vadd.f32 %v5065, %v5257
    %v5259 = vpop.f32.mrb[0].mxu0
    %5260 = vmatprep.mubr.bf16.mxu0 0
    %5261 = vmatmul.mubr.bf16.gmra.mrb[0].mxu0 %v4393
    %v5262 = vpop.f32.mrb[0].mxu0
    %v5263 = vadd.f32 %v5070, %v5262
    %v5264 = vpop.f32.mrb[0].mxu0
    %v5265 = vpop.f32.mrb[0].mxu0
    %v5266 = vadd.f32 %v5073, %v5265
    %v5267 = vpop.f32.mrb[0].mxu0
    %5268 = vmatprep.mubr.bf16.mxu0 0
    %5269 = vmatmul.mubr.bf16.gmra.mrb[0].mxu0 %v4394
    %v5270 = vpop.f32.mrb[0].mxu0
    %v5271 = vadd.f32 %v5078, %v5270
    %v5272 = vpop.f32.mrb[0].mxu0
    %v5273 = vpop.f32.mrb[0].mxu0
    %v5274 = vadd.f32 %v5081, %v5273
    %v5275 = vpop.f32.mrb[0].mxu0
    %5276 = vmatprep.mubr.bf16.mxu0 0
    %5277 = vmatmul.mubr.bf16.gmra.mrb[0].mxu0 %v4396
    %v5278 = vpop.f32.mrb[0].mxu0
    %v5279 = vadd.f32 %v5086, %v5278
    %v5280 = vpop.f32.mrb[0].mxu0
    %v5281 = vpop.f32.mrb[0].mxu0
    %v5282 = vadd.f32 %v5089, %v5281
    %v5283 = vpop.f32.mrb[0].mxu0
    %5284 = vmatprep.mubr.bf16.mxu0 0
    %5285 = vmatmul.mubr.bf16.gmra.mrb[0].mxu0 %v4398
    %v5286 = vpop.f32.mrb[0].mxu0
    %v5287 = vadd.f32 %v5094, %v5286
    %v5288 = vpop.f32.mrb[0].mxu0
    %v5289 = vpop.f32.mrb[0].mxu0
    %v5290 = vadd.f32 %v5097, %v5289
    %v5291 = vpop.f32.mrb[0].mxu0
    %5292 = vmatprep.mubr.bf16.mxu0 0
    %5293 = vmatmul.mubr.bf16.gmra.mrb[0].mxu0 %v4400
    %v5294 = vpop.f32.mrb[0].mxu0
    %v5295 = vadd.f32 %v5102, %v5294
    %v5296 = vpop.f32.mrb[0].mxu0
    %v5297 = vpop.f32.mrb[0].mxu0
    %v5298 = vadd.f32 %v5105, %v5297
    %v5299 = vpop.f32.mrb[0].mxu0
    %5300 = vmatprep.mubr.bf16.mxu0 0
    %5301 = vmatmul.mubr.bf16.gmra.mrb[0].mxu0 %v4402
    %v5302 = vpop.f32.mrb[0].mxu0
    %v5303 = vadd.f32 %v5110, %v5302
    %v5304 = vpop.f32.mrb[0].mxu0
    %v5305 = vpop.f32.mrb[0].mxu0
    %v5306 = vadd.f32 %v5113, %v5305
    %v5307 = vpop.f32.mrb[0].mxu0
    %5308 = vdwg.mxu0
    %v5309 = vmax.f32 %v5151, 0.0
    %v5310 = vmax.f32 %v5154, 0.0
    %v5311 = vmax.f32 %v5159, 0.0
    %v5312 = vmax.f32 %v5162, 0.0
    %v5313 = vmax.f32 %v5167, 0.0
    %v5314 = vmax.f32 %v5170, 0.0
    %v5315 = vmax.f32 %v5175, 0.0
    %v5316 = vmax.f32 %v5178, 0.0
    %v5317 = vmax.f32 %v5183, 0.0
    %v5318 = vmax.f32 %v5186, 0.0
    %v5319 = vmax.f32 %v5191, 0.0
    %v5320 = vmax.f32 %v5194, 0.0
    %v5321 = vmax.f32 %v5199, 0.0
    %v5322 = vmax.f32 %v5202, 0.0
    %v5323 = vmax.f32 %v5207, 0.0
    %v5324 = vmax.f32 %v5210, 0.0
    %v5325 = vmax.f32 %v5215, 0.0
    %v5326 = vmax.f32 %v5218, 0.0
    %v5327 = vmax.f32 %v5223, 0.0
    %v5328 = vmax.f32 %v5226, 0.0
    %v5329 = vmax.f32 %v5231, 0.0
    %v5330 = vmax.f32 %v5234, 0.0
    %v5331 = vmax.f32 %v5239, 0.0
    %v5332 = vmax.f32 %v5242, 0.0
    %v5333 = vmax.f32 %v5247, 0.0
    %v5334 = vmax.f32 %v5250, 0.0
    %v5335 = vmax.f32 %v5255, 0.0
    %v5336 = vmax.f32 %v5258, 0.0
    %v5337 = vmax.f32 %v5263, 0.0
    %v5338 = vmax.f32 %v5266, 0.0
    %v5339 = vmax.f32 %v5271, 0.0
    %v5340 = vmax.f32 %v5274, 0.0
    %v5341 = vmax.f32 %v5279, 0.0
    %v5342 = vmax.f32 %v5282, 0.0
    %v5343 = vmax.f32 %v5287, 0.0
    %v5344 = vmax.f32 %v5290, 0.0
    %v5345 = vmax.f32 %v5295, 0.0
    %v5346 = vmax.f32 %v5298, 0.0
    %v5347 = vmax.f32 %v5303, 0.0
    %v5348 = vmax.f32 %v5306, 0.0
    %v5349 = vmax.f32 %v5309, %v5311
    %v5350 = vmax.f32 %v5310, %v5312
    %v5351 = vmax.f32 %v5313, %v5315
    %v5352 = vmax.f32 %v5314, %v5316
    %v5353 = vmax.f32 %v5317, %v5319
    %v5354 = vmax.f32 %v5318, %v5320
    %v5355 = vmax.f32 %v5321, %v5323
    %v5356 = vmax.f32 %v5322, %v5324
    %v5357 = vmax.f32 %v5325, %v5327
    %v5358 = vmax.f32 %v5326, %v5328
    %v5359 = vmax.f32 %v5329, %v5331
    %v5360 = vmax.f32 %v5330, %v5332
    %v5361 = vmax.f32 %v5333, %v5335
    %v5362 = vmax.f32 %v5334, %v5336
    %v5363 = vmax.f32 %v5337, %v5339
    %v5364 = vmax.f32 %v5338, %v5340
    %v5365 = vmax.f32 %v5341, %v5343
    %v5366 = vmax.f32 %v5342, %v5344
    %v5367 = vmax.f32 %v5345, %v5347
    %v5368 = vmax.f32 %v5346, %v5348
    %5369 = vst [vmem:[#allocation3] sm:$0xff] %v5349
    %5370 = vst [vmem:[#allocation3 + $0x8] sm:$0xff] %v5350
    %5371 = vst [vmem:[#allocation3 + $0x10] sm:$0xff] %v5351
    %5372 = vst [vmem:[#allocation3 + $0x18] sm:$0xff] %v5352
    %5373 = vst [vmem:[#allocation3 + $0x20] sm:$0xff] %v5353
    %5374 = vst [vmem:[#allocation3 + $0x28] sm:$0xff] %v5354
    %5375 = vst [vmem:[#allocation3 + $0x30] sm:$0xff] %v5355
    %5376 = vst [vmem:[#allocation3 + $0x38] sm:$0xff] %v5356
    %5377 = vst [vmem:[#allocation3 + $0x40] sm:$0xff] %v5357
    %5378 = vst [vmem:[#allocation3 + $0x48] sm:$0xff] %v5358
    %5379 = vst [vmem:[#allocation3 + $0x50] sm:$0xff] %v5359
    %5380 = vst [vmem:[#allocation3 + $0x58] sm:$0xff] %v5360
    %5381 = vst [vmem:[#allocation3 + $0x60] sm:$0xff] %v5361
    %5382 = vst [vmem:[#allocation3 + $0x68] sm:$0xff] %v5362
    %5383 = vst [vmem:[#allocation3 + $0x70] sm:$0xff] %v5363
    %5384 = vst [vmem:[#allocation3 + $0x78] sm:$0xff] %v5364
    %5385 = vst [vmem:[#allocation3 + $0x80] sm:$0xff] %v5365
    %5386 = vst [vmem:[#allocation3 + $0x88] sm:$0xff] %v5366
    %5387 = vst [vmem:[#allocation3 + $0x90] sm:$0xff] %v5367
    %5388 = vst [vmem:[#allocation3 + $0x98] sm:$0xff] %v5368
    %v5389 = vld [vmem:[#allocation3] ss:$2 sm:$0xff]
    %s5390 = scalar_lea.vmem [#allocation3], 16
    %v5391 = vld [vmem:[%s5390] ss:$2 sm:$0xff]
    %s5392 = scalar_lea.vmem [#allocation3], 32
    %v5393 = vld [vmem:[%s5392] ss:$2 sm:$0xff]
    %s5394 = scalar_lea.vmem [#allocation3], 48
    %v5395 = vld [vmem:[%s5394] ss:$2 sm:$0xff]
    %s5396 = scalar_lea.vmem [#allocation3], 64
    %v5397 = vld [vmem:[%s5396] ss:$2 sm:$0xff]
    %s5398 = scalar_lea.vmem [#allocation3], 80
    %v5399 = vld [vmem:[%s5398] ss:$2 sm:$0xff]
    %s5400 = scalar_lea.vmem [#allocation3], 96
    %v5401 = vld [vmem:[%s5400] ss:$2 sm:$0xff]
    %s5402 = scalar_lea.vmem [#allocation3], 112
    %v5403 = vld [vmem:[%s5402] ss:$2 sm:$0xff]
    %s5404 = scalar_lea.vmem [#allocation3], 128
    %v5405 = vld [vmem:[%s5404] ss:$2 sm:$0xff]
    %s5406 = scalar_lea.vmem [#allocation3], 144
    %v5407 = vld [vmem:[%s5406] ss:$2 sm:$0xff]
    %s5408 = scalar_lea.vmem [#allocation3], 1
    %v5409 = vld [vmem:[%s5408] ss:$2 sm:$0xff]
    %s5410 = scalar_lea.vmem [#allocation3], 17
    %v5411 = vld [vmem:[%s5410] ss:$2 sm:$0xff]
    %s5412 = scalar_lea.vmem [#allocation3], 33
    %v5413 = vld [vmem:[%s5412] ss:$2 sm:$0xff]
    %s5414 = scalar_lea.vmem [#allocation3], 49
    %v5415 = vld [vmem:[%s5414] ss:$2 sm:$0xff]
    %s5416 = scalar_lea.vmem [#allocation3], 65
    %v5417 = vld [vmem:[%s5416] ss:$2 sm:$0xff]
    %s5418 = scalar_lea.vmem [#allocation3], 81
    %v5419 = vld [vmem:[%s5418] ss:$2 sm:$0xff]
    %s5420 = scalar_lea.vmem [#allocation3], 97
    %v5421 = vld [vmem:[%s5420] ss:$2 sm:$0xff]
    %s5422 = scalar_lea.vmem [#allocation3], 113
    %v5423 = vld [vmem:[%s5422] ss:$2 sm:$0xff]
    %s5424 = scalar_lea.vmem [#allocation3], 129
    %v5425 = vld [vmem:[%s5424] ss:$2 sm:$0xff]
    %s5426 = scalar_lea.vmem [#allocation3], 145
    %v5427 = vld [vmem:[%s5426] ss:$2 sm:$0xff]
    %v5428 = vmax.f32 %v5389, %v5409
    %v5429 = vmax.f32 %v5391, %v5411
    %v5430 = vmax.f32 %v5393, %v5413
    %v5431 = vmax.f32 %v5395, %v5415
    %v5432 = vmax.f32 %v5397, %v5417
    %v5433 = vmax.f32 %v5399, %v5419
    %v5434 = vmax.f32 %v5401, %v5421
    %v5435 = vmax.f32 %v5403, %v5423
    %v5436 = vmax.f32 %v5405, %v5425
    %v5437 = vmax.f32 %v5407, %v5427
    %v5448 = vrot.slane %v5428, 1
    %vm5449 = vcmask 1041409
    %v5450 = vsel %vm5449, %v5429, %v5448
    %v5451 = vrot.slane %v5430, 7
    %vm5452 = vcmask 1042434
    %v5453 = vsel %vm5452, %v5451, %v5450
    %v5454 = vrot.slane %v5431, 6
    %vm5455 = vcmask 1043459
    %v5456 = vsel %vm5455, %v5454, %v5453
    %v5457 = vrot.slane %v5432, 5
    %vm5458 = vcmask 1044484
    %v5459 = vsel %vm5458, %v5457, %v5456
    %v5460 = vrot.slane %v5433, 1
    %v5461 = vsel %vm5449, %v5434, %v5460
    %v5462 = vrot.slane %v5435, 7
    %v5463 = vsel %vm5452, %v5462, %v5461
    %v5464 = vrot.slane %v5436, 6
    %v5465 = vsel %vm5455, %v5464, %v5463
    %v5466 = vrot.slane %v5437, 5
    %v5467 = vsel %vm5458, %v5466, %v5465
    %5470 = vrot.lane.b32.xlu0 %v5459, 16
    %v5471 = vpop.permute.xlu0 %5470
    %5472 = vrot.lane.b32.xlu0 %v5467, 16
    %v5473 = vpop.permute.xlu0 %5472
    %v5476 = vrot.slane %v5471, 1
    %v5477 = vrot.slane %v5471, 2
    %v5478 = vrot.slane %v5471, 3
    %v5479 = vrot.slane %v5471, 4
    %v5480 = vrot.slane %v5473, 1
    %v5481 = vrot.slane %v5473, 2
    %v5482 = vrot.slane %v5473, 3
    %v5483 = vrot.slane %v5473, 4
    %v5494 = vadd.f32 %v5428, %v5471
    %v5495 = vadd.f32 %v5429, %v5476
    %v5496 = vadd.f32 %v5430, %v5477
    %v5497 = vadd.f32 %v5431, %v5478
    %v5498 = vadd.f32 %v5432, %v5479
    %v5499 = vadd.f32 %v5433, %v5473
    %v5500 = vadd.f32 %v5434, %v5480
    %v5501 = vadd.f32 %v5435, %v5481
    %v5502 = vadd.f32 %v5436, %v5482
    %v5503 = vadd.f32 %v5437, %v5483
    %v5504 = vrot.slane %v5428, 2
    %v5505 = vrot.slane %v5429, 1
    %v5506 = vsel %vm5449, %v5505, %v5504
    %v5507 = vsel %vm5452, %v5430, %v5506
    %v5508 = vrot.slane %v5431, 7
    %v5509 = vsel %vm5455, %v5508, %v5507
    %v5510 = vrot.slane %v5432, 6
    %v5511 = vsel %vm5458, %v5510, %v5509
    %v5512 = vrot.slane %v5433, 2
    %v5513 = vrot.slane %v5434, 1
    %v5514 = vsel %vm5449, %v5513, %v5512
    %v5515 = vsel %vm5452, %v5435, %v5514
    %v5516 = vrot.slane %v5436, 7
    %v5517 = vsel %vm5455, %v5516, %v5515
    %v5518 = vrot.slane %v5437, 6
    %v5519 = vsel %vm5458, %v5518, %v5517
    %5522 = vrot.lane.b32.xlu0 %v5511, 32
    %v5523 = vpop.permute.xlu0 %5522
    %5524 = vrot.lane.b32.xlu0 %v5519, 32
    %v5525 = vpop.permute.xlu0 %5524
    %v5528 = vrot.slane %v5523, 1
    %v5529 = vrot.slane %v5523, 2
    %v5530 = vrot.slane %v5523, 3
    %v5531 = vrot.slane %v5523, 4
    %v5532 = vrot.slane %v5525, 1
    %v5533 = vrot.slane %v5525, 2
    %v5534 = vrot.slane %v5525, 3
    %v5535 = vrot.slane %v5525, 4
    %v5546 = vadd.f32 %v5494, %v5523
    %v5547 = vadd.f32 %v5495, %v5528
    %v5548 = vadd.f32 %v5496, %v5529
    %v5549 = vadd.f32 %v5497, %v5530
    %v5550 = vadd.f32 %v5498, %v5531
    %v5551 = vadd.f32 %v5499, %v5525
    %v5552 = vadd.f32 %v5500, %v5532
    %v5553 = vadd.f32 %v5501, %v5533
    %v5554 = vadd.f32 %v5502, %v5534
    %v5555 = vadd.f32 %v5503, %v5535
    %v5556 = vrot.slane %v5428, 3
    %v5557 = vrot.slane %v5429, 2
    %v5558 = vsel %vm5449, %v5557, %v5556
    %v5559 = vrot.slane %v5430, 1
    %v5560 = vsel %vm5452, %v5559, %v5558
    %v5561 = vsel %vm5455, %v5431, %v5560
    %v5562 = vrot.slane %v5432, 7
    %v5563 = vsel %vm5458, %v5562, %v5561
    %v5564 = vrot.slane %v5433, 3
    %v5565 = vrot.slane %v5434, 2
    %v5566 = vsel %vm5449, %v5565, %v5564
    %v5567 = vrot.slane %v5435, 1
    %v5568 = vsel %vm5452, %v5567, %v5566
    %v5569 = vsel %vm5455, %v5436, %v5568
    %v5570 = vrot.slane %v5437, 7
    %v5571 = vsel %vm5458, %v5570, %v5569
    %5574 = vrot.lane.b32.xlu0 %v5563, 48
    %v5575 = vpop.permute.xlu0 %5574
    %5576 = vrot.lane.b32.xlu0 %v5571, 48
    %v5577 = vpop.permute.xlu0 %5576
    %v5580 = vrot.slane %v5575, 1
    %v5581 = vrot.slane %v5575, 2
    %v5582 = vrot.slane %v5575, 3
    %v5583 = vrot.slane %v5575, 4
    %v5584 = vrot.slane %v5577, 1
    %v5585 = vrot.slane %v5577, 2
    %v5586 = vrot.slane %v5577, 3
    %v5587 = vrot.slane %v5577, 4
    %v5598 = vadd.f32 %v5546, %v5575
    %v5599 = vadd.f32 %v5547, %v5580
    %v5600 = vadd.f32 %v5548, %v5581
    %v5601 = vadd.f32 %v5549, %v5582
    %v5602 = vadd.f32 %v5550, %v5583
    %v5603 = vadd.f32 %v5551, %v5577
    %v5604 = vadd.f32 %v5552, %v5584
    %v5605 = vadd.f32 %v5553, %v5585
    %v5606 = vadd.f32 %v5554, %v5586
    %v5607 = vadd.f32 %v5555, %v5587
    %v5608 = vrot.slane %v5428, 4
    %v5609 = vrot.slane %v5429, 3
    %v5610 = vsel %vm5449, %v5609, %v5608
    %v5611 = vrot.slane %v5430, 2
    %v5612 = vsel %vm5452, %v5611, %v5610
    %v5613 = vrot.slane %v5431, 1
    %v5614 = vsel %vm5455, %v5613, %v5612
    %v5615 = vsel %vm5458, %v5432, %v5614
    %v5616 = vrot.slane %v5433, 4
    %v5617 = vrot.slane %v5434, 3
    %v5618 = vsel %vm5449, %v5617, %v5616
    %v5619 = vrot.slane %v5435, 2
    %v5620 = vsel %vm5452, %v5619, %v5618
    %v5621 = vrot.slane %v5436, 1
    %v5622 = vsel %vm5455, %v5621, %v5620
    %v5623 = vsel %vm5458, %v5437, %v5622
    %5626 = vrot.lane.b32.xlu0 %v5615, 64
    %v5627 = vpop.permute.xlu0 %5626
    %5628 = vrot.lane.b32.xlu0 %v5623, 64
    %v5629 = vpop.permute.xlu0 %5628
    %v5632 = vrot.slane %v5627, 1
    %v5633 = vrot.slane %v5627, 2
    %v5634 = vrot.slane %v5627, 3
    %v5635 = vrot.slane %v5627, 4
    %v5636 = vrot.slane %v5629, 1
    %v5637 = vrot.slane %v5629, 2
    %v5638 = vrot.slane %v5629, 3
    %v5639 = vrot.slane %v5629, 4
    %v5650 = vadd.f32 %v5598, %v5627
    %v5651 = vadd.f32 %v5599, %v5632
    %v5652 = vadd.f32 %v5600, %v5633
    %v5653 = vadd.f32 %v5601, %v5634
    %v5654 = vadd.f32 %v5602, %v5635
    %v5655 = vadd.f32 %v5603, %v5629
    %v5656 = vadd.f32 %v5604, %v5636
    %v5657 = vadd.f32 %v5605, %v5637
    %v5658 = vadd.f32 %v5606, %v5638
    %v5659 = vadd.f32 %v5607, %v5639
    %v5660 = vpack.c.bf16 %v5650, %v5650
    %v5661 = vpack.c.bf16 %v5655, %v5655
    %v5662 = vpack.c.bf16 %v5651, %v5651
    %v5663 = vpack.c.bf16 %v5656, %v5656
    %v5664 = vpack.c.bf16 %v5652, %v5652
    %v5665 = vpack.c.bf16 %v5657, %v5657
    %v5666 = vpack.c.bf16 %v5653, %v5653
    %v5667 = vpack.c.bf16 %v5658, %v5658
    %v5668 = vpack.c.bf16 %v5654, %v5654
    %v5669 = vpack.c.bf16 %v5659, %v5659
    %v5672 = vunpack.c.l.b16 %v5660
    %v5673 = vunpack.c.l.b16 %v5661
    %v5674 = vrot.slane %v5673, 7
    %v5675 = vsel %vm5449, %v5674, %v5672
    %v5676 = vpack.c.b16 %v5675, %v5675
    %v5680 = vunpack.c.l.b16 %v5662
    %v5681 = vunpack.c.l.b16 %v5663
    %v5682 = vrot.slane %v5681, 7
    %v5683 = vsel %vm5449, %v5682, %v5680
    %v5684 = vpack.c.b16 %v5683, %v5683
    %v5688 = vunpack.c.l.b16 %v5664
    %v5689 = vunpack.c.l.b16 %v5665
    %v5690 = vrot.slane %v5689, 7
    %v5691 = vsel %vm5449, %v5690, %v5688
    %v5692 = vpack.c.b16 %v5691, %v5691
    %v5696 = vunpack.c.l.b16 %v5666
    %v5697 = vunpack.c.l.b16 %v5667
    %v5698 = vrot.slane %v5697, 7
    %v5699 = vsel %vm5449, %v5698, %v5696
    %v5700 = vpack.c.b16 %v5699, %v5699
    %v5704 = vunpack.c.l.b16 %v5668
    %v5705 = vunpack.c.l.b16 %v5669
    %v5706 = vrot.slane %v5705, 7
    %v5707 = vsel %vm5449, %v5706, %v5704
    %v5708 = vpack.c.b16 %v5707, %v5707
    %v5710 = vld [vmem:[%s5] sm:$0xf]
    %v5711 = vld [vmem:[%s5 + $0x4] sm:$0xf]
    %v5712 = vld [vmem:[%s5 + $0x8] sm:$0xf]
    %v5713 = vld [vmem:[%s5 + $0xc] sm:$0xf]
    %v5714 = vld [vmem:[%s5 + $0x10] sm:$0xf]
    %v5715 = vld [vmem:[%s5 + $0x14] sm:$0xf]
    %v5716 = vld [vmem:[%s5 + $0x18] sm:$0xf]
    %v5717 = vld [vmem:[%s5 + $0x1c] sm:$0xf]
    %v5718 = vld [vmem:[%s5 + $0x20] sm:$0xf]
    %v5719 = vld [vmem:[%s5 + $0x24] sm:$0xf]
    %v5720 = vld [vmem:[%s5 + $0x28] sm:$0xf]
    %v5721 = vld [vmem:[%s5 + $0x2c] sm:$0xf]
    %v5722 = vld [vmem:[%s5 + $0x30] sm:$0xf]
    %v5723 = vld [vmem:[%s5 + $0x34] sm:$0xf]
    %v5724 = vld [vmem:[%s5 + $0x38] sm:$0xf]
    %v5725 = vld [vmem:[%s5 + $0x3c] sm:$0xf]
    %v5726 = vld [vmem:[%s5 + $0x40] sm:$0xf]
    %v5727 = vld [vmem:[%s5 + $0x44] sm:$0xf]
    %v5728 = vld [vmem:[%s5 + $0x48] sm:$0xf]
    %v5729 = vld [vmem:[%s5 + $0x4c] sm:$0xf]
    %v5730 = vld [vmem:[%s5 + $0x50] sm:$0xf]
    %v5731 = vld [vmem:[%s5 + $0x54] sm:$0xf]
    %v5732 = vld [vmem:[%s5 + $0x58] sm:$0xf]
    %v5733 = vld [vmem:[%s5 + $0x5c] sm:$0xf]
    %v5734 = vld [vmem:[%s5 + $0x60] sm:$0xf]
    %v5735 = vld [vmem:[%s5 + $0x64] sm:$0xf]
    %v5736 = vld [vmem:[%s5 + $0x68] sm:$0xf]
    %v5737 = vld [vmem:[%s5 + $0x6c] sm:$0xf]
    %v5738 = vld [vmem:[%s5 + $0x70] sm:$0xf]
    %v5739 = vld [vmem:[%s5 + $0x74] sm:$0xf]
    %v5740 = vld [vmem:[%s5 + $0x78] sm:$0xf]
    %v5741 = vld [vmem:[%s5 + $0x7c] sm:$0xf]
    %v5742 = vld [vmem:[%s5 + $0x80] sm:$0xf]
    %v5743 = vld [vmem:[%s5 + $0x84] sm:$0xf]
    %v5744 = vld [vmem:[%s5 + $0x88] sm:$0xf]
    %v5745 = vld [vmem:[%s5 + $0x8c] sm:$0xf]
    %v5746 = vld [vmem:[%s5 + $0x90] sm:$0xf]
    %v5747 = vld [vmem:[%s5 + $0x94] sm:$0xf]
    %v5748 = vld [vmem:[%s5 + $0x98] sm:$0xf]
    %v5749 = vld [vmem:[%s5 + $0x9c] sm:$0xf]
    %v5750 = vld [vmem:[%s5 + $0xa0] sm:$0xf]
    %v5751 = vld [vmem:[%s5 + $0xa4] sm:$0xf]
    %v5752 = vld [vmem:[%s5 + $0xa8] sm:$0xf]
    %v5753 = vld [vmem:[%s5 + $0xac] sm:$0xf]
    %v5754 = vld [vmem:[%s5 + $0xb0] sm:$0xf]
    %v5755 = vld [vmem:[%s5 + $0xb4] sm:$0xf]
    %v5756 = vld [vmem:[%s5 + $0xb8] sm:$0xf]
    %v5757 = vld [vmem:[%s5 + $0xbc] sm:$0xf]
    %v5758 = vld [vmem:[%s5 + $0xc0] sm:$0xf]
    %v5759 = vld [vmem:[%s5 + $0xc4] sm:$0xf]
    %v5760 = vld [vmem:[%s5 + $0xc8] sm:$0xf]
    %v5761 = vld [vmem:[%s5 + $0xcc] sm:$0xf]
    %v5762 = vld [vmem:[%s5 + $0xd0] sm:$0xf]
    %v5763 = vld [vmem:[%s5 + $0xd4] sm:$0xf]
    %v5764 = vld [vmem:[%s5 + $0xd8] sm:$0xf]
    %v5765 = vld [vmem:[%s5 + $0xdc] sm:$0xf]
    %v5766 = vld [vmem:[%s5 + $0xe0] sm:$0xf]
    %v5767 = vld [vmem:[%s5 + $0xe4] sm:$0xf]
    %v5768 = vld [vmem:[%s5 + $0xe8] sm:$0xf]
    %v5769 = vld [vmem:[%s5 + $0xec] sm:$0xf]
    %v5770 = vld [vmem:[%s5 + $0xf0] sm:$0xf]
    %v5771 = vld [vmem:[%s5 + $0xf4] sm:$0xf]
    %v5772 = vld [vmem:[%s5 + $0xf8] sm:$0xf]
    %v5773 = vld [vmem:[%s5 + $0xfc] sm:$0xf]
    %v5774 = vld [vmem:[%s5 + $0x100] sm:$0xf]
    %v5775 = vld [vmem:[%s5 + $0x104] sm:$0xf]
    %v5776 = vld [vmem:[%s5 + $0x108] sm:$0xf]
    %v5777 = vld [vmem:[%s5 + $0x10c] sm:$0xf]
    %v5778 = vld [vmem:[%s5 + $0x110] sm:$0xf]
    %v5779 = vld [vmem:[%s5 + $0x114] sm:$0xf]
    %v5780 = vld [vmem:[%s5 + $0x118] sm:$0xf]
    %v5781 = vld [vmem:[%s5 + $0x11c] sm:$0xf]
    %v5782 = vld [vmem:[%s5 + $0x120] sm:$0xf]
    %v5783 = vld [vmem:[%s5 + $0x124] sm:$0xf]
    %v5784 = vld [vmem:[%s5 + $0x128] sm:$0xf]
    %v5785 = vld [vmem:[%s5 + $0x12c] sm:$0xf]
    %v5786 = vld [vmem:[%s5 + $0x130] sm:$0xf]
    %v5787 = vld [vmem:[%s5 + $0x134] sm:$0xf]
    %v5788 = vld [vmem:[%s5 + $0x138] sm:$0xf]
    %v5789 = vld [vmem:[%s5 + $0x13c] sm:$0xf]
    %v5790 = vld [vmem:[%s6] sm:$0x1]
    %v5792 = vlaneseq
    %v5793 = vshrl.u32 %v5792, 7
    %v5794 = vsub.s32 0, %v5793
    %v5795 = vrot.slane %v5790, %v5794
    %v5877 = vunpack.c.l.b16 %v5710
    %v5878 = vunpack.c.l.b16 %v5711
    %v5879 = vunpack.c.l.b16 %v5712
    %v5880 = vunpack.c.l.b16 %v5713
    %v5881 = vunpack.c.l.b16 %v5714
    %v5882 = vunpack.c.l.b16 %v5715
    %v5883 = vunpack.c.l.b16 %v5716
    %v5884 = vunpack.c.l.b16 %v5717
    %v5885 = vunpack.c.l.b16 %v5718
    %v5886 = vunpack.c.l.b16 %v5719
    %v5887 = vunpack.c.l.b16 %v5720
    %v5888 = vunpack.c.l.b16 %v5721
    %v5889 = vunpack.c.l.b16 %v5722
    %v5890 = vunpack.c.l.b16 %v5723
    %v5891 = vunpack.c.l.b16 %v5724
    %v5892 = vunpack.c.l.b16 %v5725
    %v5893 = vunpack.c.l.b16 %v5726
    %v5894 = vunpack.c.l.b16 %v5727
    %v5895 = vunpack.c.l.b16 %v5728
    %v5896 = vunpack.c.l.b16 %v5729
    %v5897 = vunpack.c.l.b16 %v5730
    %v5898 = vunpack.c.l.b16 %v5731
    %v5899 = vunpack.c.l.b16 %v5732
    %v5900 = vunpack.c.l.b16 %v5733
    %v5901 = vunpack.c.l.b16 %v5734
    %v5902 = vunpack.c.l.b16 %v5735
    %v5903 = vunpack.c.l.b16 %v5736
    %v5904 = vunpack.c.l.b16 %v5737
    %v5905 = vunpack.c.l.b16 %v5738
    %v5906 = vunpack.c.l.b16 %v5739
    %v5907 = vunpack.c.l.b16 %v5740
    %v5908 = vunpack.c.l.b16 %v5741
    %v5909 = vunpack.c.l.b16 %v5742
    %v5910 = vunpack.c.l.b16 %v5743
    %v5911 = vunpack.c.l.b16 %v5744
    %v5912 = vunpack.c.l.b16 %v5745
    %v5913 = vunpack.c.l.b16 %v5746
    %v5914 = vunpack.c.l.b16 %v5747
    %v5915 = vunpack.c.l.b16 %v5748
    %v5916 = vunpack.c.l.b16 %v5749
    %v5917 = vunpack.c.l.b16 %v5750
    %v5918 = vunpack.c.l.b16 %v5751
    %v5919 = vunpack.c.l.b16 %v5752
    %v5920 = vunpack.c.l.b16 %v5753
    %v5921 = vunpack.c.l.b16 %v5754
    %v5922 = vunpack.c.l.b16 %v5755
    %v5923 = vunpack.c.l.b16 %v5756
    %v5924 = vunpack.c.l.b16 %v5757
    %v5925 = vunpack.c.l.b16 %v5758
    %v5926 = vunpack.c.l.b16 %v5759
    %v5927 = vunpack.c.l.b16 %v5760
    %v5928 = vunpack.c.l.b16 %v5761
    %v5929 = vunpack.c.l.b16 %v5762
    %v5930 = vunpack.c.l.b16 %v5763
    %v5931 = vunpack.c.l.b16 %v5764
    %v5932 = vunpack.c.l.b16 %v5765
    %v5933 = vunpack.c.l.b16 %v5766
    %v5934 = vunpack.c.l.b16 %v5767
    %v5935 = vunpack.c.l.b16 %v5768
    %v5936 = vunpack.c.l.b16 %v5769
    %v5937 = vunpack.c.l.b16 %v5770
    %v5938 = vunpack.c.l.b16 %v5771
    %v5939 = vunpack.c.l.b16 %v5772
    %v5940 = vunpack.c.l.b16 %v5773
    %v5941 = vunpack.c.l.b16 %v5774
    %v5942 = vunpack.c.l.b16 %v5775
    %v5943 = vunpack.c.l.b16 %v5776
    %v5944 = vunpack.c.l.b16 %v5777
    %v5945 = vunpack.c.l.b16 %v5778
    %v5946 = vunpack.c.l.b16 %v5779
    %v5947 = vunpack.c.l.b16 %v5780
    %v5948 = vunpack.c.l.b16 %v5781
    %v5949 = vunpack.c.l.b16 %v5782
    %v5950 = vunpack.c.l.b16 %v5783
    %v5951 = vunpack.c.l.b16 %v5784
    %v5952 = vunpack.c.l.b16 %v5785
    %v5953 = vunpack.c.l.b16 %v5786
    %v5954 = vunpack.c.l.b16 %v5787
    %v5955 = vunpack.c.l.b16 %v5788
    %v5956 = vunpack.c.l.b16 %v5789
    %v5957 = vpack.c.b16 %v5878, %v5877
    %v5958 = vpack.c.b16 %v5880, %v5879
    %v5959 = vpack.c.b16 %v5882, %v5881
    %v5960 = vpack.c.b16 %v5884, %v5883
    %v5961 = vpack.c.b16 %v5886, %v5885
    %v5962 = vpack.c.b16 %v5888, %v5887
    %v5963 = vpack.c.b16 %v5890, %v5889
    %v5964 = vpack.c.b16 %v5892, %v5891
    %v5965 = vpack.c.b16 %v5894, %v5893
    %v5966 = vpack.c.b16 %v5896, %v5895
    %v5967 = vpack.c.b16 %v5898, %v5897
    %v5968 = vpack.c.b16 %v5900, %v5899
    %v5969 = vpack.c.b16 %v5902, %v5901
    %v5970 = vpack.c.b16 %v5904, %v5903
    %v5971 = vpack.c.b16 %v5906, %v5905
    %v5972 = vpack.c.b16 %v5908, %v5907
    %v5973 = vpack.c.b16 %v5910, %v5909
    %v5974 = vpack.c.b16 %v5912, %v5911
    %v5975 = vpack.c.b16 %v5914, %v5913
    %v5976 = vpack.c.b16 %v5916, %v5915
    %v5977 = vpack.c.b16 %v5918, %v5917
    %v5978 = vpack.c.b16 %v5920, %v5919
    %v5979 = vpack.c.b16 %v5922, %v5921
    %v5980 = vpack.c.b16 %v5924, %v5923
    %v5981 = vpack.c.b16 %v5926, %v5925
    %v5982 = vpack.c.b16 %v5928, %v5927
    %v5983 = vpack.c.b16 %v5930, %v5929
    %v5984 = vpack.c.b16 %v5932, %v5931
    %v5985 = vpack.c.b16 %v5934, %v5933
    %v5986 = vpack.c.b16 %v5936, %v5935
    %v5987 = vpack.c.b16 %v5938, %v5937
    %v5988 = vpack.c.b16 %v5940, %v5939
    %v5989 = vpack.c.b16 %v5942, %v5941
    %v5990 = vpack.c.b16 %v5944, %v5943
    %v5991 = vpack.c.b16 %v5946, %v5945
    %v5992 = vpack.c.b16 %v5948, %v5947
    %v5993 = vpack.c.b16 %v5950, %v5949
    %v5994 = vpack.c.b16 %v5952, %v5951
    %v5995 = vpack.c.b16 %v5954, %v5953
    %v5996 = vpack.c.b16 %v5956, %v5955
    %6037 = vmatprep.subr.bf16.mxu0 0
    %6038 = vmatpush1.bf16.msra.mxu0 %v5957
    %6039 = vmatprep.subr.bf16.mxu0 0
    %6040 = vmatpush1.bf16.msra.mxu0 %v5958
    %6041 = vmatprep.subr.bf16.mxu0 0
    %6042 = vmatpush1.bf16.msra.mxu0 %v5959
    %6043 = vmatprep.subr.bf16.mxu0 0
    %6044 = vmatpush1.bf16.msra.mxu0 %v5960
    %6045 = vmatprep.subr.bf16.mxu0 0
    %6046 = vmatpush1.bf16.msra.mxu0 %v5961
    %6047 = vmatprep.subr.bf16.mxu0 0
    %6048 = vmatpush1.bf16.msra.mxu0 %v5962
    %6049 = vmatprep.subr.bf16.mxu0 0
    %6050 = vmatpush1.bf16.msra.mxu0 %v5963
    %6051 = vmatprep.subr.bf16.mxu0 0
    %6052 = vmatpush1.bf16.msra.mxu0 %v5964
    %6053 = vmatprep.subr.bf16.mxu0 0
    %6054 = vmatpush1.bf16.msra.mxu0 %v5965
    %6055 = vmatprep.subr.bf16.mxu0 0
    %6056 = vmatpush1.bf16.msra.mxu0 %v5966
    %6057 = vmatprep.subr.bf16.mxu0 0
    %6058 = vmatpush1.bf16.msra.mxu0 %v5967
    %6059 = vmatprep.subr.bf16.mxu0 0
    %6060 = vmatpush1.bf16.msra.mxu0 %v5968
    %6061 = vmatprep.subr.bf16.mxu0 0
    %6062 = vmatpush1.bf16.msra.mxu0 %v5969
    %6063 = vmatprep.subr.bf16.mxu0 0
    %6064 = vmatpush1.bf16.msra.mxu0 %v5970
    %6065 = vmatprep.subr.bf16.mxu0 0
    %6066 = vmatpush1.bf16.msra.mxu0 %v5971
    %6067 = vmatprep.subr.bf16.mxu0 0
    %6068 = vmatpush1.bf16.msra.mxu0 %v5972
    %6069 = vmatprep.mubr.bf16.mxu0 %v5684
    %6070 = vmatmul.mubr.bf16.gmra.mrb[0].mxu0 %v5676
    %v6071 = vpop.f32.mrb[0].mxu0
    %v6072 = vadd.f32 %v5795, %v6071
    %v6073 = vpop.f32.mrb[0].mxu0
    %v6074 = vpop.f32.mrb[0].mxu0
    %v6075 = vpop.f32.mrb[0].mxu0
    %6076 = vdwg.mxu0
    %6077 = vmatprep.subr.bf16.mxu0 0
    %6078 = vmatpush1.bf16.msra.mxu0 %v5973
    %6079 = vmatprep.subr.bf16.mxu0 0
    %6080 = vmatpush1.bf16.msra.mxu0 %v5974
    %6081 = vmatprep.subr.bf16.mxu0 0
    %6082 = vmatpush1.bf16.msra.mxu0 %v5975
    %6083 = vmatprep.subr.bf16.mxu0 0
    %6084 = vmatpush1.bf16.msra.mxu0 %v5976
    %6085 = vmatprep.subr.bf16.mxu0 0
    %6086 = vmatpush1.bf16.msra.mxu0 %v5977
    %6087 = vmatprep.subr.bf16.mxu0 0
    %6088 = vmatpush1.bf16.msra.mxu0 %v5978
    %6089 = vmatprep.subr.bf16.mxu0 0
    %6090 = vmatpush1.bf16.msra.mxu0 %v5979
    %6091 = vmatprep.subr.bf16.mxu0 0
    %6092 = vmatpush1.bf16.msra.mxu0 %v5980
    %6093 = vmatprep.subr.bf16.mxu0 0
    %6094 = vmatpush1.bf16.msra.mxu0 %v5981
    %6095 = vmatprep.subr.bf16.mxu0 0
    %6096 = vmatpush1.bf16.msra.mxu0 %v5982
    %6097 = vmatprep.subr.bf16.mxu0 0
    %6098 = vmatpush1.bf16.msra.mxu0 %v5983
    %6099 = vmatprep.subr.bf16.mxu0 0
    %6100 = vmatpush1.bf16.msra.mxu0 %v5984
    %6101 = vmatprep.subr.bf16.mxu0 0
    %6102 = vmatpush1.bf16.msra.mxu0 %v5985
    %6103 = vmatprep.subr.bf16.mxu0 0
    %6104 = vmatpush1.bf16.msra.mxu0 %v5986
    %6105 = vmatprep.subr.bf16.mxu0 0
    %6106 = vmatpush1.bf16.msra.mxu0 %v5987
    %6107 = vmatprep.subr.bf16.mxu0 0
    %6108 = vmatpush1.bf16.msra.mxu0 %v5988
    %6109 = vmatprep.mubr.bf16.mxu0 %v5700
    %6110 = vmatmul.mubr.bf16.gmra.mrb[0].mxu0 %v5692
    %v6111 = vpop.f32.mrb[0].mxu0
    %v6112 = vadd.f32 %v6072, %v6111
    %v6113 = vpop.f32.mrb[0].mxu0
    %v6114 = vpop.f32.mrb[0].mxu0
    %v6115 = vpop.f32.mrb[0].mxu0
    %6116 = vdwg.mxu0
    %6117 = vmatprep.subr.bf16.mxu0 0
    %6118 = vmatpush1.bf16.msra.mxu0 %v5989
    %6119 = vmatprep.subr.bf16.mxu0 0
    %6120 = vmatpush1.bf16.msra.mxu0 %v5990
    %6121 = vmatprep.subr.bf16.mxu0 0
    %6122 = vmatpush1.bf16.msra.mxu0 %v5991
    %6123 = vmatprep.subr.bf16.mxu0 0
    %6124 = vmatpush1.bf16.msra.mxu0 %v5992
    %6125 = vmatprep.subr.bf16.mxu0 0
    %6126 = vmatpush1.bf16.msra.mxu0 %v5993
    %6127 = vmatprep.subr.bf16.mxu0 0
    %6128 = vmatpush1.bf16.msra.mxu0 %v5994
    %6129 = vmatprep.subr.bf16.mxu0 0
    %6130 = vmatpush1.bf16.msra.mxu0 %v5995
    %6131 = vmatprep.subr.bf16.mxu0 0
    %6132 = vmatpush1.bf16.msra.mxu0 %v5996
    %6133 = vmatprep.subr.bf16.mxu0 0
    %6134 = vmatpush1.bf16.msra.mxu0 0
    %6135 = vmatprep.subr.bf16.mxu0 0
    %6136 = vmatpush1.bf16.msra.mxu0 0
    %6137 = vmatprep.subr.bf16.mxu0 0
    %6138 = vmatpush1.bf16.msra.mxu0 0
    %6139 = vmatprep.subr.bf16.mxu0 0
    %6140 = vmatpush1.bf16.msra.mxu0 0
    %6141 = vmatprep.subr.bf16.mxu0 0
    %6142 = vmatpush1.bf16.msra.mxu0 0
    %6143 = vmatprep.subr.bf16.mxu0 0
    %6144 = vmatpush1.bf16.msra.mxu0 0
    %6145 = vmatprep.subr.bf16.mxu0 0
    %6146 = vmatpush1.bf16.msra.mxu0 0
    %6147 = vmatprep.subr.bf16.mxu0 0
    %6148 = vmatpush1.bf16.msra.mxu0 0
    %6149 = vmatprep.mubr.bf16.mxu0 0
    %6150 = vmatmul.mubr.bf16.gmra.mrb[0].mxu0 %v5708
    %v6151 = vpop.f32.mrb[0].mxu0
    %v6152 = vadd.f32 %v6112, %v6151
    %v6153 = vpop.f32.mrb[0].mxu0
    %v6154 = vpop.f32.mrb[0].mxu0
    %v6155 = vpop.f32.mrb[0].mxu0
    %6156 = vdwg.mxu0
    %v6157 = vmax.f32 %v6152, 0.0
    %v6158 = vpack.c.bf16 %v6157, %v6157
    %v6159 = vld [vmem:[%s7] sm:$0xf]
    %v6160 = vld [vmem:[%s7 + $0x4] sm:$0xf]
    %v6161 = vld [vmem:[%s7 + $0x8] sm:$0xf]
    %v6162 = vld [vmem:[%s7 + $0xc] sm:$0xf]
    %v6163 = vld [vmem:[%s7 + $0x10] sm:$0xf]
    %v6164 = vld [vmem:[%s7 + $0x14] sm:$0xf]
    %v6165 = vld [vmem:[%s7 + $0x18] sm:$0xf]
    %v6166 = vld [vmem:[%s7 + $0x1c] sm:$0xf]
    %v6167 = vld [vmem:[%s7 + $0x20] sm:$0xf]
    %v6168 = vld [vmem:[%s7 + $0x24] sm:$0xf]
    %v6169 = vld [vmem:[%s7 + $0x28] sm:$0xf]
    %v6170 = vld [vmem:[%s7 + $0x2c] sm:$0xf]
    %v6171 = vld [vmem:[%s7 + $0x30] sm:$0xf]
    %v6172 = vld [vmem:[%s7 + $0x34] sm:$0xf]
    %v6173 = vld [vmem:[%s7 + $0x38] sm:$0xf]
    %v6174 = vld [vmem:[%s7 + $0x3c] sm:$0xf]
    %v6175 = vld [vmem:[%s8] sm:$0x1]
    %v6177 = vlaneseq
    %v6178 = vshrl.u32 %v6177, 7
    %v6179 = vsub.s32 0, %v6178
    %v6180 = vrot.slane %v6175, %v6179
    %v6198 = vunpack.c.l.b16 %v6159
    %v6199 = vunpack.c.l.b16 %v6160
    %v6200 = vunpack.c.l.b16 %v6161
    %v6201 = vunpack.c.l.b16 %v6162
    %v6202 = vunpack.c.l.b16 %v6163
    %v6203 = vunpack.c.l.b16 %v6164
    %v6204 = vunpack.c.l.b16 %v6165
    %v6205 = vunpack.c.l.b16 %v6166
    %v6206 = vunpack.c.l.b16 %v6167
    %v6207 = vunpack.c.l.b16 %v6168
    %v6208 = vunpack.c.l.b16 %v6169
    %v6209 = vunpack.c.l.b16 %v6170
    %v6210 = vunpack.c.l.b16 %v6171
    %v6211 = vunpack.c.l.b16 %v6172
    %v6212 = vunpack.c.l.b16 %v6173
    %v6213 = vunpack.c.l.b16 %v6174
    %v6214 = vpack.c.b16 %v6199, %v6198
    %v6215 = vpack.c.b16 %v6201, %v6200
    %v6216 = vpack.c.b16 %v6203, %v6202
    %v6217 = vpack.c.b16 %v6205, %v6204
    %v6218 = vpack.c.b16 %v6207, %v6206
    %v6219 = vpack.c.b16 %v6209, %v6208
    %v6220 = vpack.c.b16 %v6211, %v6210
    %v6221 = vpack.c.b16 %v6213, %v6212
    %6230 = vmatprep.subr.bf16.mxu0 0
    %6231 = vmatpush1.bf16.msra.mxu0 %v6214
    %6232 = vmatprep.subr.bf16.mxu0 0
    %6233 = vmatpush1.bf16.msra.mxu0 %v6215
    %6234 = vmatprep.subr.bf16.mxu0 0
    %6235 = vmatpush1.bf16.msra.mxu0 %v6216
    %6236 = vmatprep.subr.bf16.mxu0 0
    %6237 = vmatpush1.bf16.msra.mxu0 %v6217
    %6238 = vmatprep.subr.bf16.mxu0 0
    %6239 = vmatpush1.bf16.msra.mxu0 %v6218
    %6240 = vmatprep.subr.bf16.mxu0 0
    %6241 = vmatpush1.bf16.msra.mxu0 %v6219
    %6242 = vmatprep.subr.bf16.mxu0 0
    %6243 = vmatpush1.bf16.msra.mxu0 %v6220
    %6244 = vmatprep.subr.bf16.mxu0 0
    %6245 = vmatpush1.bf16.msra.mxu0 %v6221
    %6246 = vmatprep.subr.bf16.mxu0 0
    %6247 = vmatpush1.bf16.msra.mxu0 0
    %6248 = vmatprep.subr.bf16.mxu0 0
    %6249 = vmatpush1.bf16.msra.mxu0 0
    %6250 = vmatprep.subr.bf16.mxu0 0
    %6251 = vmatpush1.bf16.msra.mxu0 0
    %6252 = vmatprep.subr.bf16.mxu0 0
    %6253 = vmatpush1.bf16.msra.mxu0 0
    %6254 = vmatprep.subr.bf16.mxu0 0
    %6255 = vmatpush1.bf16.msra.mxu0 0
    %6256 = vmatprep.subr.bf16.mxu0 0
    %6257 = vmatpush1.bf16.msra.mxu0 0
    %6258 = vmatprep.subr.bf16.mxu0 0
    %6259 = vmatpush1.bf16.msra.mxu0 0
    %6260 = vmatprep.subr.bf16.mxu0 0
    %6261 = vmatpush1.bf16.msra.mxu0 0
    %6262 = vmatprep.mubr.bf16.mxu0 0
    %6263 = vmatmul.mubr.bf16.gmra.mrb[0].mxu0 %v6158
    %v6264 = vpop.f32.mrb[0].mxu0
    %v6265 = vadd.f32 %v6180, %v6264
    %v6266 = vpop.f32.mrb[0].mxu0
    %v6267 = vpop.f32.mrb[0].mxu0
    %v6268 = vpop.f32.mrb[0].mxu0
    %6269 = vdwg.mxu0
    %v6270 = vmax.f32 %v6265, 0.0
    %v6271 = vpack.c.bf16 %v6270, %v6270
    %v6272 = vld [vmem:[%s9] sm:$0xf]
    %v6273 = vld [vmem:[%s9 + $0x4] sm:$0xf]
    %v6274 = vld [vmem:[%s9 + $0x8] sm:$0xf]
    %v6275 = vld [vmem:[%s9 + $0xc] sm:$0xf]
    %v6276 = vld [vmem:[%s9 + $0x10] sm:$0xf]
    %v6277 = vld [vmem:[%s9 + $0x14] sm:$0xf]
    %v6278 = vld [vmem:[%s9 + $0x18] sm:$0xf]
    %v6279 = vld [vmem:[%s9 + $0x1c] sm:$0xf]
    %v6280 = vld [vmem:[%s9 + $0x20] sm:$0xf]
    %v6281 = vld [vmem:[%s9 + $0x24] sm:$0xf]
    %v6282 = vld [vmem:[%s9 + $0x28] sm:$0xf]
    %v6283 = vld [vmem:[%s9 + $0x2c] sm:$0xf]
    %v6284 = vld [vmem:[%s9 + $0x30] sm:$0xf]
    %v6285 = vld [vmem:[%s9 + $0x34] sm:$0xf]
    %v6286 = vld [vmem:[%s9 + $0x38] sm:$0xf]
    %v6287 = vld [vmem:[%s9 + $0x3c] sm:$0xf]
    %v6288 = vld [vmem:[%s10] sm:$0x1]
    %v6290 = vlaneseq
    %v6291 = vshrl.u32 %v6290, 7
    %v6292 = vsub.s32 0, %v6291
    %v6293 = vrot.slane %v6288, %v6292
    %v6311 = vunpack.c.l.b16 %v6272
    %v6312 = vunpack.c.l.b16 %v6273
    %v6313 = vunpack.c.l.b16 %v6274
    %v6314 = vunpack.c.l.b16 %v6275
    %v6315 = vunpack.c.l.b16 %v6276
    %v6316 = vunpack.c.l.b16 %v6277
    %v6317 = vunpack.c.l.b16 %v6278
    %v6318 = vunpack.c.l.b16 %v6279
    %v6319 = vunpack.c.l.b16 %v6280
    %v6320 = vunpack.c.l.b16 %v6281
    %v6321 = vunpack.c.l.b16 %v6282
    %v6322 = vunpack.c.l.b16 %v6283
    %v6323 = vunpack.c.l.b16 %v6284
    %v6324 = vunpack.c.l.b16 %v6285
    %v6325 = vunpack.c.l.b16 %v6286
    %v6326 = vunpack.c.l.b16 %v6287
    %v6327 = vpack.c.b16 %v6312, %v6311
    %v6328 = vpack.c.b16 %v6314, %v6313
    %v6329 = vpack.c.b16 %v6316, %v6315
    %v6330 = vpack.c.b16 %v6318, %v6317
    %v6331 = vpack.c.b16 %v6320, %v6319
    %v6332 = vpack.c.b16 %v6322, %v6321
    %v6333 = vpack.c.b16 %v6324, %v6323
    %v6334 = vpack.c.b16 %v6326, %v6325
    %6343 = vmatprep.subr.bf16.mxu0 0
    %6344 = vmatpush1.bf16.msra.mxu0 %v6327
    %6345 = vmatprep.subr.bf16.mxu0 0
    %6346 = vmatpush1.bf16.msra.mxu0 %v6328
    %6347 = vmatprep.subr.bf16.mxu0 0
    %6348 = vmatpush1.bf16.msra.mxu0 %v6329
    %6349 = vmatprep.subr.bf16.mxu0 0
    %6350 = vmatpush1.bf16.msra.mxu0 %v6330
    %6351 = vmatprep.subr.bf16.mxu0 0
    %6352 = vmatpush1.bf16.msra.mxu0 %v6331
    %6353 = vmatprep.subr.bf16.mxu0 0
    %6354 = vmatpush1.bf16.msra.mxu0 %v6332
    %6355 = vmatprep.subr.bf16.mxu0 0
    %6356 = vmatpush1.bf16.msra.mxu0 %v6333
    %6357 = vmatprep.subr.bf16.mxu0 0
    %6358 = vmatpush1.bf16.msra.mxu0 %v6334
    %6359 = vmatprep.subr.bf16.mxu0 0
    %6360 = vmatpush1.bf16.msra.mxu0 0
    %6361 = vmatprep.subr.bf16.mxu0 0
    %6362 = vmatpush1.bf16.msra.mxu0 0
    %6363 = vmatprep.subr.bf16.mxu0 0
    %6364 = vmatpush1.bf16.msra.mxu0 0
    %6365 = vmatprep.subr.bf16.mxu0 0
    %6366 = vmatpush1.bf16.msra.mxu0 0
    %6367 = vmatprep.subr.bf16.mxu0 0
    %6368 = vmatpush1.bf16.msra.mxu0 0
    %6369 = vmatprep.subr.bf16.mxu0 0
    %6370 = vmatpush1.bf16.msra.mxu0 0
    %6371 = vmatprep.subr.bf16.mxu0 0
    %6372 = vmatpush1.bf16.msra.mxu0 0
    %6373 = vmatprep.subr.bf16.mxu0 0
    %6374 = vmatpush1.bf16.msra.mxu0 0
    %6375 = vmatprep.mubr.bf16.mxu0 0
    %6376 = vmatmul.mubr.bf16.gmra.mrb[0].mxu0 %v6271
    %v6377 = vpop.f32.mrb[0].mxu0
    %v6378 = vadd.f32 %v6293, %v6377
    %v6379 = vpop.f32.mrb[0].mxu0
    %v6380 = vpop.f32.mrb[0].mxu0
    %v6381 = vpop.f32.mrb[0].mxu0
    %6382 = vdwg.mxu0
    %v6383 = vlaneseq
    %v6384 = vand.u32 %v6383, 127
    %vm6385 = vcmp.lt.s32.totalorder %v6384, 10
    %v6386 = vsel %vm6385, %v6378, -1e+30
    %vm6387 = vcmask 1041408
    %v6388 = vsel %vm6387, %v6386, -inf
    %6389 = vmax.xlane.f32.xlu0 %v6388
    %v6390 = vpop.xlane.xlu0 %6389
    %v6391 = vsub.f32 %v6378, %v6390
    %v6392 = vmul.f32 %v6391, 1.442695
    %v6393 = vpow.pop %v6392
    %v6394 = vsel %vm6385, %v6393, 0.0
    %v6395 = vsel %vm6387, %v6394, 0.0
    %6396 = vadd.xlane.f32.xlu0 %v6395
    %v6397 = vpop.xlane.xlu0 %6396
    %v6398 = vlog2.pop %v6397
    %v6399 = vmul.f32 %v6398, 0.6931472
    %v6400 = vadd.f32 %v6399, %v6390
    %v6401 = vsub.f32 %v6378, %v6400
    %vm6402 = vcmask 74752
    %6403 = vst.msk [vmem:[#allocation4] sm:$0x3] %vm6402, %v6401
    // Predicated region
    $region46: #{lenet5_forward.1} parent=1 // pred_check
      _
    $region47: #{lenet5_forward.1} parent=1 // pred_check_branch
      %6405 = sbr.rel (0) target = $region49
    $region48: #{lenet5_forward.1} parent=1 // pred_region
      %s6407 = ssub.s32 32, 32
      %6408 = vsyncadd [#allocation5], %s6407
      %s6410 = sshll.u32 [#allocation4], 4
      %s6411 = int_to_ptr.vmem [resolvable:$true] %s6410
      %6413 = dma.vmem_to_hbm [thread:$0]  %s6411, 32, %s11, [#allocation5]
    $region49: #{lenet5_forward.1} parent=1 // pred_fallthru
      _
    // Predicated region
    $region50: #{lenet5_forward.1} parent=1 // pred_check
      _
    $region51: #{lenet5_forward.1} parent=1 // pred_check_branch
      %6415 = sbr.rel (0) target = $region53
    $region52: #{lenet5_forward.1} parent=1 // pred_region
      %6416 = dma.done [#allocation5], 32
    $region53: #{lenet5_forward.1} parent=1 // pred_fallthru
      _
    %6417 = vsyncpa [#allocation5], 1

</llo_original>
